<compile_context>
chip_gen: v6e
topology: v6e:2x2x1
jax: 0.10.0
libtpu: 0.0.40
codegen_flags: <defaults>
</compile_context>

<pallas_src>
import functools

import jax
import jax.numpy as jnp
from jax.experimental import pallas as pl
from jax.experimental.pallas import tpu as pltpu

_BN_EPS = 1e-5  # torch.nn.BatchNorm1d default


def _choose_f_split():
    """2 on chips with two TensorCores (v4 / v5p / v7x) so grid=(3,2) balances
    3/3 across cores; 1 on single-TC chips (v5e / v6e) to avoid extra grid
    overhead on a DMA-bound kernel."""
    try:
        kind = jax.devices()[0].device_kind.lower()
    except Exception:
        return 1
    return 2 if any(t in kind for t in ("v4", "v5p", "7")) else 1


def _block14_kernel(x_ref, w_ref, gb_ref, out_ref):
    """One fused (branch, feature-tile) step: relu(batchnorm(x @ W)).

    x_ref:   (B, K)      bf16 activations (same block every step -> DMA'd once)
    w_ref:   (1, K, Ft)  bf16 weight tile for this branch / feature tile
    gb_ref:  (1, 2, Ft)  f32 [gamma; beta] packed
    out_ref: (1, B, Ft)  f32 output slab
    """
    # Single MXU matmul, bf16 inputs, f32 accumulation.
    y = jnp.dot(x_ref[...], w_ref[0], preferred_element_type=jnp.float32)

    # BatchNorm1d (training-mode): per-feature batch mean / biased variance.
    # (Linear bias omitted: it cancels exactly under these statistics.)
    mean = jnp.mean(y, axis=0, keepdims=True)                    # (1, Ft)
    var = jnp.mean(jnp.square(y - mean), axis=0, keepdims=True)  # (1, Ft)
    inv = jax.lax.rsqrt(var + _BN_EPS)                           # EUP rsqrt

    gb = gb_ref[0]                                               # (2, Ft) f32
    y = (y - mean) * (inv * gb[0:1, :]) + gb[1:2, :]

    out_ref[0] = jnp.maximum(y, 0.0)                             # ReLU, lane-dense store


@functools.partial(jax.jit, static_argnames=("out_features", "f_split"))
def testblock14_forward(x, w, gb, *, out_features=1000, f_split=1):
    """x: (B, 1000) f32.  w: (3, K, FP) bf16.  gb: (3, 2, FP) f32.

    Returns (B, 3*out_features) f32 == torch.cat([x1, x2, x3], dim=-1)."""
    B, K = x.shape
    n_branch, _, FP = w.shape
    assert FP % f_split == 0
    f_tile = FP // f_split

    out = pl.pallas_call(
        _block14_kernel,
        out_shape=jax.ShapeDtypeStruct((n_branch, B, FP), jnp.float32),
        grid_spec=pltpu.PrefetchScalarGridSpec(
            num_scalar_prefetch=0,
            grid=(n_branch, f_split),
            in_specs=[
                pl.BlockSpec((B, K), lambda j, f: (0, 0)),             # x: constant block
                pl.BlockSpec((1, K, f_tile), lambda j, f: (j, 0, f)),  # weight tile
                pl.BlockSpec((1, 2, f_tile), lambda j, f: (j, 0, f)),  # [gamma; beta]
            ],
            out_specs=pl.BlockSpec((1, B, f_tile), lambda j, f: (j, 0, f)),
        ),
        compiler_params=pltpu.CompilerParams(
            # Both axes independent -> megacore shards the 3*f_split steps.
            dimension_semantics=("parallel", "parallel"),
            vmem_limit_bytes=24 * 1024 * 1024),
    )(x.astype(jnp.bfloat16), w, gb)

    out = out[:, :, :out_features]                      # drop feature padding
    # (3, B, F) -> (B, 3, F) -> (B, 3F)  == torch.cat along dim=-1
    return jnp.transpose(out, (1, 0, 2)).reshape(B, n_branch * out_features)


def init_params(key, in_features=1000, out_features=1000, n_branch=3, f_split=1):
    """Deterministic synthetic params, pre-packed for the kernel.

    Returns:
      w  : (3, K, FP) bf16   stacked weights, input-major, feature-padded
      b  : (3, 1, FP) f32    linear bias (reference only; cancels under BN)
      gb : (3, 2, FP) f32    stacked [gamma; beta]
    """
    fp = out_features
    if f_split > 1:
        mult = 128 * f_split
        fp = ((out_features + mult - 1) // mult) * mult   # 1000 -> 1024 for f_split=2

    kw, kb, kg, kbe = jax.random.split(key, 4)
    w = (jax.random.normal(kw, (n_branch, in_features, out_features), jnp.float32)
         * (1.0 / jnp.sqrt(in_features)))
    b = 0.1 * jax.random.normal(kb, (n_branch, 1, out_features), jnp.float32)
    gamma = 1.0 + 0.1 * jax.random.normal(kg, (n_branch, out_features), jnp.float32)
    beta = 0.1 * jax.random.normal(kbe, (n_branch, out_features), jnp.float32)

    pad = fp - out_features
    if pad:
        w = jnp.pad(w, ((0, 0), (0, 0), (0, pad)))
        b = jnp.pad(b, ((0, 0), (0, 0), (0, pad)))
        gamma = jnp.pad(gamma, ((0, 0), (0, pad)))
        beta = jnp.pad(beta, ((0, 0), (0, pad)))

    gb = jnp.stack([gamma, beta], axis=1)                 # (3, 2, FP)
    return w.astype(jnp.bfloat16), b, gb


def reference_forward(x, w, b, gb, out_features):
    """Pure-JAX reference: Linear (with bias) + train-mode BN + ReLU per branch,
    concatenated along the feature axis.  Uses the same bf16 weights so the
    comparison isolates the kernel, not the quantization choice."""
    xb = x.astype(jnp.bfloat16)
    outs = []
    for i in range(w.shape[0]):
        wi = w[i][:, :out_features]
        y = jnp.dot(xb, wi, preferred_element_type=jnp.float32) + b[i][:, :out_features]
        mean = jnp.mean(y, axis=0, keepdims=True)
        var = jnp.mean(jnp.square(y - mean), axis=0, keepdims=True)
        y = ((y - mean) * jax.lax.rsqrt(var + _BN_EPS) * gb[i, 0, :out_features]
             + gb[i, 1, :out_features])
        outs.append(jnp.maximum(y, 0.0))
    return jnp.concatenate(outs, axis=-1)


if __name__ == "__main__":
    f_split = _choose_f_split()

    key = jax.random.PRNGKey(0)
    k_x, k_p = jax.random.split(key)

    B, F_IN, F_OUT = 8, 1000, 1000       # in/out features fixed at 1000 by the module
    x = jax.random.normal(k_x, (B, F_IN), jnp.float32)
    w, b, gb = init_params(k_p, in_features=F_IN, out_features=F_OUT, f_split=f_split)

    out = jax.block_until_ready(
        testblock14_forward(x, w, gb, out_features=F_OUT, f_split=f_split))
    assert out.shape == (B, 3 * F_OUT), out.shape

    ref = jax.block_until_ready(reference_forward(x, w, b, gb, F_OUT))
    assert jnp.allclose(out, ref, rtol=2e-3, atol=2e-3), "mismatch vs reference"

    print("KERNEL_OK")
</pallas_src>

<mosaic_0001>
module attributes {stable_mosaic.version = 11 : i64} {
  func.func @_block14_kernel(%arg0: i32, %arg1: i32, %arg2: memref<8x1000xbf16, #tpu.memory_space<vmem>>, %arg3: memref<1x1000x1000xbf16, #tpu.memory_space<vmem>>, %arg4: memref<1x2x1000xf32, #tpu.memory_space<vmem>>, %arg5: memref<1x8x1000xf32, #tpu.memory_space<vmem>>) attributes {dimension_semantics = [#tpu.dimension_semantics<parallel>, #tpu.dimension_semantics<parallel>], iteration_bounds = array<i64: 3, 1>, scalar_prefetch = 0 : i64, scratch_operands = 0 : i64, tpu.core_type = #tpu.core_type<tc>, window_params = [{pipeline_mode = #tpu.pipeline_mode<synchronous>, transform_indices = @transform_0, window_bounds = array<i64: 8, 1000>}, {transform_indices = @transform_1, window_bounds = array<i64: 1, 1000, 1000>}, {transform_indices = @transform_2, window_bounds = array<i64: 1, 2, 1000>}, {transform_indices = @transform_3, window_bounds = array<i64: 1, 8, 1000>}]} {
    %c0 = arith.constant 0 : index
    %c0_0 = arith.constant 0 : index
    %0 = vector.load %arg2[%c0, %c0_0] : memref<8x1000xbf16, #tpu.memory_space<vmem>>, vector<8x1000xbf16>
    %c0_1 = arith.constant 0 : index
    %c0_2 = arith.constant 0 : index
    %c0_3 = arith.constant 0 : index
    %1 = vector.load %arg3[%c0_1, %c0_2, %c0_3] : memref<1x1000x1000xbf16, #tpu.memory_space<vmem>>, vector<1x1000x1000xbf16>
    %2 = vector.shape_cast %1 : vector<1x1000x1000xbf16> to vector<1000x1000xbf16>
    %cst = arith.constant dense<0.000000e+00> : vector<8x1000xf32>
    %3 = tpu.matmul %0, %2, %cst {dimension_numbers = #tpu.dot_dimension_numbers<[1], [0], [0], [1], [0, 0, 1, 1], [], []>} : vector<8x1000xbf16>, vector<1000x1000xbf16>, vector<8x1000xf32> -> vector<8x1000xf32>
    %cst_4 = arith.constant dense<0.000000e+00> : vector<1000xf32>
    %4 = vector.multi_reduction <add>, %3, %cst_4 [0] : vector<8x1000xf32> to vector<1000xf32>
    %5 = vector.shape_cast %4 : vector<1000xf32> to vector<1x1000xf32>
    %cst_5 = arith.constant 8.000000e+00 : f32
    %6 = vector.broadcast %cst_5 : f32 to vector<1x1000xf32>
    %7 = arith.divf %5, %6 : vector<1x1000xf32>
    %8 = vector.broadcast %7 : vector<1x1000xf32> to vector<8x1000xf32>
    %9 = arith.subf %3, %8 : vector<8x1000xf32>
    %10 = arith.mulf %9, %9 : vector<8x1000xf32>
    %cst_6 = arith.constant dense<0.000000e+00> : vector<1000xf32>
    %11 = vector.multi_reduction <add>, %10, %cst_6 [0] : vector<8x1000xf32> to vector<1000xf32>
    %12 = vector.shape_cast %11 : vector<1000xf32> to vector<1x1000xf32>
    %cst_7 = arith.constant 8.000000e+00 : f32
    %13 = vector.broadcast %cst_7 : f32 to vector<1x1000xf32>
    %14 = arith.divf %12, %13 : vector<1x1000xf32>
    %cst_8 = arith.constant 9.99999974E-6 : f32
    %15 = vector.broadcast %cst_8 : f32 to vector<1x1000xf32>
    %16 = arith.addf %14, %15 : vector<1x1000xf32>
    %17 = math.rsqrt %16 : vector<1x1000xf32>
    %c0_9 = arith.constant 0 : index
    %c0_10 = arith.constant 0 : index
    %c0_11 = arith.constant 0 : index
    %18 = vector.load %arg4[%c0_9, %c0_10, %c0_11] : memref<1x2x1000xf32, #tpu.memory_space<vmem>>, vector<1x2x1000xf32>
    %19 = vector.shape_cast %18 : vector<1x2x1000xf32> to vector<2x1000xf32>
    %20 = vector.broadcast %7 : vector<1x1000xf32> to vector<8x1000xf32>
    %21 = arith.subf %3, %20 : vector<8x1000xf32>
    %22 = vector.extract_strided_slice %19 {offsets = [0, 0], sizes = [1, 1000], strides = [1, 1]} : vector<2x1000xf32> to vector<1x1000xf32>
    %23 = arith.mulf %17, %22 : vector<1x1000xf32>
    %24 = vector.broadcast %23 : vector<1x1000xf32> to vector<8x1000xf32>
    %25 = arith.mulf %21, %24 : vector<8x1000xf32>
    %26 = vector.extract_strided_slice %19 {offsets = [1, 0], sizes = [1, 1000], strides = [1, 1]} : vector<2x1000xf32> to vector<1x1000xf32>
    %27 = vector.broadcast %26 : vector<1x1000xf32> to vector<8x1000xf32>
    %28 = arith.addf %25, %27 : vector<8x1000xf32>
    %cst_12 = arith.constant 0.000000e+00 : f32
    %29 = vector.broadcast %cst_12 : f32 to vector<8x1000xf32>
    %30 = arith.maximumf %28, %29 : vector<8x1000xf32>
    %c0_13 = arith.constant 0 : index
    %c0_14 = arith.constant 0 : index
    %c0_15 = arith.constant 0 : index
    %31 = vector.load %arg5[%c0_13, %c0_14, %c0_15] : memref<1x8x1000xf32, #tpu.memory_space<vmem>>, vector<1x8x1000xf32>
    %32 = vector.shape_cast %31 : vector<1x8x1000xf32> to vector<8x1000xf32>
    %33 = vector.shape_cast %30 : vector<8x1000xf32> to vector<1x8x1000xf32>
    tpu.vector_store %arg5[%c0_13, %c0_14, %c0_15], %33 {strides = array<i32>} : memref<1x8x1000xf32, #tpu.memory_space<vmem>>, vector<1x8x1000xf32>,
    return
  }
  func.func @transform_0(%arg0: i32, %arg1: i32) -> (i32, i32) {
    %c0_i32 = arith.constant 0 : i32
    %c0_i32_0 = arith.constant 0 : i32
    %c0_i32_1 = arith.constant 0 : i32
    return %c0_i32, %c0_i32_0 : i32, i32
  }
  func.func @transform_1(%arg0: i32, %arg1: i32) -> (i32, i32, i32) {
    %c0_i32 = arith.constant 0 : i32
    %c0_i32_0 = arith.constant 0 : i32
    return %arg0, %c0_i32, %arg1 : i32, i32, i32
  }
  func.func @transform_2(%arg0: i32, %arg1: i32) -> (i32, i32, i32) {
    %c0_i32 = arith.constant 0 : i32
    %c0_i32_0 = arith.constant 0 : i32
    return %arg0, %c0_i32, %arg1 : i32, i32, i32
  }
  func.func @transform_3(%arg0: i32, %arg1: i32) -> (i32, i32, i32) {
    %c0_i32 = arith.constant 0 : i32
    %c0_i32_0 = arith.constant 0 : i32
    return %arg0, %c0_i32, %arg1 : i32, i32, i32
  }
}

</mosaic_0001>

<llo_original>
// kernel: testblock14_forward.1
$region0: #{testblock14_forward.1}
  #allocation0 [shape = 'u32[]', space=smem, size = 0x4, offset = 0x4, fixed_abs, tag = 'smem constant byte address 0x4 - core index']
  #allocation1 [shape = 'u32[144,128]{1,0:T(1,128)}', space=vmem, size = 0x12000, scoped, tag = 'internal scratch']
  %s0 = inlined_call_operand.vmem [shape: bf16[8,1000], index: 0, kind: input, shape index: {}]
  %s1 = inlined_call_operand.hbm [shape: bf16[3,1000,1000], index: 1, kind: input, shape index: {}]
  %s2 = inlined_call_operand.hbm [shape: f32[3,2,1000], index: 2, kind: input, shape index: {}]
  %s3 = inlined_call_operand.vmem [shape: f32[3,8,1000], index: 3, kind: output, shape index: {}]
  %s4 = sld [smem:[#allocation0]]
  $region53: #{testblock14_forward.1} parent=0
    _
  %s6 = ssub.s32 1, %s4
  %s7 = scalar_select 0, %s6, %s4
  $region1: #{testblock14_forward.1} parent=0
    #allocation2 [shape = 'u8[4096000]{0}', space=vmem, size = 0x3e8000, scoped, tag = 'input window, operand 1']
    #allocation3 [shape = 's32[2]{0}', space=sflag, size = 0x8, scoped, tag = 'scoped memory for testblock14_forward.1']
    #allocation4 [shape = 'u8[16384]{0}', space=vmem, size = 0x4000, scoped, tag = 'input window, operand 2']
    #allocation5 [shape = 's32[2]{0}', space=sflag, size = 0x8, scoped, tag = 'scoped memory for testblock14_forward.1']
    %8 = vsyncpa [#allocation3], 0
    %s9 = scalar_lea.sflag [#allocation3], 1
    %10 = vsyncpa %s9, 0
    %11 = vsyncpa [#allocation5], 0
    %s12 = scalar_lea.sflag [#allocation5], 1
    %13 = vsyncpa %s12, 0
    loop: start=0, step=1, limit=5
    $region2: #{testblock14_forward.1} parent=1 // loop_pre_header
      _
    $region3: #{testblock14_forward.1} parent=1 // loop_header
      %s15 = sphi 0, %s19
      %p16 = scmp.ge.s32.totalorder %s15, 5
      %s22 = sphi 0, %s34
      %s23 = sphi 0, %s30
      %s24 = sphi 0, %s22
      %s25 = sphi 0, %s23
      %s26 = sphi 0, %s24
      %s27 = sphi 0, %s25
      %s35 = sphi 0, %s35
      %s37 = sphi 0, %s35
      %s38 = sphi 0, %s37
      %s52 = sphi 0, %s38
      %s60 = sphi 0, %s62
      %s63 = sphi 0, %s60
      %s64 = sphi 0, %s63
      %s80 = sphi 0, %s64
      %s88 = sphi 0, %s90
      %s91 = sphi 0, %s88
      %s92 = sphi 0, %s91
      %s108 = sphi 0, %s92
      %s116 = sphi 0, %s118
      %s119 = sphi 0, %s116
      %s120 = sphi 0, %s119
      %s136 = sphi 0, %s120
    $region4: #{testblock14_forward.1} parent=1 // loop_header_branch
      %18 = sbr.rel (%p16) target = $region8
    $region5: #{testblock14_forward.1} parent=1 // loop_body
      %s20 = ssub.s32 %s15, 1
      %s21 = ssub.s32 %s15, 2
      %s28 = sadd.s32 1, %s23
      %p29 = scmp.ge.s32.totalorder %s28, 1
      %s30 = scalar_select %p29, 0, %s28
      %s31 = sadd.s32 1, %s22
      %s32 = scalar_select %p29, %s31, %s22
      %p33 = scmp.ge.s32.totalorder %s32, 3
      %s34 = scalar_select %p33, 0, %s32
      %s36 = sadd.s32 %s35, 1
      %p39 = scmp.eq.s32.totalorder %s15, 2
      %p40 = scmp.ne.s32.totalorder %s35, %s37
      %p41 = scmp.eq.s32.totalorder %s15, 0
      %p42 = por %p40, %p41
      %p43 = scmp.ne.s32.totalorder %s35, %s37
      %p44 = scmp.eq.s32.totalorder %s20, 2
      %p45 = por %p43, %p44
      %p46 = scmp.ne.s32.totalorder %s37, %s38
      %p47 = scmp.eq.s32.totalorder %s20, 0
      %p48 = por %p46, %p47
      %p49 = scmp.ne.s32.totalorder %s37, %s38
      %p50 = scmp.eq.s32.totalorder %s21, 2
      %p51 = por %p49, %p50
      %p53 = scmp.ne.s32.totalorder %s38, %s52
      %p54 = scmp.eq.s32.totalorder %s21, 0
      %p55 = por %p53, %p54
      %s56 = ssub.s32 %s22, %s34
      %s57 = ssub.s32 %s23, %s30
      %s58 = sor.u32 %s56, %s57
      %p59 = scmp.eq.s32.totalorder %s58, 0
      %s61 = sadd.s32 %s60, 1
      %s62 = scalar_select %p59, %s60, %s61
      %p65 = pneg %p59
      %p66 = scmp.eq.s32.totalorder %s15, 2
      %p67 = por %p65, %p66
      %p68 = scmp.ne.s32.totalorder %s60, %s63
      %p69 = scmp.eq.s32.totalorder %s15, 0
      %p70 = por %p68, %p69
      %p71 = scmp.ne.s32.totalorder %s60, %s63
      %p72 = scmp.eq.s32.totalorder %s20, 2
      %p73 = por %p71, %p72
      %p74 = scmp.ne.s32.totalorder %s63, %s64
      %p75 = scmp.eq.s32.totalorder %s20, 0
      %p76 = por %p74, %p75
      %p77 = scmp.ne.s32.totalorder %s63, %s64
      %p78 = scmp.eq.s32.totalorder %s21, 2
      %p79 = por %p77, %p78
      %p81 = scmp.ne.s32.totalorder %s64, %s80
      %p82 = scmp.eq.s32.totalorder %s21, 0
      %p83 = por %p81, %p82
      %s84 = ssub.s32 %s22, %s34
      %s85 = ssub.s32 %s23, %s30
      %s86 = sor.u32 %s84, %s85
      %p87 = scmp.eq.s32.totalorder %s86, 0
      %s89 = sadd.s32 %s88, 1
      %s90 = scalar_select %p87, %s88, %s89
      %p93 = pneg %p87
      %p94 = scmp.eq.s32.totalorder %s15, 2
      %p95 = por %p93, %p94
      %p96 = scmp.ne.s32.totalorder %s88, %s91
      %p97 = scmp.eq.s32.totalorder %s15, 0
      %p98 = por %p96, %p97
      %p99 = scmp.ne.s32.totalorder %s88, %s91
      %p100 = scmp.eq.s32.totalorder %s20, 2
      %p101 = por %p99, %p100
      %p102 = scmp.ne.s32.totalorder %s91, %s92
      %p103 = scmp.eq.s32.totalorder %s20, 0
      %p104 = por %p102, %p103
      %p105 = scmp.ne.s32.totalorder %s91, %s92
      %p106 = scmp.eq.s32.totalorder %s21, 2
      %p107 = por %p105, %p106
      %p109 = scmp.ne.s32.totalorder %s92, %s108
      %p110 = scmp.eq.s32.totalorder %s21, 0
      %p111 = por %p109, %p110
      %s112 = ssub.s32 %s22, %s34
      %s113 = ssub.s32 %s23, %s30
      %s114 = sor.u32 %s112, %s113
      %p115 = scmp.eq.s32.totalorder %s114, 0
      %s117 = sadd.s32 %s116, 1
      %s118 = scalar_select %p115, %s116, %s117
      %p121 = pneg %p115
      %p122 = scmp.eq.s32.totalorder %s15, 2
      %p123 = por %p121, %p122
      %p124 = scmp.ne.s32.totalorder %s116, %s119
      %p125 = scmp.eq.s32.totalorder %s15, 0
      %p126 = por %p124, %p125
      %p127 = scmp.ne.s32.totalorder %s116, %s119
      %p128 = scmp.eq.s32.totalorder %s20, 2
      %p129 = por %p127, %p128
      %p130 = scmp.ne.s32.totalorder %s119, %s120
      %p131 = scmp.eq.s32.totalorder %s20, 0
      %p132 = por %p130, %p131
      %p133 = scmp.ne.s32.totalorder %s119, %s120
      %p134 = scmp.eq.s32.totalorder %s21, 2
      %p135 = por %p133, %p134
      %p137 = scmp.ne.s32.totalorder %s120, %s136
      %p138 = scmp.eq.s32.totalorder %s21, 0
      %p139 = por %p137, %p138
      %p140 = scmp.le.s32.totalorder 1, %s15
      %p141 = scmp.lt.s32.totalorder %s15, 4
      %p142 = pnand %p140, %p141
      %p143 = pneg %p142
      // Predicated region
      $region9: #{testblock14_forward.1} parent=5 // pred_check
        _
      $region10: #{testblock14_forward.1} parent=5 // pred_check_branch
        %145 = sbr.rel (%p142) target = $region12
      $region11: #{testblock14_forward.1} parent=5 // pred_region
        %s146 = ssub.s32 %s15, 1
        // Predicated region
        $region13: #{testblock14_forward.1} parent=11 // pred_check
          %p147 = pneg %p48
        $region14: #{testblock14_forward.1} parent=11 // pred_check_branch
          %149 = sbr.rel (%p147) target = $region16
        $region15: #{testblock14_forward.1} parent=11 // pred_region
          _
        $region16: #{testblock14_forward.1} parent=11 // pred_fallthru
          _
      $region12: #{testblock14_forward.1} parent=5 // pred_fallthru
        _
      %p150 = scmp.lt.s32.totalorder %s15, 3
      // Predicated region
      $region17: #{testblock14_forward.1} parent=5 // pred_check
        %p151 = pneg %p150
      $region18: #{testblock14_forward.1} parent=5 // pred_check_branch
        %153 = sbr.rel (%p151) target = $region20
      $region19: #{testblock14_forward.1} parent=5 // pred_region
        // Predicated region
        $region21: #{testblock14_forward.1} parent=19 // pred_check
          %p154 = pneg %p70
        $region22: #{testblock14_forward.1} parent=19 // pred_check_branch
          %156 = sbr.rel (%p154) target = $region24
        $region23: #{testblock14_forward.1} parent=19 // pred_region
          %s157 = sand.u32 %s60, 1
          %s158 = scalar_lea.sflag [#allocation3], %s157
          %s159 = sand.u32 %s60, 1
          %s160 = smul.addr %s159, 4000
          %s161 = scalar_lea.vmem [#allocation2], %s160
          %s162 = smul.u32 8, %s23
          %s164 = ssub.s32 64000, 64000
          %165 = vsyncadd %s158, %s164
          %s166 = smul.addr %s22, 1000
          %s167 = sadd.s32 %s162, %s166
          %s168 = smul.addr %s167, 64
          %s169 = scalar_lea.hbm %s1, %s168
          %s170 = sshll.u32 %s161, 4
          %s171 = int_to_ptr.vmem [resolvable:$true] %s170
          %176 = dma.hbm_to_vmem [thread:$0]  %s169, 64000, %s171, %s158, 512, 512, 32
        $region24: #{testblock14_forward.1} parent=19 // pred_fallthru
          _
        // Predicated region
        $region25: #{testblock14_forward.1} parent=19 // pred_check
          %p177 = pneg %p98
        $region26: #{testblock14_forward.1} parent=19 // pred_check_branch
          %179 = sbr.rel (%p177) target = $region28
        $region27: #{testblock14_forward.1} parent=19 // pred_region
          %s180 = sand.u32 %s88, 1
          %s181 = scalar_lea.sflag [#allocation5], %s180
          %s182 = sand.u32 %s88, 1
          %s183 = smul.addr %s182, 16
          %s184 = scalar_lea.vmem [#allocation4], %s183
          %s185 = smul.u32 8, %s23
          %s187 = ssub.s32 256, 256
          %188 = vsyncadd %s181, %s187
          %s189 = smul.addr %s22, 8
          %s190 = sadd.s32 %s185, %s189
          %s191 = smul.addr %s190, 32
          %s192 = scalar_lea.hbm %s2, %s191
          %s194 = sshll.u32 %s184, 4
          %s195 = int_to_ptr.vmem [resolvable:$true] %s194
          %197 = dma.hbm_to_vmem [thread:$0]  %s192, 256, %s195, %s181
        $region28: #{testblock14_forward.1} parent=19 // pred_fallthru
          _
      $region20: #{testblock14_forward.1} parent=5 // pred_fallthru
        _
      %p198 = scmp.le.s32.totalorder 1, %s15
      %p199 = scmp.lt.s32.totalorder %s15, 4
      %p200 = pnand %p198, %p199
      %p201 = pneg %p200
      // Predicated region
      $region29: #{testblock14_forward.1} parent=5 // pred_check
        _
      $region30: #{testblock14_forward.1} parent=5 // pred_check_branch
        %203 = sbr.rel (%p200) target = $region32
      $region31: #{testblock14_forward.1} parent=5 // pred_region
        %s204 = ssub.s32 %s15, 1
        %s205 = sand.u32 %s63, 1
        %s206 = scalar_lea.sflag [#allocation3], %s205
        %s207 = sand.u32 %s63, 1
        %s208 = smul.addr %s207, 4000
        %s209 = scalar_lea.vmem [#allocation2], %s208
        // Predicated region
        $region33: #{testblock14_forward.1} parent=31 // pred_check
          %p210 = pneg %p76
        $region34: #{testblock14_forward.1} parent=31 // pred_check_branch
          %212 = sbr.rel (%p210) target = $region36
        $region35: #{testblock14_forward.1} parent=31 // pred_region
          %213 = dma.done %s206, 64000
        $region36: #{testblock14_forward.1} parent=31 // pred_fallthru
          _
        %s214 = sand.u32 %s91, 1
        %s215 = scalar_lea.sflag [#allocation5], %s214
        %s216 = sand.u32 %s91, 1
        %s217 = smul.addr %s216, 16
        %s218 = scalar_lea.vmem [#allocation4], %s217
        // Predicated region
        $region37: #{testblock14_forward.1} parent=31 // pred_check
          %p219 = pneg %p104
        $region38: #{testblock14_forward.1} parent=31 // pred_check_branch
          %221 = sbr.rel (%p219) target = $region40
        $region39: #{testblock14_forward.1} parent=31 // pred_region
          %222 = dma.done %s215, 256
        $region40: #{testblock14_forward.1} parent=31 // pred_fallthru
          _
        %p223 = pneg %p48
        %p224 = pneg %p45
        %s225 = sand.u32 %s63, 1
        %s226 = scalar_lea.sflag [#allocation3], %s225
        %s227 = sand.u32 %s63, 1
        %s228 = smul.addr %s227, 4000
        %s229 = scalar_lea.vmem [#allocation2], %s228
        %p230 = pneg %p76
        %p231 = pneg %p73
        %s232 = sand.u32 %s91, 1
        %s233 = scalar_lea.sflag [#allocation5], %s232
        %s234 = sand.u32 %s91, 1
        %s235 = smul.addr %s234, 16
        %s236 = scalar_lea.vmem [#allocation4], %s235
        %p237 = pneg %p104
        %p238 = pneg %p101
        %p239 = pneg %p132
        %p240 = pneg %p129
        %s241 = smul.u32 8, %s25
        %p242 = scmp.lt.s32.totalorder %s24, 2
        %s243 = scalar_select %p242, %s24, 2
        %p244 = scmp.lt.s32.totalorder %s241, 7
        %s245 = scalar_select %p244, %s241, 7
        %s246 = smul.addr %s243, 8
        %s247 = sadd.s32 %s245, %s246
        %s248 = smul.addr %s247, 8
        %s249 = scalar_lea.vmem %s3, %s248
        %s250 = smul.u32 8, %s25
        %s251 = smul.u32 8, %s25
        %s252 = smul.u32 8, %s25
        %p253 = scmp.lt.s32.totalorder %s24, 2
        %s254 = scalar_select %p253, %s24, 2
        %p255 = scmp.lt.s32.totalorder %s252, 7
        %s256 = scalar_select %p255, %s252, 7
        %s257 = smul.addr %s254, 8
        %s258 = sadd.s32 %s256, %s257
        %s259 = smul.addr %s258, 8
        %s260 = scalar_lea.vmem %s3, %s259
        %s261 = smul.u32 8, %s25
        %v263 = vld [vmem:[%s0] sm:$0xff]
        %v264 = vld [vmem:[%s0 + $0x8] sm:$0xff]
        %v265 = vld [vmem:[%s0 + $0x10] sm:$0xff]
        %v266 = vld [vmem:[%s0 + $0x18] sm:$0xff]
        %v267 = vld [vmem:[%s209] sm:$0xff]
        %v268 = vld [vmem:[%s209 + $0x8] sm:$0xff]
        %v269 = vld [vmem:[%s209 + $0x10] sm:$0xff]
        %v270 = vld [vmem:[%s209 + $0x18] sm:$0xff]
        %v271 = vld [vmem:[%s209 + $0x20] sm:$0xff]
        %v272 = vld [vmem:[%s209 + $0x28] sm:$0xff]
        %v273 = vld [vmem:[%s209 + $0x30] sm:$0xff]
        %v274 = vld [vmem:[%s209 + $0x38] sm:$0xff]
        %v275 = vld [vmem:[%s209 + $0x40] sm:$0xff]
        %v276 = vld [vmem:[%s209 + $0x48] sm:$0xff]
        %v277 = vld [vmem:[%s209 + $0x50] sm:$0xff]
        %v278 = vld [vmem:[%s209 + $0x58] sm:$0xff]
        %v279 = vld [vmem:[%s209 + $0x60] sm:$0xff]
        %v280 = vld [vmem:[%s209 + $0x68] sm:$0xff]
        %v281 = vld [vmem:[%s209 + $0x70] sm:$0xff]
        %v282 = vld [vmem:[%s209 + $0x78] sm:$0xff]
        %v283 = vld [vmem:[%s209 + $0x80] sm:$0xff]
        %v284 = vld [vmem:[%s209 + $0x88] sm:$0xff]
        %v285 = vld [vmem:[%s209 + $0x90] sm:$0xff]
        %v286 = vld [vmem:[%s209 + $0x98] sm:$0xff]
        %v287 = vld [vmem:[%s209 + $0xa0] sm:$0xff]
        %v288 = vld [vmem:[%s209 + $0xa8] sm:$0xff]
        %v289 = vld [vmem:[%s209 + $0xb0] sm:$0xff]
        %v290 = vld [vmem:[%s209 + $0xb8] sm:$0xff]
        %v291 = vld [vmem:[%s209 + $0xc0] sm:$0xff]
        %v292 = vld [vmem:[%s209 + $0xc8] sm:$0xff]
        %v293 = vld [vmem:[%s209 + $0xd0] sm:$0xff]
        %v294 = vld [vmem:[%s209 + $0xd8] sm:$0xff]
        %v295 = vld [vmem:[%s209 + $0xe0] sm:$0xff]
        %v296 = vld [vmem:[%s209 + $0xe8] sm:$0xff]
        %v297 = vld [vmem:[%s209 + $0xf0] sm:$0xff]
        %v298 = vld [vmem:[%s209 + $0xf8] sm:$0xff]
        %v299 = vld [vmem:[%s209 + $0x100] sm:$0xff]
        %v300 = vld [vmem:[%s209 + $0x108] sm:$0xff]
        %v301 = vld [vmem:[%s209 + $0x110] sm:$0xff]
        %v302 = vld [vmem:[%s209 + $0x118] sm:$0xff]
        %v303 = vld [vmem:[%s209 + $0x120] sm:$0xff]
        %v304 = vld [vmem:[%s209 + $0x128] sm:$0xff]
        %v305 = vld [vmem:[%s209 + $0x130] sm:$0xff]
        %v306 = vld [vmem:[%s209 + $0x138] sm:$0xff]
        %v307 = vld [vmem:[%s209 + $0x140] sm:$0xff]
        %v308 = vld [vmem:[%s209 + $0x148] sm:$0xff]
        %v309 = vld [vmem:[%s209 + $0x150] sm:$0xff]
        %v310 = vld [vmem:[%s209 + $0x158] sm:$0xff]
        %v311 = vld [vmem:[%s209 + $0x160] sm:$0xff]
        %v312 = vld [vmem:[%s209 + $0x168] sm:$0xff]
        %v313 = vld [vmem:[%s209 + $0x170] sm:$0xff]
        %v314 = vld [vmem:[%s209 + $0x178] sm:$0xff]
        %v315 = vld [vmem:[%s209 + $0x180] sm:$0xff]
        %v316 = vld [vmem:[%s209 + $0x188] sm:$0xff]
        %v317 = vld [vmem:[%s209 + $0x190] sm:$0xff]
        %v318 = vld [vmem:[%s209 + $0x198] sm:$0xff]
        %v319 = vld [vmem:[%s209 + $0x1a0] sm:$0xff]
        %v320 = vld [vmem:[%s209 + $0x1a8] sm:$0xff]
        %v321 = vld [vmem:[%s209 + $0x1b0] sm:$0xff]
        %v322 = vld [vmem:[%s209 + $0x1b8] sm:$0xff]
        %v323 = vld [vmem:[%s209 + $0x1c0] sm:$0xff]
        %v324 = vld [vmem:[%s209 + $0x1c8] sm:$0xff]
        %v325 = vld [vmem:[%s209 + $0x1d0] sm:$0xff]
        %v326 = vld [vmem:[%s209 + $0x1d8] sm:$0xff]
        %v327 = vld [vmem:[%s209 + $0x1e0] sm:$0xff]
        %v328 = vld [vmem:[%s209 + $0x1e8] sm:$0xff]
        %v329 = vld [vmem:[%s209 + $0x1f0] sm:$0xff]
        %v330 = vld [vmem:[%s209 + $0x1f8] sm:$0xff]
        %v331 = vld [vmem:[%s209 + $0x200] sm:$0xff]
        %v332 = vld [vmem:[%s209 + $0x208] sm:$0xff]
        %v333 = vld [vmem:[%s209 + $0x210] sm:$0xff]
        %v334 = vld [vmem:[%s209 + $0x218] sm:$0xff]
        %v335 = vld [vmem:[%s209 + $0x220] sm:$0xff]
        %v336 = vld [vmem:[%s209 + $0x228] sm:$0xff]
        %v337 = vld [vmem:[%s209 + $0x230] sm:$0xff]
        %v338 = vld [vmem:[%s209 + $0x238] sm:$0xff]
        %v339 = vld [vmem:[%s209 + $0x240] sm:$0xff]
        %v340 = vld [vmem:[%s209 + $0x248] sm:$0xff]
        %v341 = vld [vmem:[%s209 + $0x250] sm:$0xff]
        %v342 = vld [vmem:[%s209 + $0x258] sm:$0xff]
        %v343 = vld [vmem:[%s209 + $0x260] sm:$0xff]
        %v344 = vld [vmem:[%s209 + $0x268] sm:$0xff]
        %v345 = vld [vmem:[%s209 + $0x270] sm:$0xff]
        %v346 = vld [vmem:[%s209 + $0x278] sm:$0xff]
        %v347 = vld [vmem:[%s209 + $0x280] sm:$0xff]
        %v348 = vld [vmem:[%s209 + $0x288] sm:$0xff]
        %v349 = vld [vmem:[%s209 + $0x290] sm:$0xff]
        %v350 = vld [vmem:[%s209 + $0x298] sm:$0xff]
        %v351 = vld [vmem:[%s209 + $0x2a0] sm:$0xff]
        %v352 = vld [vmem:[%s209 + $0x2a8] sm:$0xff]
        %v353 = vld [vmem:[%s209 + $0x2b0] sm:$0xff]
        %v354 = vld [vmem:[%s209 + $0x2b8] sm:$0xff]
        %v355 = vld [vmem:[%s209 + $0x2c0] sm:$0xff]
        %v356 = vld [vmem:[%s209 + $0x2c8] sm:$0xff]
        %v357 = vld [vmem:[%s209 + $0x2d0] sm:$0xff]
        %v358 = vld [vmem:[%s209 + $0x2d8] sm:$0xff]
        %v359 = vld [vmem:[%s209 + $0x2e0] sm:$0xff]
        %v360 = vld [vmem:[%s209 + $0x2e8] sm:$0xff]
        %v361 = vld [vmem:[%s209 + $0x2f0] sm:$0xff]
        %v362 = vld [vmem:[%s209 + $0x2f8] sm:$0xff]
        %v363 = vld [vmem:[%s209 + $0x300] sm:$0xff]
        %v364 = vld [vmem:[%s209 + $0x308] sm:$0xff]
        %v365 = vld [vmem:[%s209 + $0x310] sm:$0xff]
        %v366 = vld [vmem:[%s209 + $0x318] sm:$0xff]
        %v367 = vld [vmem:[%s209 + $0x320] sm:$0xff]
        %v368 = vld [vmem:[%s209 + $0x328] sm:$0xff]
        %v369 = vld [vmem:[%s209 + $0x330] sm:$0xff]
        %v370 = vld [vmem:[%s209 + $0x338] sm:$0xff]
        %v371 = vld [vmem:[%s209 + $0x340] sm:$0xff]
        %v372 = vld [vmem:[%s209 + $0x348] sm:$0xff]
        %v373 = vld [vmem:[%s209 + $0x350] sm:$0xff]
        %v374 = vld [vmem:[%s209 + $0x358] sm:$0xff]
        %v375 = vld [vmem:[%s209 + $0x360] sm:$0xff]
        %v376 = vld [vmem:[%s209 + $0x368] sm:$0xff]
        %v377 = vld [vmem:[%s209 + $0x370] sm:$0xff]
        %v378 = vld [vmem:[%s209 + $0x378] sm:$0xff]
        %v379 = vld [vmem:[%s209 + $0x380] sm:$0xff]
        %v380 = vld [vmem:[%s209 + $0x388] sm:$0xff]
        %v381 = vld [vmem:[%s209 + $0x390] sm:$0xff]
        %v382 = vld [vmem:[%s209 + $0x398] sm:$0xff]
        %v383 = vld [vmem:[%s209 + $0x3a0] sm:$0xff]
        %v384 = vld [vmem:[%s209 + $0x3a8] sm:$0xff]
        %v385 = vld [vmem:[%s209 + $0x3b0] sm:$0xff]
        %v386 = vld [vmem:[%s209 + $0x3b8] sm:$0xff]
        %v387 = vld [vmem:[%s209 + $0x3c0] sm:$0xff]
        %v388 = vld [vmem:[%s209 + $0x3c8] sm:$0xff]
        %v389 = vld [vmem:[%s209 + $0x3d0] sm:$0xff]
        %v390 = vld [vmem:[%s209 + $0x3d8] sm:$0xff]
        %v391 = vld [vmem:[%s209 + $0x3e0] sm:$0xff]
        %v392 = vld [vmem:[%s209 + $0x3e8] sm:$0xff]
        %v393 = vld [vmem:[%s209 + $0x3f0] sm:$0xff]
        %v394 = vld [vmem:[%s209 + $0x3f8] sm:$0xff]
        %v395 = vld [vmem:[%s209 + $0x400] sm:$0xff]
        %v396 = vld [vmem:[%s209 + $0x408] sm:$0xff]
        %v397 = vld [vmem:[%s209 + $0x410] sm:$0xff]
        %v398 = vld [vmem:[%s209 + $0x418] sm:$0xff]
        %v399 = vld [vmem:[%s209 + $0x420] sm:$0xff]
        %v400 = vld [vmem:[%s209 + $0x428] sm:$0xff]
        %v401 = vld [vmem:[%s209 + $0x430] sm:$0xff]
        %v402 = vld [vmem:[%s209 + $0x438] sm:$0xff]
        %v403 = vld [vmem:[%s209 + $0x440] sm:$0xff]
        %v404 = vld [vmem:[%s209 + $0x448] sm:$0xff]
        %v405 = vld [vmem:[%s209 + $0x450] sm:$0xff]
        %v406 = vld [vmem:[%s209 + $0x458] sm:$0xff]
        %v407 = vld [vmem:[%s209 + $0x460] sm:$0xff]
        %v408 = vld [vmem:[%s209 + $0x468] sm:$0xff]
        %v409 = vld [vmem:[%s209 + $0x470] sm:$0xff]
        %v410 = vld [vmem:[%s209 + $0x478] sm:$0xff]
        %v411 = vld [vmem:[%s209 + $0x480] sm:$0xff]
        %v412 = vld [vmem:[%s209 + $0x488] sm:$0xff]
        %v413 = vld [vmem:[%s209 + $0x490] sm:$0xff]
        %v414 = vld [vmem:[%s209 + $0x498] sm:$0xff]
        %v415 = vld [vmem:[%s209 + $0x4a0] sm:$0xff]
        %v416 = vld [vmem:[%s209 + $0x4a8] sm:$0xff]
        %v417 = vld [vmem:[%s209 + $0x4b0] sm:$0xff]
        %v418 = vld [vmem:[%s209 + $0x4b8] sm:$0xff]
        %v419 = vld [vmem:[%s209 + $0x4c0] sm:$0xff]
        %v420 = vld [vmem:[%s209 + $0x4c8] sm:$0xff]
        %v421 = vld [vmem:[%s209 + $0x4d0] sm:$0xff]
        %v422 = vld [vmem:[%s209 + $0x4d8] sm:$0xff]
        %v423 = vld [vmem:[%s209 + $0x4e0] sm:$0xff]
        %v424 = vld [vmem:[%s209 + $0x4e8] sm:$0xff]
        %v425 = vld [vmem:[%s209 + $0x4f0] sm:$0xff]
        %v426 = vld [vmem:[%s209 + $0x4f8] sm:$0xff]
        %v427 = vld [vmem:[%s209 + $0x500] sm:$0xff]
        %v428 = vld [vmem:[%s209 + $0x508] sm:$0xff]
        %v429 = vld [vmem:[%s209 + $0x510] sm:$0xff]
        %v430 = vld [vmem:[%s209 + $0x518] sm:$0xff]
        %v431 = vld [vmem:[%s209 + $0x520] sm:$0xff]
        %v432 = vld [vmem:[%s209 + $0x528] sm:$0xff]
        %v433 = vld [vmem:[%s209 + $0x530] sm:$0xff]
        %v434 = vld [vmem:[%s209 + $0x538] sm:$0xff]
        %v435 = vld [vmem:[%s209 + $0x540] sm:$0xff]
        %v436 = vld [vmem:[%s209 + $0x548] sm:$0xff]
        %v437 = vld [vmem:[%s209 + $0x550] sm:$0xff]
        %v438 = vld [vmem:[%s209 + $0x558] sm:$0xff]
        %v439 = vld [vmem:[%s209 + $0x560] sm:$0xff]
        %v440 = vld [vmem:[%s209 + $0x568] sm:$0xff]
        %v441 = vld [vmem:[%s209 + $0x570] sm:$0xff]
        %v442 = vld [vmem:[%s209 + $0x578] sm:$0xff]
        %v443 = vld [vmem:[%s209 + $0x580] sm:$0xff]
        %v444 = vld [vmem:[%s209 + $0x588] sm:$0xff]
        %v445 = vld [vmem:[%s209 + $0x590] sm:$0xff]
        %v446 = vld [vmem:[%s209 + $0x598] sm:$0xff]
        %v447 = vld [vmem:[%s209 + $0x5a0] sm:$0xff]
        %v448 = vld [vmem:[%s209 + $0x5a8] sm:$0xff]
        %v449 = vld [vmem:[%s209 + $0x5b0] sm:$0xff]
        %v450 = vld [vmem:[%s209 + $0x5b8] sm:$0xff]
        %v451 = vld [vmem:[%s209 + $0x5c0] sm:$0xff]
        %v452 = vld [vmem:[%s209 + $0x5c8] sm:$0xff]
        %v453 = vld [vmem:[%s209 + $0x5d0] sm:$0xff]
        %v454 = vld [vmem:[%s209 + $0x5d8] sm:$0xff]
        %v455 = vld [vmem:[%s209 + $0x5e0] sm:$0xff]
        %v456 = vld [vmem:[%s209 + $0x5e8] sm:$0xff]
        %v457 = vld [vmem:[%s209 + $0x5f0] sm:$0xff]
        %v458 = vld [vmem:[%s209 + $0x5f8] sm:$0xff]
        %v459 = vld [vmem:[%s209 + $0x600] sm:$0xff]
        %v460 = vld [vmem:[%s209 + $0x608] sm:$0xff]
        %v461 = vld [vmem:[%s209 + $0x610] sm:$0xff]
        %v462 = vld [vmem:[%s209 + $0x618] sm:$0xff]
        %v463 = vld [vmem:[%s209 + $0x620] sm:$0xff]
        %v464 = vld [vmem:[%s209 + $0x628] sm:$0xff]
        %v465 = vld [vmem:[%s209 + $0x630] sm:$0xff]
        %v466 = vld [vmem:[%s209 + $0x638] sm:$0xff]
        %v467 = vld [vmem:[%s209 + $0x640] sm:$0xff]
        %v468 = vld [vmem:[%s209 + $0x648] sm:$0xff]
        %v469 = vld [vmem:[%s209 + $0x650] sm:$0xff]
        %v470 = vld [vmem:[%s209 + $0x658] sm:$0xff]
        %v471 = vld [vmem:[%s209 + $0x660] sm:$0xff]
        %v472 = vld [vmem:[%s209 + $0x668] sm:$0xff]
        %v473 = vld [vmem:[%s209 + $0x670] sm:$0xff]
        %v474 = vld [vmem:[%s209 + $0x678] sm:$0xff]
        %v475 = vld [vmem:[%s209 + $0x680] sm:$0xff]
        %v476 = vld [vmem:[%s209 + $0x688] sm:$0xff]
        %v477 = vld [vmem:[%s209 + $0x690] sm:$0xff]
        %v478 = vld [vmem:[%s209 + $0x698] sm:$0xff]
        %v479 = vld [vmem:[%s209 + $0x6a0] sm:$0xff]
        %v480 = vld [vmem:[%s209 + $0x6a8] sm:$0xff]
        %v481 = vld [vmem:[%s209 + $0x6b0] sm:$0xff]
        %v482 = vld [vmem:[%s209 + $0x6b8] sm:$0xff]
        %v483 = vld [vmem:[%s209 + $0x6c0] sm:$0xff]
        %v484 = vld [vmem:[%s209 + $0x6c8] sm:$0xff]
        %v485 = vld [vmem:[%s209 + $0x6d0] sm:$0xff]
        %v486 = vld [vmem:[%s209 + $0x6d8] sm:$0xff]
        %v487 = vld [vmem:[%s209 + $0x6e0] sm:$0xff]
        %v488 = vld [vmem:[%s209 + $0x6e8] sm:$0xff]
        %v489 = vld [vmem:[%s209 + $0x6f0] sm:$0xff]
        %v490 = vld [vmem:[%s209 + $0x6f8] sm:$0xff]
        %v491 = vld [vmem:[%s209 + $0x700] sm:$0xff]
        %v492 = vld [vmem:[%s209 + $0x708] sm:$0xff]
        %v493 = vld [vmem:[%s209 + $0x710] sm:$0xff]
        %v494 = vld [vmem:[%s209 + $0x718] sm:$0xff]
        %v495 = vld [vmem:[%s209 + $0x720] sm:$0xff]
        %v496 = vld [vmem:[%s209 + $0x728] sm:$0xff]
        %v497 = vld [vmem:[%s209 + $0x730] sm:$0xff]
        %v498 = vld [vmem:[%s209 + $0x738] sm:$0xff]
        %v499 = vld [vmem:[%s209 + $0x740] sm:$0xff]
        %v500 = vld [vmem:[%s209 + $0x748] sm:$0xff]
        %v501 = vld [vmem:[%s209 + $0x750] sm:$0xff]
        %v502 = vld [vmem:[%s209 + $0x758] sm:$0xff]
        %v503 = vld [vmem:[%s209 + $0x760] sm:$0xff]
        %v504 = vld [vmem:[%s209 + $0x768] sm:$0xff]
        %v505 = vld [vmem:[%s209 + $0x770] sm:$0xff]
        %v506 = vld [vmem:[%s209 + $0x778] sm:$0xff]
        %v507 = vld [vmem:[%s209 + $0x780] sm:$0xff]
        %v508 = vld [vmem:[%s209 + $0x788] sm:$0xff]
        %v509 = vld [vmem:[%s209 + $0x790] sm:$0xff]
        %v510 = vld [vmem:[%s209 + $0x798] sm:$0xff]
        %v511 = vld [vmem:[%s209 + $0x7a0] sm:$0xff]
        %v512 = vld [vmem:[%s209 + $0x7a8] sm:$0xff]
        %v513 = vld [vmem:[%s209 + $0x7b0] sm:$0xff]
        %v514 = vld [vmem:[%s209 + $0x7b8] sm:$0xff]
        %v515 = vld [vmem:[%s209 + $0x7c0] sm:$0xff]
        %v516 = vld [vmem:[%s209 + $0x7c8] sm:$0xff]
        %v517 = vld [vmem:[%s209 + $0x7d0] sm:$0xff]
        %v518 = vld [vmem:[%s209 + $0x7d8] sm:$0xff]
        %v519 = vld [vmem:[%s209 + $0x7e0] sm:$0xff]
        %v520 = vld [vmem:[%s209 + $0x7e8] sm:$0xff]
        %v521 = vld [vmem:[%s209 + $0x7f0] sm:$0xff]
        %v522 = vld [vmem:[%s209 + $0x7f8] sm:$0xff]
        %v523 = vld [vmem:[%s209 + $0x800] sm:$0xff]
        %v524 = vld [vmem:[%s209 + $0x808] sm:$0xff]
        %v525 = vld [vmem:[%s209 + $0x810] sm:$0xff]
        %v526 = vld [vmem:[%s209 + $0x818] sm:$0xff]
        %v527 = vld [vmem:[%s209 + $0x820] sm:$0xff]
        %v528 = vld [vmem:[%s209 + $0x828] sm:$0xff]
        %v529 = vld [vmem:[%s209 + $0x830] sm:$0xff]
        %v530 = vld [vmem:[%s209 + $0x838] sm:$0xff]
        %v531 = vld [vmem:[%s209 + $0x840] sm:$0xff]
        %v532 = vld [vmem:[%s209 + $0x848] sm:$0xff]
        %v533 = vld [vmem:[%s209 + $0x850] sm:$0xff]
        %v534 = vld [vmem:[%s209 + $0x858] sm:$0xff]
        %v535 = vld [vmem:[%s209 + $0x860] sm:$0xff]
        %v536 = vld [vmem:[%s209 + $0x868] sm:$0xff]
        %v537 = vld [vmem:[%s209 + $0x870] sm:$0xff]
        %v538 = vld [vmem:[%s209 + $0x878] sm:$0xff]
        %v539 = vld [vmem:[%s209 + $0x880] sm:$0xff]
        %v540 = vld [vmem:[%s209 + $0x888] sm:$0xff]
        %v541 = vld [vmem:[%s209 + $0x890] sm:$0xff]
        %v542 = vld [vmem:[%s209 + $0x898] sm:$0xff]
        %v543 = vld [vmem:[%s209 + $0x8a0] sm:$0xff]
        %v544 = vld [vmem:[%s209 + $0x8a8] sm:$0xff]
        %v545 = vld [vmem:[%s209 + $0x8b0] sm:$0xff]
        %v546 = vld [vmem:[%s209 + $0x8b8] sm:$0xff]
        %v547 = vld [vmem:[%s209 + $0x8c0] sm:$0xff]
        %v548 = vld [vmem:[%s209 + $0x8c8] sm:$0xff]
        %v549 = vld [vmem:[%s209 + $0x8d0] sm:$0xff]
        %v550 = vld [vmem:[%s209 + $0x8d8] sm:$0xff]
        %v551 = vld [vmem:[%s209 + $0x8e0] sm:$0xff]
        %v552 = vld [vmem:[%s209 + $0x8e8] sm:$0xff]
        %v553 = vld [vmem:[%s209 + $0x8f0] sm:$0xff]
        %v554 = vld [vmem:[%s209 + $0x8f8] sm:$0xff]
        %v555 = vld [vmem:[%s209 + $0x900] sm:$0xff]
        %v556 = vld [vmem:[%s209 + $0x908] sm:$0xff]
        %v557 = vld [vmem:[%s209 + $0x910] sm:$0xff]
        %v558 = vld [vmem:[%s209 + $0x918] sm:$0xff]
        %v559 = vld [vmem:[%s209 + $0x920] sm:$0xff]
        %v560 = vld [vmem:[%s209 + $0x928] sm:$0xff]
        %v561 = vld [vmem:[%s209 + $0x930] sm:$0xff]
        %v562 = vld [vmem:[%s209 + $0x938] sm:$0xff]
        %v563 = vld [vmem:[%s209 + $0x940] sm:$0xff]
        %v564 = vld [vmem:[%s209 + $0x948] sm:$0xff]
        %v565 = vld [vmem:[%s209 + $0x950] sm:$0xff]
        %v566 = vld [vmem:[%s209 + $0x958] sm:$0xff]
        %v567 = vld [vmem:[%s209 + $0x960] sm:$0xff]
        %v568 = vld [vmem:[%s209 + $0x968] sm:$0xff]
        %v569 = vld [vmem:[%s209 + $0x970] sm:$0xff]
        %v570 = vld [vmem:[%s209 + $0x978] sm:$0xff]
        %v571 = vld [vmem:[%s209 + $0x980] sm:$0xff]
        %v572 = vld [vmem:[%s209 + $0x988] sm:$0xff]
        %v573 = vld [vmem:[%s209 + $0x990] sm:$0xff]
        %v574 = vld [vmem:[%s209 + $0x998] sm:$0xff]
        %v575 = vld [vmem:[%s209 + $0x9a0] sm:$0xff]
        %v576 = vld [vmem:[%s209 + $0x9a8] sm:$0xff]
        %v577 = vld [vmem:[%s209 + $0x9b0] sm:$0xff]
        %v578 = vld [vmem:[%s209 + $0x9b8] sm:$0xff]
        %v579 = vld [vmem:[%s209 + $0x9c0] sm:$0xff]
        %v580 = vld [vmem:[%s209 + $0x9c8] sm:$0xff]
        %v581 = vld [vmem:[%s209 + $0x9d0] sm:$0xff]
        %v582 = vld [vmem:[%s209 + $0x9d8] sm:$0xff]
        %v583 = vld [vmem:[%s209 + $0x9e0] sm:$0xff]
        %v584 = vld [vmem:[%s209 + $0x9e8] sm:$0xff]
        %v585 = vld [vmem:[%s209 + $0x9f0] sm:$0xff]
        %v586 = vld [vmem:[%s209 + $0x9f8] sm:$0xff]
        %v587 = vld [vmem:[%s209 + $0xa00] sm:$0xff]
        %v588 = vld [vmem:[%s209 + $0xa08] sm:$0xff]
        %v589 = vld [vmem:[%s209 + $0xa10] sm:$0xff]
        %v590 = vld [vmem:[%s209 + $0xa18] sm:$0xff]
        %v591 = vld [vmem:[%s209 + $0xa20] sm:$0xff]
        %v592 = vld [vmem:[%s209 + $0xa28] sm:$0xff]
        %v593 = vld [vmem:[%s209 + $0xa30] sm:$0xff]
        %v594 = vld [vmem:[%s209 + $0xa38] sm:$0xff]
        %v595 = vld [vmem:[%s209 + $0xa40] sm:$0xff]
        %v596 = vld [vmem:[%s209 + $0xa48] sm:$0xff]
        %v597 = vld [vmem:[%s209 + $0xa50] sm:$0xff]
        %v598 = vld [vmem:[%s209 + $0xa58] sm:$0xff]
        %v599 = vld [vmem:[%s209 + $0xa60] sm:$0xff]
        %v600 = vld [vmem:[%s209 + $0xa68] sm:$0xff]
        %v601 = vld [vmem:[%s209 + $0xa70] sm:$0xff]
        %v602 = vld [vmem:[%s209 + $0xa78] sm:$0xff]
        %v603 = vld [vmem:[%s209 + $0xa80] sm:$0xff]
        %v604 = vld [vmem:[%s209 + $0xa88] sm:$0xff]
        %v605 = vld [vmem:[%s209 + $0xa90] sm:$0xff]
        %v606 = vld [vmem:[%s209 + $0xa98] sm:$0xff]
        %v607 = vld [vmem:[%s209 + $0xaa0] sm:$0xff]
        %v608 = vld [vmem:[%s209 + $0xaa8] sm:$0xff]
        %v609 = vld [vmem:[%s209 + $0xab0] sm:$0xff]
        %v610 = vld [vmem:[%s209 + $0xab8] sm:$0xff]
        %v611 = vld [vmem:[%s209 + $0xac0] sm:$0xff]
        %v612 = vld [vmem:[%s209 + $0xac8] sm:$0xff]
        %v613 = vld [vmem:[%s209 + $0xad0] sm:$0xff]
        %v614 = vld [vmem:[%s209 + $0xad8] sm:$0xff]
        %v615 = vld [vmem:[%s209 + $0xae0] sm:$0xff]
        %v616 = vld [vmem:[%s209 + $0xae8] sm:$0xff]
        %v617 = vld [vmem:[%s209 + $0xaf0] sm:$0xff]
        %v618 = vld [vmem:[%s209 + $0xaf8] sm:$0xff]
        %v619 = vld [vmem:[%s209 + $0xb00] sm:$0xff]
        %v620 = vld [vmem:[%s209 + $0xb08] sm:$0xff]
        %v621 = vld [vmem:[%s209 + $0xb10] sm:$0xff]
        %v622 = vld [vmem:[%s209 + $0xb18] sm:$0xff]
        %v623 = vld [vmem:[%s209 + $0xb20] sm:$0xff]
        %v624 = vld [vmem:[%s209 + $0xb28] sm:$0xff]
        %v625 = vld [vmem:[%s209 + $0xb30] sm:$0xff]
        %v626 = vld [vmem:[%s209 + $0xb38] sm:$0xff]
        %v627 = vld [vmem:[%s209 + $0xb40] sm:$0xff]
        %v628 = vld [vmem:[%s209 + $0xb48] sm:$0xff]
        %v629 = vld [vmem:[%s209 + $0xb50] sm:$0xff]
        %v630 = vld [vmem:[%s209 + $0xb58] sm:$0xff]
        %v631 = vld [vmem:[%s209 + $0xb60] sm:$0xff]
        %v632 = vld [vmem:[%s209 + $0xb68] sm:$0xff]
        %v633 = vld [vmem:[%s209 + $0xb70] sm:$0xff]
        %v634 = vld [vmem:[%s209 + $0xb78] sm:$0xff]
        %v635 = vld [vmem:[%s209 + $0xb80] sm:$0xff]
        %v636 = vld [vmem:[%s209 + $0xb88] sm:$0xff]
        %v637 = vld [vmem:[%s209 + $0xb90] sm:$0xff]
        %v638 = vld [vmem:[%s209 + $0xb98] sm:$0xff]
        %v639 = vld [vmem:[%s209 + $0xba0] sm:$0xff]
        %v640 = vld [vmem:[%s209 + $0xba8] sm:$0xff]
        %v641 = vld [vmem:[%s209 + $0xbb0] sm:$0xff]
        %v642 = vld [vmem:[%s209 + $0xbb8] sm:$0xff]
        %v643 = vld [vmem:[%s209 + $0xbc0] sm:$0xff]
        %v644 = vld [vmem:[%s209 + $0xbc8] sm:$0xff]
        %v645 = vld [vmem:[%s209 + $0xbd0] sm:$0xff]
        %v646 = vld [vmem:[%s209 + $0xbd8] sm:$0xff]
        %v647 = vld [vmem:[%s209 + $0xbe0] sm:$0xff]
        %v648 = vld [vmem:[%s209 + $0xbe8] sm:$0xff]
        %v649 = vld [vmem:[%s209 + $0xbf0] sm:$0xff]
        %v650 = vld [vmem:[%s209 + $0xbf8] sm:$0xff]
        %v651 = vld [vmem:[%s209 + $0xc00] sm:$0xff]
        %v652 = vld [vmem:[%s209 + $0xc08] sm:$0xff]
        %v653 = vld [vmem:[%s209 + $0xc10] sm:$0xff]
        %v654 = vld [vmem:[%s209 + $0xc18] sm:$0xff]
        %v655 = vld [vmem:[%s209 + $0xc20] sm:$0xff]
        %v656 = vld [vmem:[%s209 + $0xc28] sm:$0xff]
        %v657 = vld [vmem:[%s209 + $0xc30] sm:$0xff]
        %v658 = vld [vmem:[%s209 + $0xc38] sm:$0xff]
        %v659 = vld [vmem:[%s209 + $0xc40] sm:$0xff]
        %v660 = vld [vmem:[%s209 + $0xc48] sm:$0xff]
        %v661 = vld [vmem:[%s209 + $0xc50] sm:$0xff]
        %v662 = vld [vmem:[%s209 + $0xc58] sm:$0xff]
        %v663 = vld [vmem:[%s209 + $0xc60] sm:$0xff]
        %v664 = vld [vmem:[%s209 + $0xc68] sm:$0xff]
        %v665 = vld [vmem:[%s209 + $0xc70] sm:$0xff]
        %v666 = vld [vmem:[%s209 + $0xc78] sm:$0xff]
        %v667 = vld [vmem:[%s209 + $0xc80] sm:$0xff]
        %v668 = vld [vmem:[%s209 + $0xc88] sm:$0xff]
        %v669 = vld [vmem:[%s209 + $0xc90] sm:$0xff]
        %v670 = vld [vmem:[%s209 + $0xc98] sm:$0xff]
        %v671 = vld [vmem:[%s209 + $0xca0] sm:$0xff]
        %v672 = vld [vmem:[%s209 + $0xca8] sm:$0xff]
        %v673 = vld [vmem:[%s209 + $0xcb0] sm:$0xff]
        %v674 = vld [vmem:[%s209 + $0xcb8] sm:$0xff]
        %v675 = vld [vmem:[%s209 + $0xcc0] sm:$0xff]
        %v676 = vld [vmem:[%s209 + $0xcc8] sm:$0xff]
        %v677 = vld [vmem:[%s209 + $0xcd0] sm:$0xff]
        %v678 = vld [vmem:[%s209 + $0xcd8] sm:$0xff]
        %v679 = vld [vmem:[%s209 + $0xce0] sm:$0xff]
        %v680 = vld [vmem:[%s209 + $0xce8] sm:$0xff]
        %v681 = vld [vmem:[%s209 + $0xcf0] sm:$0xff]
        %v682 = vld [vmem:[%s209 + $0xcf8] sm:$0xff]
        %v683 = vld [vmem:[%s209 + $0xd00] sm:$0xff]
        %v684 = vld [vmem:[%s209 + $0xd08] sm:$0xff]
        %v685 = vld [vmem:[%s209 + $0xd10] sm:$0xff]
        %v686 = vld [vmem:[%s209 + $0xd18] sm:$0xff]
        %v687 = vld [vmem:[%s209 + $0xd20] sm:$0xff]
        %v688 = vld [vmem:[%s209 + $0xd28] sm:$0xff]
        %v689 = vld [vmem:[%s209 + $0xd30] sm:$0xff]
        %v690 = vld [vmem:[%s209 + $0xd38] sm:$0xff]
        %v691 = vld [vmem:[%s209 + $0xd40] sm:$0xff]
        %v692 = vld [vmem:[%s209 + $0xd48] sm:$0xff]
        %v693 = vld [vmem:[%s209 + $0xd50] sm:$0xff]
        %v694 = vld [vmem:[%s209 + $0xd58] sm:$0xff]
        %v695 = vld [vmem:[%s209 + $0xd60] sm:$0xff]
        %v696 = vld [vmem:[%s209 + $0xd68] sm:$0xff]
        %v697 = vld [vmem:[%s209 + $0xd70] sm:$0xff]
        %v698 = vld [vmem:[%s209 + $0xd78] sm:$0xff]
        %v699 = vld [vmem:[%s209 + $0xd80] sm:$0xff]
        %v700 = vld [vmem:[%s209 + $0xd88] sm:$0xff]
        %v701 = vld [vmem:[%s209 + $0xd90] sm:$0xff]
        %v702 = vld [vmem:[%s209 + $0xd98] sm:$0xff]
        %v703 = vld [vmem:[%s209 + $0xda0] sm:$0xff]
        %v704 = vld [vmem:[%s209 + $0xda8] sm:$0xff]
        %v705 = vld [vmem:[%s209 + $0xdb0] sm:$0xff]
        %v706 = vld [vmem:[%s209 + $0xdb8] sm:$0xff]
        %v707 = vld [vmem:[%s209 + $0xdc0] sm:$0xff]
        %v708 = vld [vmem:[%s209 + $0xdc8] sm:$0xff]
        %v709 = vld [vmem:[%s209 + $0xdd0] sm:$0xff]
        %v710 = vld [vmem:[%s209 + $0xdd8] sm:$0xff]
        %v711 = vld [vmem:[%s209 + $0xde0] sm:$0xff]
        %v712 = vld [vmem:[%s209 + $0xde8] sm:$0xff]
        %v713 = vld [vmem:[%s209 + $0xdf0] sm:$0xff]
        %v714 = vld [vmem:[%s209 + $0xdf8] sm:$0xff]
        %v715 = vld [vmem:[%s209 + $0xe00] sm:$0xff]
        %v716 = vld [vmem:[%s209 + $0xe08] sm:$0xff]
        %v717 = vld [vmem:[%s209 + $0xe10] sm:$0xff]
        %v718 = vld [vmem:[%s209 + $0xe18] sm:$0xff]
        %v719 = vld [vmem:[%s209 + $0xe20] sm:$0xff]
        %v720 = vld [vmem:[%s209 + $0xe28] sm:$0xff]
        %v721 = vld [vmem:[%s209 + $0xe30] sm:$0xff]
        %v722 = vld [vmem:[%s209 + $0xe38] sm:$0xff]
        %v723 = vld [vmem:[%s209 + $0xe40] sm:$0xff]
        %v724 = vld [vmem:[%s209 + $0xe48] sm:$0xff]
        %v725 = vld [vmem:[%s209 + $0xe50] sm:$0xff]
        %v726 = vld [vmem:[%s209 + $0xe58] sm:$0xff]
        %v727 = vld [vmem:[%s209 + $0xe60] sm:$0xff]
        %v728 = vld [vmem:[%s209 + $0xe68] sm:$0xff]
        %v729 = vld [vmem:[%s209 + $0xe70] sm:$0xff]
        %v730 = vld [vmem:[%s209 + $0xe78] sm:$0xff]
        %v731 = vld [vmem:[%s209 + $0xe80] sm:$0xff]
        %v732 = vld [vmem:[%s209 + $0xe88] sm:$0xff]
        %v733 = vld [vmem:[%s209 + $0xe90] sm:$0xff]
        %v734 = vld [vmem:[%s209 + $0xe98] sm:$0xff]
        %v735 = vld [vmem:[%s209 + $0xea0] sm:$0xff]
        %v736 = vld [vmem:[%s209 + $0xea8] sm:$0xff]
        %v737 = vld [vmem:[%s209 + $0xeb0] sm:$0xff]
        %v738 = vld [vmem:[%s209 + $0xeb8] sm:$0xff]
        %v739 = vld [vmem:[%s209 + $0xec0] sm:$0xff]
        %v740 = vld [vmem:[%s209 + $0xec8] sm:$0xff]
        %v741 = vld [vmem:[%s209 + $0xed0] sm:$0xff]
        %v742 = vld [vmem:[%s209 + $0xed8] sm:$0xff]
        %v743 = vld [vmem:[%s209 + $0xee0] sm:$0xff]
        %v744 = vld [vmem:[%s209 + $0xee8] sm:$0xff]
        %v745 = vld [vmem:[%s209 + $0xef0] sm:$0xff]
        %v746 = vld [vmem:[%s209 + $0xef8] sm:$0xff]
        %v747 = vld [vmem:[%s209 + $0xf00] sm:$0xff]
        %v748 = vld [vmem:[%s209 + $0xf08] sm:$0xff]
        %v749 = vld [vmem:[%s209 + $0xf10] sm:$0xff]
        %v750 = vld [vmem:[%s209 + $0xf18] sm:$0xff]
        %v751 = vld [vmem:[%s209 + $0xf20] sm:$0xff]
        %v752 = vld [vmem:[%s209 + $0xf28] sm:$0xff]
        %v753 = vld [vmem:[%s209 + $0xf30] sm:$0xff]
        %v754 = vld [vmem:[%s209 + $0xf38] sm:$0xff]
        %v755 = vld [vmem:[%s209 + $0xf40] sm:$0xff]
        %v756 = vld [vmem:[%s209 + $0xf48] sm:$0xff]
        %v757 = vld [vmem:[%s209 + $0xf50] sm:$0xff]
        %v758 = vld [vmem:[%s209 + $0xf58] sm:$0xff]
        %v759 = vld [vmem:[%s209 + $0xf60] sm:$0xff]
        %v760 = vld [vmem:[%s209 + $0xf68] sm:$0xff]
        %v761 = vld [vmem:[%s209 + $0xf70] sm:$0xff]
        %v762 = vld [vmem:[%s209 + $0xf78] sm:$0xff]
        %v763 = vld [vmem:[%s209 + $0xf80] sm:$0xff]
        %v764 = vld [vmem:[%s209 + $0xf88] sm:$0xff]
        %v765 = vld [vmem:[%s209 + $0xf90] sm:$0xff]
        %v766 = vld [vmem:[%s209 + $0xf98] sm:$0xff]
        %v771 = vunpack.c.l.b16 %v263
        %v772 = vunpack.c.h.b16 %v263
        %v773 = vunpack.c.l.b16 %v264
        %v774 = vunpack.c.h.b16 %v264
        %v775 = vunpack.c.l.b16 %v265
        %v776 = vunpack.c.h.b16 %v265
        %v777 = vunpack.c.l.b16 %v266
        %v778 = vunpack.c.h.b16 %v266
        %v779 = vpack.c.b16 %v771, %v771
        %v780 = vpack.c.b16 %v772, %v772
        %v781 = vpack.c.b16 %v773, %v773
        %v782 = vpack.c.b16 %v774, %v774
        %v783 = vpack.c.b16 %v775, %v775
        %v784 = vpack.c.b16 %v776, %v776
        %v785 = vpack.c.b16 %v777, %v777
        %v786 = vpack.c.b16 %v778, %v778
        %v1294 = vunpack.c.l.b16 %v267
        %v1295 = vunpack.c.h.b16 %v267
        %v1296 = vunpack.c.l.b16 %v268
        %v1297 = vunpack.c.h.b16 %v268
        %v1298 = vunpack.c.l.b16 %v269
        %v1299 = vunpack.c.h.b16 %v269
        %v1300 = vunpack.c.l.b16 %v270
        %v1301 = vunpack.c.h.b16 %v270
        %v1302 = vunpack.c.l.b16 %v271
        %v1303 = vunpack.c.h.b16 %v271
        %v1304 = vunpack.c.l.b16 %v272
        %v1305 = vunpack.c.h.b16 %v272
        %v1306 = vunpack.c.l.b16 %v273
        %v1307 = vunpack.c.h.b16 %v273
        %v1308 = vunpack.c.l.b16 %v274
        %v1309 = vunpack.c.h.b16 %v274
        %v1310 = vunpack.c.l.b16 %v275
        %v1311 = vunpack.c.h.b16 %v275
        %v1312 = vunpack.c.l.b16 %v276
        %v1313 = vunpack.c.h.b16 %v276
        %v1314 = vunpack.c.l.b16 %v277
        %v1315 = vunpack.c.h.b16 %v277
        %v1316 = vunpack.c.l.b16 %v278
        %v1317 = vunpack.c.h.b16 %v278
        %v1318 = vunpack.c.l.b16 %v279
        %v1319 = vunpack.c.h.b16 %v279
        %v1320 = vunpack.c.l.b16 %v280
        %v1321 = vunpack.c.h.b16 %v280
        %v1322 = vunpack.c.l.b16 %v281
        %v1323 = vunpack.c.h.b16 %v281
        %v1324 = vunpack.c.l.b16 %v282
        %v1325 = vunpack.c.h.b16 %v282
        %v1326 = vunpack.c.l.b16 %v283
        %v1327 = vunpack.c.h.b16 %v283
        %v1328 = vunpack.c.l.b16 %v284
        %v1329 = vunpack.c.h.b16 %v284
        %v1330 = vunpack.c.l.b16 %v285
        %v1331 = vunpack.c.h.b16 %v285
        %v1332 = vunpack.c.l.b16 %v286
        %v1333 = vunpack.c.h.b16 %v286
        %v1334 = vunpack.c.l.b16 %v287
        %v1335 = vunpack.c.h.b16 %v287
        %v1336 = vunpack.c.l.b16 %v288
        %v1337 = vunpack.c.h.b16 %v288
        %v1338 = vunpack.c.l.b16 %v289
        %v1339 = vunpack.c.h.b16 %v289
        %v1340 = vunpack.c.l.b16 %v290
        %v1341 = vunpack.c.h.b16 %v290
        %v1342 = vunpack.c.l.b16 %v291
        %v1343 = vunpack.c.h.b16 %v291
        %v1344 = vunpack.c.l.b16 %v292
        %v1345 = vunpack.c.h.b16 %v292
        %v1346 = vunpack.c.l.b16 %v293
        %v1347 = vunpack.c.h.b16 %v293
        %v1348 = vunpack.c.l.b16 %v294
        %v1349 = vunpack.c.h.b16 %v294
        %v1350 = vunpack.c.l.b16 %v295
        %v1351 = vunpack.c.h.b16 %v295
        %v1352 = vunpack.c.l.b16 %v296
        %v1353 = vunpack.c.h.b16 %v296
        %v1354 = vunpack.c.l.b16 %v297
        %v1355 = vunpack.c.h.b16 %v297
        %v1356 = vunpack.c.l.b16 %v298
        %v1357 = vunpack.c.h.b16 %v298
        %v1358 = vunpack.c.l.b16 %v299
        %v1359 = vunpack.c.h.b16 %v299
        %v1360 = vunpack.c.l.b16 %v300
        %v1361 = vunpack.c.h.b16 %v300
        %v1362 = vunpack.c.l.b16 %v301
        %v1363 = vunpack.c.h.b16 %v301
        %v1364 = vunpack.c.l.b16 %v302
        %v1365 = vunpack.c.h.b16 %v302
        %v1366 = vunpack.c.l.b16 %v303
        %v1367 = vunpack.c.h.b16 %v303
        %v1368 = vunpack.c.l.b16 %v304
        %v1369 = vunpack.c.h.b16 %v304
        %v1370 = vunpack.c.l.b16 %v305
        %v1371 = vunpack.c.h.b16 %v305
        %v1372 = vunpack.c.l.b16 %v306
        %v1373 = vunpack.c.h.b16 %v306
        %v1374 = vunpack.c.l.b16 %v307
        %v1375 = vunpack.c.h.b16 %v307
        %v1376 = vunpack.c.l.b16 %v308
        %v1377 = vunpack.c.h.b16 %v308
        %v1378 = vunpack.c.l.b16 %v309
        %v1379 = vunpack.c.h.b16 %v309
        %v1380 = vunpack.c.l.b16 %v310
        %v1381 = vunpack.c.h.b16 %v310
        %v1382 = vunpack.c.l.b16 %v311
        %v1383 = vunpack.c.h.b16 %v311
        %v1384 = vunpack.c.l.b16 %v312
        %v1385 = vunpack.c.h.b16 %v312
        %v1386 = vunpack.c.l.b16 %v313
        %v1387 = vunpack.c.h.b16 %v313
        %v1388 = vunpack.c.l.b16 %v314
        %v1389 = vunpack.c.h.b16 %v314
        %v1390 = vunpack.c.l.b16 %v315
        %v1391 = vunpack.c.h.b16 %v315
        %v1392 = vunpack.c.l.b16 %v316
        %v1393 = vunpack.c.h.b16 %v316
        %v1394 = vunpack.c.l.b16 %v317
        %v1395 = vunpack.c.h.b16 %v317
        %v1396 = vunpack.c.l.b16 %v318
        %v1397 = vunpack.c.h.b16 %v318
        %v1398 = vunpack.c.l.b16 %v319
        %v1399 = vunpack.c.h.b16 %v319
        %v1400 = vunpack.c.l.b16 %v320
        %v1401 = vunpack.c.h.b16 %v320
        %v1402 = vunpack.c.l.b16 %v321
        %v1403 = vunpack.c.h.b16 %v321
        %v1404 = vunpack.c.l.b16 %v322
        %v1405 = vunpack.c.h.b16 %v322
        %v1406 = vunpack.c.l.b16 %v323
        %v1407 = vunpack.c.h.b16 %v323
        %v1408 = vunpack.c.l.b16 %v324
        %v1409 = vunpack.c.h.b16 %v324
        %v1410 = vunpack.c.l.b16 %v325
        %v1411 = vunpack.c.h.b16 %v325
        %v1412 = vunpack.c.l.b16 %v326
        %v1413 = vunpack.c.h.b16 %v326
        %v1414 = vunpack.c.l.b16 %v327
        %v1415 = vunpack.c.h.b16 %v327
        %v1416 = vunpack.c.l.b16 %v328
        %v1417 = vunpack.c.h.b16 %v328
        %v1418 = vunpack.c.l.b16 %v329
        %v1419 = vunpack.c.h.b16 %v329
        %v1420 = vunpack.c.l.b16 %v330
        %v1421 = vunpack.c.h.b16 %v330
        %v1422 = vunpack.c.l.b16 %v331
        %v1423 = vunpack.c.h.b16 %v331
        %v1424 = vunpack.c.l.b16 %v332
        %v1425 = vunpack.c.h.b16 %v332
        %v1426 = vunpack.c.l.b16 %v333
        %v1427 = vunpack.c.h.b16 %v333
        %v1428 = vunpack.c.l.b16 %v334
        %v1429 = vunpack.c.h.b16 %v334
        %v1430 = vunpack.c.l.b16 %v335
        %v1431 = vunpack.c.h.b16 %v335
        %v1432 = vunpack.c.l.b16 %v336
        %v1433 = vunpack.c.h.b16 %v336
        %v1434 = vunpack.c.l.b16 %v337
        %v1435 = vunpack.c.h.b16 %v337
        %v1436 = vunpack.c.l.b16 %v338
        %v1437 = vunpack.c.h.b16 %v338
        %v1438 = vunpack.c.l.b16 %v339
        %v1439 = vunpack.c.h.b16 %v339
        %v1440 = vunpack.c.l.b16 %v340
        %v1441 = vunpack.c.h.b16 %v340
        %v1442 = vunpack.c.l.b16 %v341
        %v1443 = vunpack.c.h.b16 %v341
        %v1444 = vunpack.c.l.b16 %v342
        %v1445 = vunpack.c.h.b16 %v342
        %v1446 = vunpack.c.l.b16 %v343
        %v1447 = vunpack.c.h.b16 %v343
        %v1448 = vunpack.c.l.b16 %v344
        %v1449 = vunpack.c.h.b16 %v344
        %v1450 = vunpack.c.l.b16 %v345
        %v1451 = vunpack.c.h.b16 %v345
        %v1452 = vunpack.c.l.b16 %v346
        %v1453 = vunpack.c.h.b16 %v346
        %v1454 = vunpack.c.l.b16 %v347
        %v1455 = vunpack.c.h.b16 %v347
        %v1456 = vunpack.c.l.b16 %v348
        %v1457 = vunpack.c.h.b16 %v348
        %v1458 = vunpack.c.l.b16 %v349
        %v1459 = vunpack.c.h.b16 %v349
        %v1460 = vunpack.c.l.b16 %v350
        %v1461 = vunpack.c.h.b16 %v350
        %v1462 = vunpack.c.l.b16 %v351
        %v1463 = vunpack.c.h.b16 %v351
        %v1464 = vunpack.c.l.b16 %v352
        %v1465 = vunpack.c.h.b16 %v352
        %v1466 = vunpack.c.l.b16 %v353
        %v1467 = vunpack.c.h.b16 %v353
        %v1468 = vunpack.c.l.b16 %v354
        %v1469 = vunpack.c.h.b16 %v354
        %v1470 = vunpack.c.l.b16 %v355
        %v1471 = vunpack.c.h.b16 %v355
        %v1472 = vunpack.c.l.b16 %v356
        %v1473 = vunpack.c.h.b16 %v356
        %v1474 = vunpack.c.l.b16 %v357
        %v1475 = vunpack.c.h.b16 %v357
        %v1476 = vunpack.c.l.b16 %v358
        %v1477 = vunpack.c.h.b16 %v358
        %v1478 = vunpack.c.l.b16 %v359
        %v1479 = vunpack.c.h.b16 %v359
        %v1480 = vunpack.c.l.b16 %v360
        %v1481 = vunpack.c.h.b16 %v360
        %v1482 = vunpack.c.l.b16 %v361
        %v1483 = vunpack.c.h.b16 %v361
        %v1484 = vunpack.c.l.b16 %v362
        %v1485 = vunpack.c.h.b16 %v362
        %v1486 = vunpack.c.l.b16 %v363
        %v1487 = vunpack.c.h.b16 %v363
        %v1488 = vunpack.c.l.b16 %v364
        %v1489 = vunpack.c.h.b16 %v364
        %v1490 = vunpack.c.l.b16 %v365
        %v1491 = vunpack.c.h.b16 %v365
        %v1492 = vunpack.c.l.b16 %v366
        %v1493 = vunpack.c.h.b16 %v366
        %v1494 = vunpack.c.l.b16 %v367
        %v1495 = vunpack.c.h.b16 %v367
        %v1496 = vunpack.c.l.b16 %v368
        %v1497 = vunpack.c.h.b16 %v368
        %v1498 = vunpack.c.l.b16 %v369
        %v1499 = vunpack.c.h.b16 %v369
        %v1500 = vunpack.c.l.b16 %v370
        %v1501 = vunpack.c.h.b16 %v370
        %v1502 = vunpack.c.l.b16 %v371
        %v1503 = vunpack.c.h.b16 %v371
        %v1504 = vunpack.c.l.b16 %v372
        %v1505 = vunpack.c.h.b16 %v372
        %v1506 = vunpack.c.l.b16 %v373
        %v1507 = vunpack.c.h.b16 %v373
        %v1508 = vunpack.c.l.b16 %v374
        %v1509 = vunpack.c.h.b16 %v374
        %v1510 = vunpack.c.l.b16 %v375
        %v1511 = vunpack.c.h.b16 %v375
        %v1512 = vunpack.c.l.b16 %v376
        %v1513 = vunpack.c.h.b16 %v376
        %v1514 = vunpack.c.l.b16 %v377
        %v1515 = vunpack.c.h.b16 %v377
        %v1516 = vunpack.c.l.b16 %v378
        %v1517 = vunpack.c.h.b16 %v378
        %v1518 = vunpack.c.l.b16 %v379
        %v1519 = vunpack.c.h.b16 %v379
        %v1520 = vunpack.c.l.b16 %v380
        %v1521 = vunpack.c.h.b16 %v380
        %v1522 = vunpack.c.l.b16 %v381
        %v1523 = vunpack.c.h.b16 %v381
        %v1524 = vunpack.c.l.b16 %v382
        %v1525 = vunpack.c.h.b16 %v382
        %v1526 = vunpack.c.l.b16 %v383
        %v1527 = vunpack.c.h.b16 %v383
        %v1528 = vunpack.c.l.b16 %v384
        %v1529 = vunpack.c.h.b16 %v384
        %v1530 = vunpack.c.l.b16 %v385
        %v1531 = vunpack.c.h.b16 %v385
        %v1532 = vunpack.c.l.b16 %v386
        %v1533 = vunpack.c.h.b16 %v386
        %v1534 = vunpack.c.l.b16 %v387
        %v1535 = vunpack.c.h.b16 %v387
        %v1536 = vunpack.c.l.b16 %v388
        %v1537 = vunpack.c.h.b16 %v388
        %v1538 = vunpack.c.l.b16 %v389
        %v1539 = vunpack.c.h.b16 %v389
        %v1540 = vunpack.c.l.b16 %v390
        %v1541 = vunpack.c.h.b16 %v390
        %v1542 = vunpack.c.l.b16 %v391
        %v1543 = vunpack.c.h.b16 %v391
        %v1544 = vunpack.c.l.b16 %v392
        %v1545 = vunpack.c.h.b16 %v392
        %v1546 = vunpack.c.l.b16 %v393
        %v1547 = vunpack.c.h.b16 %v393
        %v1548 = vunpack.c.l.b16 %v394
        %v1549 = vunpack.c.h.b16 %v394
        %v1550 = vunpack.c.l.b16 %v395
        %v1551 = vunpack.c.h.b16 %v395
        %v1552 = vunpack.c.l.b16 %v396
        %v1553 = vunpack.c.h.b16 %v396
        %v1554 = vunpack.c.l.b16 %v397
        %v1555 = vunpack.c.h.b16 %v397
        %v1556 = vunpack.c.l.b16 %v398
        %v1557 = vunpack.c.h.b16 %v398
        %v1558 = vunpack.c.l.b16 %v399
        %v1559 = vunpack.c.h.b16 %v399
        %v1560 = vunpack.c.l.b16 %v400
        %v1561 = vunpack.c.h.b16 %v400
        %v1562 = vunpack.c.l.b16 %v401
        %v1563 = vunpack.c.h.b16 %v401
        %v1564 = vunpack.c.l.b16 %v402
        %v1565 = vunpack.c.h.b16 %v402
        %v1566 = vunpack.c.l.b16 %v403
        %v1567 = vunpack.c.h.b16 %v403
        %v1568 = vunpack.c.l.b16 %v404
        %v1569 = vunpack.c.h.b16 %v404
        %v1570 = vunpack.c.l.b16 %v405
        %v1571 = vunpack.c.h.b16 %v405
        %v1572 = vunpack.c.l.b16 %v406
        %v1573 = vunpack.c.h.b16 %v406
        %v1574 = vunpack.c.l.b16 %v407
        %v1575 = vunpack.c.h.b16 %v407
        %v1576 = vunpack.c.l.b16 %v408
        %v1577 = vunpack.c.h.b16 %v408
        %v1578 = vunpack.c.l.b16 %v409
        %v1579 = vunpack.c.h.b16 %v409
        %v1580 = vunpack.c.l.b16 %v410
        %v1581 = vunpack.c.h.b16 %v410
        %v1582 = vunpack.c.l.b16 %v411
        %v1583 = vunpack.c.h.b16 %v411
        %v1584 = vunpack.c.l.b16 %v412
        %v1585 = vunpack.c.h.b16 %v412
        %v1586 = vunpack.c.l.b16 %v413
        %v1587 = vunpack.c.h.b16 %v413
        %v1588 = vunpack.c.l.b16 %v414
        %v1589 = vunpack.c.h.b16 %v414
        %v1590 = vunpack.c.l.b16 %v415
        %v1591 = vunpack.c.h.b16 %v415
        %v1592 = vunpack.c.l.b16 %v416
        %v1593 = vunpack.c.h.b16 %v416
        %v1594 = vunpack.c.l.b16 %v417
        %v1595 = vunpack.c.h.b16 %v417
        %v1596 = vunpack.c.l.b16 %v418
        %v1597 = vunpack.c.h.b16 %v418
        %v1598 = vunpack.c.l.b16 %v419
        %v1599 = vunpack.c.h.b16 %v419
        %v1600 = vunpack.c.l.b16 %v420
        %v1601 = vunpack.c.h.b16 %v420
        %v1602 = vunpack.c.l.b16 %v421
        %v1603 = vunpack.c.h.b16 %v421
        %v1604 = vunpack.c.l.b16 %v422
        %v1605 = vunpack.c.h.b16 %v422
        %v1606 = vunpack.c.l.b16 %v423
        %v1607 = vunpack.c.h.b16 %v423
        %v1608 = vunpack.c.l.b16 %v424
        %v1609 = vunpack.c.h.b16 %v424
        %v1610 = vunpack.c.l.b16 %v425
        %v1611 = vunpack.c.h.b16 %v425
        %v1612 = vunpack.c.l.b16 %v426
        %v1613 = vunpack.c.h.b16 %v426
        %v1614 = vunpack.c.l.b16 %v427
        %v1615 = vunpack.c.h.b16 %v427
        %v1616 = vunpack.c.l.b16 %v428
        %v1617 = vunpack.c.h.b16 %v428
        %v1618 = vunpack.c.l.b16 %v429
        %v1619 = vunpack.c.h.b16 %v429
        %v1620 = vunpack.c.l.b16 %v430
        %v1621 = vunpack.c.h.b16 %v430
        %v1622 = vunpack.c.l.b16 %v431
        %v1623 = vunpack.c.h.b16 %v431
        %v1624 = vunpack.c.l.b16 %v432
        %v1625 = vunpack.c.h.b16 %v432
        %v1626 = vunpack.c.l.b16 %v433
        %v1627 = vunpack.c.h.b16 %v433
        %v1628 = vunpack.c.l.b16 %v434
        %v1629 = vunpack.c.h.b16 %v434
        %v1630 = vunpack.c.l.b16 %v435
        %v1631 = vunpack.c.h.b16 %v435
        %v1632 = vunpack.c.l.b16 %v436
        %v1633 = vunpack.c.h.b16 %v436
        %v1634 = vunpack.c.l.b16 %v437
        %v1635 = vunpack.c.h.b16 %v437
        %v1636 = vunpack.c.l.b16 %v438
        %v1637 = vunpack.c.h.b16 %v438
        %v1638 = vunpack.c.l.b16 %v439
        %v1639 = vunpack.c.h.b16 %v439
        %v1640 = vunpack.c.l.b16 %v440
        %v1641 = vunpack.c.h.b16 %v440
        %v1642 = vunpack.c.l.b16 %v441
        %v1643 = vunpack.c.h.b16 %v441
        %v1644 = vunpack.c.l.b16 %v442
        %v1645 = vunpack.c.h.b16 %v442
        %v1646 = vunpack.c.l.b16 %v443
        %v1647 = vunpack.c.h.b16 %v443
        %v1648 = vunpack.c.l.b16 %v444
        %v1649 = vunpack.c.h.b16 %v444
        %v1650 = vunpack.c.l.b16 %v445
        %v1651 = vunpack.c.h.b16 %v445
        %v1652 = vunpack.c.l.b16 %v446
        %v1653 = vunpack.c.h.b16 %v446
        %v1654 = vunpack.c.l.b16 %v447
        %v1655 = vunpack.c.h.b16 %v447
        %v1656 = vunpack.c.l.b16 %v448
        %v1657 = vunpack.c.h.b16 %v448
        %v1658 = vunpack.c.l.b16 %v449
        %v1659 = vunpack.c.h.b16 %v449
        %v1660 = vunpack.c.l.b16 %v450
        %v1661 = vunpack.c.h.b16 %v450
        %v1662 = vunpack.c.l.b16 %v451
        %v1663 = vunpack.c.h.b16 %v451
        %v1664 = vunpack.c.l.b16 %v452
        %v1665 = vunpack.c.h.b16 %v452
        %v1666 = vunpack.c.l.b16 %v453
        %v1667 = vunpack.c.h.b16 %v453
        %v1668 = vunpack.c.l.b16 %v454
        %v1669 = vunpack.c.h.b16 %v454
        %v1670 = vunpack.c.l.b16 %v455
        %v1671 = vunpack.c.h.b16 %v455
        %v1672 = vunpack.c.l.b16 %v456
        %v1673 = vunpack.c.h.b16 %v456
        %v1674 = vunpack.c.l.b16 %v457
        %v1675 = vunpack.c.h.b16 %v457
        %v1676 = vunpack.c.l.b16 %v458
        %v1677 = vunpack.c.h.b16 %v458
        %v1678 = vunpack.c.l.b16 %v459
        %v1679 = vunpack.c.h.b16 %v459
        %v1680 = vunpack.c.l.b16 %v460
        %v1681 = vunpack.c.h.b16 %v460
        %v1682 = vunpack.c.l.b16 %v461
        %v1683 = vunpack.c.h.b16 %v461
        %v1684 = vunpack.c.l.b16 %v462
        %v1685 = vunpack.c.h.b16 %v462
        %v1686 = vunpack.c.l.b16 %v463
        %v1687 = vunpack.c.h.b16 %v463
        %v1688 = vunpack.c.l.b16 %v464
        %v1689 = vunpack.c.h.b16 %v464
        %v1690 = vunpack.c.l.b16 %v465
        %v1691 = vunpack.c.h.b16 %v465
        %v1692 = vunpack.c.l.b16 %v466
        %v1693 = vunpack.c.h.b16 %v466
        %v1694 = vunpack.c.l.b16 %v467
        %v1695 = vunpack.c.h.b16 %v467
        %v1696 = vunpack.c.l.b16 %v468
        %v1697 = vunpack.c.h.b16 %v468
        %v1698 = vunpack.c.l.b16 %v469
        %v1699 = vunpack.c.h.b16 %v469
        %v1700 = vunpack.c.l.b16 %v470
        %v1701 = vunpack.c.h.b16 %v470
        %v1702 = vunpack.c.l.b16 %v471
        %v1703 = vunpack.c.h.b16 %v471
        %v1704 = vunpack.c.l.b16 %v472
        %v1705 = vunpack.c.h.b16 %v472
        %v1706 = vunpack.c.l.b16 %v473
        %v1707 = vunpack.c.h.b16 %v473
        %v1708 = vunpack.c.l.b16 %v474
        %v1709 = vunpack.c.h.b16 %v474
        %v1710 = vunpack.c.l.b16 %v475
        %v1711 = vunpack.c.h.b16 %v475
        %v1712 = vunpack.c.l.b16 %v476
        %v1713 = vunpack.c.h.b16 %v476
        %v1714 = vunpack.c.l.b16 %v477
        %v1715 = vunpack.c.h.b16 %v477
        %v1716 = vunpack.c.l.b16 %v478
        %v1717 = vunpack.c.h.b16 %v478
        %v1718 = vunpack.c.l.b16 %v479
        %v1719 = vunpack.c.h.b16 %v479
        %v1720 = vunpack.c.l.b16 %v480
        %v1721 = vunpack.c.h.b16 %v480
        %v1722 = vunpack.c.l.b16 %v481
        %v1723 = vunpack.c.h.b16 %v481
        %v1724 = vunpack.c.l.b16 %v482
        %v1725 = vunpack.c.h.b16 %v482
        %v1726 = vunpack.c.l.b16 %v483
        %v1727 = vunpack.c.h.b16 %v483
        %v1728 = vunpack.c.l.b16 %v484
        %v1729 = vunpack.c.h.b16 %v484
        %v1730 = vunpack.c.l.b16 %v485
        %v1731 = vunpack.c.h.b16 %v485
        %v1732 = vunpack.c.l.b16 %v486
        %v1733 = vunpack.c.h.b16 %v486
        %v1734 = vunpack.c.l.b16 %v487
        %v1735 = vunpack.c.h.b16 %v487
        %v1736 = vunpack.c.l.b16 %v488
        %v1737 = vunpack.c.h.b16 %v488
        %v1738 = vunpack.c.l.b16 %v489
        %v1739 = vunpack.c.h.b16 %v489
        %v1740 = vunpack.c.l.b16 %v490
        %v1741 = vunpack.c.h.b16 %v490
        %v1742 = vunpack.c.l.b16 %v491
        %v1743 = vunpack.c.h.b16 %v491
        %v1744 = vunpack.c.l.b16 %v492
        %v1745 = vunpack.c.h.b16 %v492
        %v1746 = vunpack.c.l.b16 %v493
        %v1747 = vunpack.c.h.b16 %v493
        %v1748 = vunpack.c.l.b16 %v494
        %v1749 = vunpack.c.h.b16 %v494
        %v1750 = vunpack.c.l.b16 %v495
        %v1751 = vunpack.c.h.b16 %v495
        %v1752 = vunpack.c.l.b16 %v496
        %v1753 = vunpack.c.h.b16 %v496
        %v1754 = vunpack.c.l.b16 %v497
        %v1755 = vunpack.c.h.b16 %v497
        %v1756 = vunpack.c.l.b16 %v498
        %v1757 = vunpack.c.h.b16 %v498
        %v1758 = vunpack.c.l.b16 %v499
        %v1759 = vunpack.c.h.b16 %v499
        %v1760 = vunpack.c.l.b16 %v500
        %v1761 = vunpack.c.h.b16 %v500
        %v1762 = vunpack.c.l.b16 %v501
        %v1763 = vunpack.c.h.b16 %v501
        %v1764 = vunpack.c.l.b16 %v502
        %v1765 = vunpack.c.h.b16 %v502
        %v1766 = vunpack.c.l.b16 %v503
        %v1767 = vunpack.c.h.b16 %v503
        %v1768 = vunpack.c.l.b16 %v504
        %v1769 = vunpack.c.h.b16 %v504
        %v1770 = vunpack.c.l.b16 %v505
        %v1771 = vunpack.c.h.b16 %v505
        %v1772 = vunpack.c.l.b16 %v506
        %v1773 = vunpack.c.h.b16 %v506
        %v1774 = vunpack.c.l.b16 %v507
        %v1775 = vunpack.c.h.b16 %v507
        %v1776 = vunpack.c.l.b16 %v508
        %v1777 = vunpack.c.h.b16 %v508
        %v1778 = vunpack.c.l.b16 %v509
        %v1779 = vunpack.c.h.b16 %v509
        %v1780 = vunpack.c.l.b16 %v510
        %v1781 = vunpack.c.h.b16 %v510
        %v1782 = vunpack.c.l.b16 %v511
        %v1783 = vunpack.c.h.b16 %v511
        %v1784 = vunpack.c.l.b16 %v512
        %v1785 = vunpack.c.h.b16 %v512
        %v1786 = vunpack.c.l.b16 %v513
        %v1787 = vunpack.c.h.b16 %v513
        %v1788 = vunpack.c.l.b16 %v514
        %v1789 = vunpack.c.h.b16 %v514
        %v1790 = vunpack.c.l.b16 %v515
        %v1791 = vunpack.c.h.b16 %v515
        %v1792 = vunpack.c.l.b16 %v516
        %v1793 = vunpack.c.h.b16 %v516
        %v1794 = vunpack.c.l.b16 %v517
        %v1795 = vunpack.c.h.b16 %v517
        %v1796 = vunpack.c.l.b16 %v518
        %v1797 = vunpack.c.h.b16 %v518
        %v1798 = vunpack.c.l.b16 %v519
        %v1799 = vunpack.c.h.b16 %v519
        %v1800 = vunpack.c.l.b16 %v520
        %v1801 = vunpack.c.h.b16 %v520
        %v1802 = vunpack.c.l.b16 %v521
        %v1803 = vunpack.c.h.b16 %v521
        %v1804 = vunpack.c.l.b16 %v522
        %v1805 = vunpack.c.h.b16 %v522
        %v1806 = vunpack.c.l.b16 %v523
        %v1807 = vunpack.c.h.b16 %v523
        %v1808 = vunpack.c.l.b16 %v524
        %v1809 = vunpack.c.h.b16 %v524
        %v1810 = vunpack.c.l.b16 %v525
        %v1811 = vunpack.c.h.b16 %v525
        %v1812 = vunpack.c.l.b16 %v526
        %v1813 = vunpack.c.h.b16 %v526
        %v1814 = vunpack.c.l.b16 %v527
        %v1815 = vunpack.c.h.b16 %v527
        %v1816 = vunpack.c.l.b16 %v528
        %v1817 = vunpack.c.h.b16 %v528
        %v1818 = vunpack.c.l.b16 %v529
        %v1819 = vunpack.c.h.b16 %v529
        %v1820 = vunpack.c.l.b16 %v530
        %v1821 = vunpack.c.h.b16 %v530
        %v1822 = vunpack.c.l.b16 %v531
        %v1823 = vunpack.c.h.b16 %v531
        %v1824 = vunpack.c.l.b16 %v532
        %v1825 = vunpack.c.h.b16 %v532
        %v1826 = vunpack.c.l.b16 %v533
        %v1827 = vunpack.c.h.b16 %v533
        %v1828 = vunpack.c.l.b16 %v534
        %v1829 = vunpack.c.h.b16 %v534
        %v1830 = vunpack.c.l.b16 %v535
        %v1831 = vunpack.c.h.b16 %v535
        %v1832 = vunpack.c.l.b16 %v536
        %v1833 = vunpack.c.h.b16 %v536
        %v1834 = vunpack.c.l.b16 %v537
        %v1835 = vunpack.c.h.b16 %v537
        %v1836 = vunpack.c.l.b16 %v538
        %v1837 = vunpack.c.h.b16 %v538
        %v1838 = vunpack.c.l.b16 %v539
        %v1839 = vunpack.c.h.b16 %v539
        %v1840 = vunpack.c.l.b16 %v540
        %v1841 = vunpack.c.h.b16 %v540
        %v1842 = vunpack.c.l.b16 %v541
        %v1843 = vunpack.c.h.b16 %v541
        %v1844 = vunpack.c.l.b16 %v542
        %v1845 = vunpack.c.h.b16 %v542
        %v1846 = vunpack.c.l.b16 %v543
        %v1847 = vunpack.c.h.b16 %v543
        %v1848 = vunpack.c.l.b16 %v544
        %v1849 = vunpack.c.h.b16 %v544
        %v1850 = vunpack.c.l.b16 %v545
        %v1851 = vunpack.c.h.b16 %v545
        %v1852 = vunpack.c.l.b16 %v546
        %v1853 = vunpack.c.h.b16 %v546
        %v1854 = vunpack.c.l.b16 %v547
        %v1855 = vunpack.c.h.b16 %v547
        %v1856 = vunpack.c.l.b16 %v548
        %v1857 = vunpack.c.h.b16 %v548
        %v1858 = vunpack.c.l.b16 %v549
        %v1859 = vunpack.c.h.b16 %v549
        %v1860 = vunpack.c.l.b16 %v550
        %v1861 = vunpack.c.h.b16 %v550
        %v1862 = vunpack.c.l.b16 %v551
        %v1863 = vunpack.c.h.b16 %v551
        %v1864 = vunpack.c.l.b16 %v552
        %v1865 = vunpack.c.h.b16 %v552
        %v1866 = vunpack.c.l.b16 %v553
        %v1867 = vunpack.c.h.b16 %v553
        %v1868 = vunpack.c.l.b16 %v554
        %v1869 = vunpack.c.h.b16 %v554
        %v1870 = vunpack.c.l.b16 %v555
        %v1871 = vunpack.c.h.b16 %v555
        %v1872 = vunpack.c.l.b16 %v556
        %v1873 = vunpack.c.h.b16 %v556
        %v1874 = vunpack.c.l.b16 %v557
        %v1875 = vunpack.c.h.b16 %v557
        %v1876 = vunpack.c.l.b16 %v558
        %v1877 = vunpack.c.h.b16 %v558
        %v1878 = vunpack.c.l.b16 %v559
        %v1879 = vunpack.c.h.b16 %v559
        %v1880 = vunpack.c.l.b16 %v560
        %v1881 = vunpack.c.h.b16 %v560
        %v1882 = vunpack.c.l.b16 %v561
        %v1883 = vunpack.c.h.b16 %v561
        %v1884 = vunpack.c.l.b16 %v562
        %v1885 = vunpack.c.h.b16 %v562
        %v1886 = vunpack.c.l.b16 %v563
        %v1887 = vunpack.c.h.b16 %v563
        %v1888 = vunpack.c.l.b16 %v564
        %v1889 = vunpack.c.h.b16 %v564
        %v1890 = vunpack.c.l.b16 %v565
        %v1891 = vunpack.c.h.b16 %v565
        %v1892 = vunpack.c.l.b16 %v566
        %v1893 = vunpack.c.h.b16 %v566
        %v1894 = vunpack.c.l.b16 %v567
        %v1895 = vunpack.c.h.b16 %v567
        %v1896 = vunpack.c.l.b16 %v568
        %v1897 = vunpack.c.h.b16 %v568
        %v1898 = vunpack.c.l.b16 %v569
        %v1899 = vunpack.c.h.b16 %v569
        %v1900 = vunpack.c.l.b16 %v570
        %v1901 = vunpack.c.h.b16 %v570
        %v1902 = vunpack.c.l.b16 %v571
        %v1903 = vunpack.c.h.b16 %v571
        %v1904 = vunpack.c.l.b16 %v572
        %v1905 = vunpack.c.h.b16 %v572
        %v1906 = vunpack.c.l.b16 %v573
        %v1907 = vunpack.c.h.b16 %v573
        %v1908 = vunpack.c.l.b16 %v574
        %v1909 = vunpack.c.h.b16 %v574
        %v1910 = vunpack.c.l.b16 %v575
        %v1911 = vunpack.c.h.b16 %v575
        %v1912 = vunpack.c.l.b16 %v576
        %v1913 = vunpack.c.h.b16 %v576
        %v1914 = vunpack.c.l.b16 %v577
        %v1915 = vunpack.c.h.b16 %v577
        %v1916 = vunpack.c.l.b16 %v578
        %v1917 = vunpack.c.h.b16 %v578
        %v1918 = vunpack.c.l.b16 %v579
        %v1919 = vunpack.c.h.b16 %v579
        %v1920 = vunpack.c.l.b16 %v580
        %v1921 = vunpack.c.h.b16 %v580
        %v1922 = vunpack.c.l.b16 %v581
        %v1923 = vunpack.c.h.b16 %v581
        %v1924 = vunpack.c.l.b16 %v582
        %v1925 = vunpack.c.h.b16 %v582
        %v1926 = vunpack.c.l.b16 %v583
        %v1927 = vunpack.c.h.b16 %v583
        %v1928 = vunpack.c.l.b16 %v584
        %v1929 = vunpack.c.h.b16 %v584
        %v1930 = vunpack.c.l.b16 %v585
        %v1931 = vunpack.c.h.b16 %v585
        %v1932 = vunpack.c.l.b16 %v586
        %v1933 = vunpack.c.h.b16 %v586
        %v1934 = vunpack.c.l.b16 %v587
        %v1935 = vunpack.c.h.b16 %v587
        %v1936 = vunpack.c.l.b16 %v588
        %v1937 = vunpack.c.h.b16 %v588
        %v1938 = vunpack.c.l.b16 %v589
        %v1939 = vunpack.c.h.b16 %v589
        %v1940 = vunpack.c.l.b16 %v590
        %v1941 = vunpack.c.h.b16 %v590
        %v1942 = vunpack.c.l.b16 %v591
        %v1943 = vunpack.c.h.b16 %v591
        %v1944 = vunpack.c.l.b16 %v592
        %v1945 = vunpack.c.h.b16 %v592
        %v1946 = vunpack.c.l.b16 %v593
        %v1947 = vunpack.c.h.b16 %v593
        %v1948 = vunpack.c.l.b16 %v594
        %v1949 = vunpack.c.h.b16 %v594
        %v1950 = vunpack.c.l.b16 %v595
        %v1951 = vunpack.c.h.b16 %v595
        %v1952 = vunpack.c.l.b16 %v596
        %v1953 = vunpack.c.h.b16 %v596
        %v1954 = vunpack.c.l.b16 %v597
        %v1955 = vunpack.c.h.b16 %v597
        %v1956 = vunpack.c.l.b16 %v598
        %v1957 = vunpack.c.h.b16 %v598
        %v1958 = vunpack.c.l.b16 %v599
        %v1959 = vunpack.c.h.b16 %v599
        %v1960 = vunpack.c.l.b16 %v600
        %v1961 = vunpack.c.h.b16 %v600
        %v1962 = vunpack.c.l.b16 %v601
        %v1963 = vunpack.c.h.b16 %v601
        %v1964 = vunpack.c.l.b16 %v602
        %v1965 = vunpack.c.h.b16 %v602
        %v1966 = vunpack.c.l.b16 %v603
        %v1967 = vunpack.c.h.b16 %v603
        %v1968 = vunpack.c.l.b16 %v604
        %v1969 = vunpack.c.h.b16 %v604
        %v1970 = vunpack.c.l.b16 %v605
        %v1971 = vunpack.c.h.b16 %v605
        %v1972 = vunpack.c.l.b16 %v606
        %v1973 = vunpack.c.h.b16 %v606
        %v1974 = vunpack.c.l.b16 %v607
        %v1975 = vunpack.c.h.b16 %v607
        %v1976 = vunpack.c.l.b16 %v608
        %v1977 = vunpack.c.h.b16 %v608
        %v1978 = vunpack.c.l.b16 %v609
        %v1979 = vunpack.c.h.b16 %v609
        %v1980 = vunpack.c.l.b16 %v610
        %v1981 = vunpack.c.h.b16 %v610
        %v1982 = vunpack.c.l.b16 %v611
        %v1983 = vunpack.c.h.b16 %v611
        %v1984 = vunpack.c.l.b16 %v612
        %v1985 = vunpack.c.h.b16 %v612
        %v1986 = vunpack.c.l.b16 %v613
        %v1987 = vunpack.c.h.b16 %v613
        %v1988 = vunpack.c.l.b16 %v614
        %v1989 = vunpack.c.h.b16 %v614
        %v1990 = vunpack.c.l.b16 %v615
        %v1991 = vunpack.c.h.b16 %v615
        %v1992 = vunpack.c.l.b16 %v616
        %v1993 = vunpack.c.h.b16 %v616
        %v1994 = vunpack.c.l.b16 %v617
        %v1995 = vunpack.c.h.b16 %v617
        %v1996 = vunpack.c.l.b16 %v618
        %v1997 = vunpack.c.h.b16 %v618
        %v1998 = vunpack.c.l.b16 %v619
        %v1999 = vunpack.c.h.b16 %v619
        %v2000 = vunpack.c.l.b16 %v620
        %v2001 = vunpack.c.h.b16 %v620
        %v2002 = vunpack.c.l.b16 %v621
        %v2003 = vunpack.c.h.b16 %v621
        %v2004 = vunpack.c.l.b16 %v622
        %v2005 = vunpack.c.h.b16 %v622
        %v2006 = vunpack.c.l.b16 %v623
        %v2007 = vunpack.c.h.b16 %v623
        %v2008 = vunpack.c.l.b16 %v624
        %v2009 = vunpack.c.h.b16 %v624
        %v2010 = vunpack.c.l.b16 %v625
        %v2011 = vunpack.c.h.b16 %v625
        %v2012 = vunpack.c.l.b16 %v626
        %v2013 = vunpack.c.h.b16 %v626
        %v2014 = vunpack.c.l.b16 %v627
        %v2015 = vunpack.c.h.b16 %v627
        %v2016 = vunpack.c.l.b16 %v628
        %v2017 = vunpack.c.h.b16 %v628
        %v2018 = vunpack.c.l.b16 %v629
        %v2019 = vunpack.c.h.b16 %v629
        %v2020 = vunpack.c.l.b16 %v630
        %v2021 = vunpack.c.h.b16 %v630
        %v2022 = vunpack.c.l.b16 %v631
        %v2023 = vunpack.c.h.b16 %v631
        %v2024 = vunpack.c.l.b16 %v632
        %v2025 = vunpack.c.h.b16 %v632
        %v2026 = vunpack.c.l.b16 %v633
        %v2027 = vunpack.c.h.b16 %v633
        %v2028 = vunpack.c.l.b16 %v634
        %v2029 = vunpack.c.h.b16 %v634
        %v2030 = vunpack.c.l.b16 %v635
        %v2031 = vunpack.c.h.b16 %v635
        %v2032 = vunpack.c.l.b16 %v636
        %v2033 = vunpack.c.h.b16 %v636
        %v2034 = vunpack.c.l.b16 %v637
        %v2035 = vunpack.c.h.b16 %v637
        %v2036 = vunpack.c.l.b16 %v638
        %v2037 = vunpack.c.h.b16 %v638
        %v2038 = vunpack.c.l.b16 %v639
        %v2039 = vunpack.c.h.b16 %v639
        %v2040 = vunpack.c.l.b16 %v640
        %v2041 = vunpack.c.h.b16 %v640
        %v2042 = vunpack.c.l.b16 %v641
        %v2043 = vunpack.c.h.b16 %v641
        %v2044 = vunpack.c.l.b16 %v642
        %v2045 = vunpack.c.h.b16 %v642
        %v2046 = vunpack.c.l.b16 %v643
        %v2047 = vunpack.c.h.b16 %v643
        %v2048 = vunpack.c.l.b16 %v644
        %v2049 = vunpack.c.h.b16 %v644
        %v2050 = vunpack.c.l.b16 %v645
        %v2051 = vunpack.c.h.b16 %v645
        %v2052 = vunpack.c.l.b16 %v646
        %v2053 = vunpack.c.h.b16 %v646
        %v2054 = vunpack.c.l.b16 %v647
        %v2055 = vunpack.c.h.b16 %v647
        %v2056 = vunpack.c.l.b16 %v648
        %v2057 = vunpack.c.h.b16 %v648
        %v2058 = vunpack.c.l.b16 %v649
        %v2059 = vunpack.c.h.b16 %v649
        %v2060 = vunpack.c.l.b16 %v650
        %v2061 = vunpack.c.h.b16 %v650
        %v2062 = vunpack.c.l.b16 %v651
        %v2063 = vunpack.c.h.b16 %v651
        %v2064 = vunpack.c.l.b16 %v652
        %v2065 = vunpack.c.h.b16 %v652
        %v2066 = vunpack.c.l.b16 %v653
        %v2067 = vunpack.c.h.b16 %v653
        %v2068 = vunpack.c.l.b16 %v654
        %v2069 = vunpack.c.h.b16 %v654
        %v2070 = vunpack.c.l.b16 %v655
        %v2071 = vunpack.c.h.b16 %v655
        %v2072 = vunpack.c.l.b16 %v656
        %v2073 = vunpack.c.h.b16 %v656
        %v2074 = vunpack.c.l.b16 %v657
        %v2075 = vunpack.c.h.b16 %v657
        %v2076 = vunpack.c.l.b16 %v658
        %v2077 = vunpack.c.h.b16 %v658
        %v2078 = vunpack.c.l.b16 %v659
        %v2079 = vunpack.c.h.b16 %v659
        %v2080 = vunpack.c.l.b16 %v660
        %v2081 = vunpack.c.h.b16 %v660
        %v2082 = vunpack.c.l.b16 %v661
        %v2083 = vunpack.c.h.b16 %v661
        %v2084 = vunpack.c.l.b16 %v662
        %v2085 = vunpack.c.h.b16 %v662
        %v2086 = vunpack.c.l.b16 %v663
        %v2087 = vunpack.c.h.b16 %v663
        %v2088 = vunpack.c.l.b16 %v664
        %v2089 = vunpack.c.h.b16 %v664
        %v2090 = vunpack.c.l.b16 %v665
        %v2091 = vunpack.c.h.b16 %v665
        %v2092 = vunpack.c.l.b16 %v666
        %v2093 = vunpack.c.h.b16 %v666
        %v2094 = vunpack.c.l.b16 %v667
        %v2095 = vunpack.c.h.b16 %v667
        %v2096 = vunpack.c.l.b16 %v668
        %v2097 = vunpack.c.h.b16 %v668
        %v2098 = vunpack.c.l.b16 %v669
        %v2099 = vunpack.c.h.b16 %v669
        %v2100 = vunpack.c.l.b16 %v670
        %v2101 = vunpack.c.h.b16 %v670
        %v2102 = vunpack.c.l.b16 %v671
        %v2103 = vunpack.c.h.b16 %v671
        %v2104 = vunpack.c.l.b16 %v672
        %v2105 = vunpack.c.h.b16 %v672
        %v2106 = vunpack.c.l.b16 %v673
        %v2107 = vunpack.c.h.b16 %v673
        %v2108 = vunpack.c.l.b16 %v674
        %v2109 = vunpack.c.h.b16 %v674
        %v2110 = vunpack.c.l.b16 %v675
        %v2111 = vunpack.c.h.b16 %v675
        %v2112 = vunpack.c.l.b16 %v676
        %v2113 = vunpack.c.h.b16 %v676
        %v2114 = vunpack.c.l.b16 %v677
        %v2115 = vunpack.c.h.b16 %v677
        %v2116 = vunpack.c.l.b16 %v678
        %v2117 = vunpack.c.h.b16 %v678
        %v2118 = vunpack.c.l.b16 %v679
        %v2119 = vunpack.c.h.b16 %v679
        %v2120 = vunpack.c.l.b16 %v680
        %v2121 = vunpack.c.h.b16 %v680
        %v2122 = vunpack.c.l.b16 %v681
        %v2123 = vunpack.c.h.b16 %v681
        %v2124 = vunpack.c.l.b16 %v682
        %v2125 = vunpack.c.h.b16 %v682
        %v2126 = vunpack.c.l.b16 %v683
        %v2127 = vunpack.c.h.b16 %v683
        %v2128 = vunpack.c.l.b16 %v684
        %v2129 = vunpack.c.h.b16 %v684
        %v2130 = vunpack.c.l.b16 %v685
        %v2131 = vunpack.c.h.b16 %v685
        %v2132 = vunpack.c.l.b16 %v686
        %v2133 = vunpack.c.h.b16 %v686
        %v2134 = vunpack.c.l.b16 %v687
        %v2135 = vunpack.c.h.b16 %v687
        %v2136 = vunpack.c.l.b16 %v688
        %v2137 = vunpack.c.h.b16 %v688
        %v2138 = vunpack.c.l.b16 %v689
        %v2139 = vunpack.c.h.b16 %v689
        %v2140 = vunpack.c.l.b16 %v690
        %v2141 = vunpack.c.h.b16 %v690
        %v2142 = vunpack.c.l.b16 %v691
        %v2143 = vunpack.c.h.b16 %v691
        %v2144 = vunpack.c.l.b16 %v692
        %v2145 = vunpack.c.h.b16 %v692
        %v2146 = vunpack.c.l.b16 %v693
        %v2147 = vunpack.c.h.b16 %v693
        %v2148 = vunpack.c.l.b16 %v694
        %v2149 = vunpack.c.h.b16 %v694
        %v2150 = vunpack.c.l.b16 %v695
        %v2151 = vunpack.c.h.b16 %v695
        %v2152 = vunpack.c.l.b16 %v696
        %v2153 = vunpack.c.h.b16 %v696
        %v2154 = vunpack.c.l.b16 %v697
        %v2155 = vunpack.c.h.b16 %v697
        %v2156 = vunpack.c.l.b16 %v698
        %v2157 = vunpack.c.h.b16 %v698
        %v2158 = vunpack.c.l.b16 %v699
        %v2159 = vunpack.c.h.b16 %v699
        %v2160 = vunpack.c.l.b16 %v700
        %v2161 = vunpack.c.h.b16 %v700
        %v2162 = vunpack.c.l.b16 %v701
        %v2163 = vunpack.c.h.b16 %v701
        %v2164 = vunpack.c.l.b16 %v702
        %v2165 = vunpack.c.h.b16 %v702
        %v2166 = vunpack.c.l.b16 %v703
        %v2167 = vunpack.c.h.b16 %v703
        %v2168 = vunpack.c.l.b16 %v704
        %v2169 = vunpack.c.h.b16 %v704
        %v2170 = vunpack.c.l.b16 %v705
        %v2171 = vunpack.c.h.b16 %v705
        %v2172 = vunpack.c.l.b16 %v706
        %v2173 = vunpack.c.h.b16 %v706
        %v2174 = vunpack.c.l.b16 %v707
        %v2175 = vunpack.c.h.b16 %v707
        %v2176 = vunpack.c.l.b16 %v708
        %v2177 = vunpack.c.h.b16 %v708
        %v2178 = vunpack.c.l.b16 %v709
        %v2179 = vunpack.c.h.b16 %v709
        %v2180 = vunpack.c.l.b16 %v710
        %v2181 = vunpack.c.h.b16 %v710
        %v2182 = vunpack.c.l.b16 %v711
        %v2183 = vunpack.c.h.b16 %v711
        %v2184 = vunpack.c.l.b16 %v712
        %v2185 = vunpack.c.h.b16 %v712
        %v2186 = vunpack.c.l.b16 %v713
        %v2187 = vunpack.c.h.b16 %v713
        %v2188 = vunpack.c.l.b16 %v714
        %v2189 = vunpack.c.h.b16 %v714
        %v2190 = vunpack.c.l.b16 %v715
        %v2191 = vunpack.c.h.b16 %v715
        %v2192 = vunpack.c.l.b16 %v716
        %v2193 = vunpack.c.h.b16 %v716
        %v2194 = vunpack.c.l.b16 %v717
        %v2195 = vunpack.c.h.b16 %v717
        %v2196 = vunpack.c.l.b16 %v718
        %v2197 = vunpack.c.h.b16 %v718
        %v2198 = vunpack.c.l.b16 %v719
        %v2199 = vunpack.c.h.b16 %v719
        %v2200 = vunpack.c.l.b16 %v720
        %v2201 = vunpack.c.h.b16 %v720
        %v2202 = vunpack.c.l.b16 %v721
        %v2203 = vunpack.c.h.b16 %v721
        %v2204 = vunpack.c.l.b16 %v722
        %v2205 = vunpack.c.h.b16 %v722
        %v2206 = vunpack.c.l.b16 %v723
        %v2207 = vunpack.c.h.b16 %v723
        %v2208 = vunpack.c.l.b16 %v724
        %v2209 = vunpack.c.h.b16 %v724
        %v2210 = vunpack.c.l.b16 %v725
        %v2211 = vunpack.c.h.b16 %v725
        %v2212 = vunpack.c.l.b16 %v726
        %v2213 = vunpack.c.h.b16 %v726
        %v2214 = vunpack.c.l.b16 %v727
        %v2215 = vunpack.c.h.b16 %v727
        %v2216 = vunpack.c.l.b16 %v728
        %v2217 = vunpack.c.h.b16 %v728
        %v2218 = vunpack.c.l.b16 %v729
        %v2219 = vunpack.c.h.b16 %v729
        %v2220 = vunpack.c.l.b16 %v730
        %v2221 = vunpack.c.h.b16 %v730
        %v2222 = vunpack.c.l.b16 %v731
        %v2223 = vunpack.c.h.b16 %v731
        %v2224 = vunpack.c.l.b16 %v732
        %v2225 = vunpack.c.h.b16 %v732
        %v2226 = vunpack.c.l.b16 %v733
        %v2227 = vunpack.c.h.b16 %v733
        %v2228 = vunpack.c.l.b16 %v734
        %v2229 = vunpack.c.h.b16 %v734
        %v2230 = vunpack.c.l.b16 %v735
        %v2231 = vunpack.c.h.b16 %v735
        %v2232 = vunpack.c.l.b16 %v736
        %v2233 = vunpack.c.h.b16 %v736
        %v2234 = vunpack.c.l.b16 %v737
        %v2235 = vunpack.c.h.b16 %v737
        %v2236 = vunpack.c.l.b16 %v738
        %v2237 = vunpack.c.h.b16 %v738
        %v2238 = vunpack.c.l.b16 %v739
        %v2239 = vunpack.c.h.b16 %v739
        %v2240 = vunpack.c.l.b16 %v740
        %v2241 = vunpack.c.h.b16 %v740
        %v2242 = vunpack.c.l.b16 %v741
        %v2243 = vunpack.c.h.b16 %v741
        %v2244 = vunpack.c.l.b16 %v742
        %v2245 = vunpack.c.h.b16 %v742
        %v2246 = vunpack.c.l.b16 %v743
        %v2247 = vunpack.c.h.b16 %v743
        %v2248 = vunpack.c.l.b16 %v744
        %v2249 = vunpack.c.h.b16 %v744
        %v2250 = vunpack.c.l.b16 %v745
        %v2251 = vunpack.c.h.b16 %v745
        %v2252 = vunpack.c.l.b16 %v746
        %v2253 = vunpack.c.h.b16 %v746
        %v2254 = vunpack.c.l.b16 %v747
        %v2255 = vunpack.c.h.b16 %v747
        %v2256 = vunpack.c.l.b16 %v748
        %v2257 = vunpack.c.h.b16 %v748
        %v2258 = vunpack.c.l.b16 %v749
        %v2259 = vunpack.c.h.b16 %v749
        %v2260 = vunpack.c.l.b16 %v750
        %v2261 = vunpack.c.h.b16 %v750
        %v2262 = vunpack.c.l.b16 %v751
        %v2263 = vunpack.c.h.b16 %v751
        %v2264 = vunpack.c.l.b16 %v752
        %v2265 = vunpack.c.h.b16 %v752
        %v2266 = vunpack.c.l.b16 %v753
        %v2267 = vunpack.c.h.b16 %v753
        %v2268 = vunpack.c.l.b16 %v754
        %v2269 = vunpack.c.h.b16 %v754
        %v2270 = vunpack.c.l.b16 %v755
        %v2271 = vunpack.c.h.b16 %v755
        %v2272 = vunpack.c.l.b16 %v756
        %v2273 = vunpack.c.h.b16 %v756
        %v2274 = vunpack.c.l.b16 %v757
        %v2275 = vunpack.c.h.b16 %v757
        %v2276 = vunpack.c.l.b16 %v758
        %v2277 = vunpack.c.h.b16 %v758
        %v2278 = vunpack.c.l.b16 %v759
        %v2279 = vunpack.c.h.b16 %v759
        %v2280 = vunpack.c.l.b16 %v760
        %v2281 = vunpack.c.h.b16 %v760
        %v2282 = vunpack.c.l.b16 %v761
        %v2283 = vunpack.c.h.b16 %v761
        %v2284 = vunpack.c.l.b16 %v762
        %v2285 = vunpack.c.h.b16 %v762
        %v2286 = vunpack.c.l.b16 %v763
        %v2287 = vunpack.c.h.b16 %v763
        %v2288 = vunpack.c.l.b16 %v764
        %v2289 = vunpack.c.h.b16 %v764
        %v2290 = vunpack.c.l.b16 %v765
        %v2291 = vunpack.c.h.b16 %v765
        %v2292 = vunpack.c.l.b16 %v766
        %v2293 = vunpack.c.h.b16 %v766
        %v2294 = vpack.c.b16 %v1302, %v1294
        %v2295 = vpack.c.b16 %v1303, %v1295
        %v2296 = vpack.c.b16 %v1304, %v1296
        %v2297 = vpack.c.b16 %v1305, %v1297
        %v2298 = vpack.c.b16 %v1306, %v1298
        %v2299 = vpack.c.b16 %v1307, %v1299
        %v2300 = vpack.c.b16 %v1308, %v1300
        %v2301 = vpack.c.b16 %v1309, %v1301
        %v2302 = vpack.c.b16 %v1318, %v1310
        %v2303 = vpack.c.b16 %v1319, %v1311
        %v2304 = vpack.c.b16 %v1320, %v1312
        %v2305 = vpack.c.b16 %v1321, %v1313
        %v2306 = vpack.c.b16 %v1322, %v1314
        %v2307 = vpack.c.b16 %v1323, %v1315
        %v2308 = vpack.c.b16 %v1324, %v1316
        %v2309 = vpack.c.b16 %v1325, %v1317
        %v2310 = vpack.c.b16 %v1334, %v1326
        %v2311 = vpack.c.b16 %v1335, %v1327
        %v2312 = vpack.c.b16 %v1336, %v1328
        %v2313 = vpack.c.b16 %v1337, %v1329
        %v2314 = vpack.c.b16 %v1338, %v1330
        %v2315 = vpack.c.b16 %v1339, %v1331
        %v2316 = vpack.c.b16 %v1340, %v1332
        %v2317 = vpack.c.b16 %v1341, %v1333
        %v2318 = vpack.c.b16 %v1350, %v1342
        %v2319 = vpack.c.b16 %v1351, %v1343
        %v2320 = vpack.c.b16 %v1352, %v1344
        %v2321 = vpack.c.b16 %v1353, %v1345
        %v2322 = vpack.c.b16 %v1354, %v1346
        %v2323 = vpack.c.b16 %v1355, %v1347
        %v2324 = vpack.c.b16 %v1356, %v1348
        %v2325 = vpack.c.b16 %v1357, %v1349
        %v2326 = vpack.c.b16 %v1366, %v1358
        %v2327 = vpack.c.b16 %v1367, %v1359
        %v2328 = vpack.c.b16 %v1368, %v1360
        %v2329 = vpack.c.b16 %v1369, %v1361
        %v2330 = vpack.c.b16 %v1370, %v1362
        %v2331 = vpack.c.b16 %v1371, %v1363
        %v2332 = vpack.c.b16 %v1372, %v1364
        %v2333 = vpack.c.b16 %v1373, %v1365
        %v2334 = vpack.c.b16 %v1382, %v1374
        %v2335 = vpack.c.b16 %v1383, %v1375
        %v2336 = vpack.c.b16 %v1384, %v1376
        %v2337 = vpack.c.b16 %v1385, %v1377
        %v2338 = vpack.c.b16 %v1386, %v1378
        %v2339 = vpack.c.b16 %v1387, %v1379
        %v2340 = vpack.c.b16 %v1388, %v1380
        %v2341 = vpack.c.b16 %v1389, %v1381
        %v2342 = vpack.c.b16 %v1398, %v1390
        %v2343 = vpack.c.b16 %v1399, %v1391
        %v2344 = vpack.c.b16 %v1400, %v1392
        %v2345 = vpack.c.b16 %v1401, %v1393
        %v2346 = vpack.c.b16 %v1402, %v1394
        %v2347 = vpack.c.b16 %v1403, %v1395
        %v2348 = vpack.c.b16 %v1404, %v1396
        %v2349 = vpack.c.b16 %v1405, %v1397
        %v2350 = vpack.c.b16 %v1414, %v1406
        %v2351 = vpack.c.b16 %v1415, %v1407
        %v2352 = vpack.c.b16 %v1416, %v1408
        %v2353 = vpack.c.b16 %v1417, %v1409
        %v2354 = vpack.c.b16 %v1418, %v1410
        %v2355 = vpack.c.b16 %v1419, %v1411
        %v2356 = vpack.c.b16 %v1420, %v1412
        %v2357 = vpack.c.b16 %v1421, %v1413
        %v2358 = vpack.c.b16 %v1430, %v1422
        %v2359 = vpack.c.b16 %v1431, %v1423
        %v2360 = vpack.c.b16 %v1432, %v1424
        %v2361 = vpack.c.b16 %v1433, %v1425
        %v2362 = vpack.c.b16 %v1434, %v1426
        %v2363 = vpack.c.b16 %v1435, %v1427
        %v2364 = vpack.c.b16 %v1436, %v1428
        %v2365 = vpack.c.b16 %v1437, %v1429
        %v2366 = vpack.c.b16 %v1446, %v1438
        %v2367 = vpack.c.b16 %v1447, %v1439
        %v2368 = vpack.c.b16 %v1448, %v1440
        %v2369 = vpack.c.b16 %v1449, %v1441
        %v2370 = vpack.c.b16 %v1450, %v1442
        %v2371 = vpack.c.b16 %v1451, %v1443
        %v2372 = vpack.c.b16 %v1452, %v1444
        %v2373 = vpack.c.b16 %v1453, %v1445
        %v2374 = vpack.c.b16 %v1462, %v1454
        %v2375 = vpack.c.b16 %v1463, %v1455
        %v2376 = vpack.c.b16 %v1464, %v1456
        %v2377 = vpack.c.b16 %v1465, %v1457
        %v2378 = vpack.c.b16 %v1466, %v1458
        %v2379 = vpack.c.b16 %v1467, %v1459
        %v2380 = vpack.c.b16 %v1468, %v1460
        %v2381 = vpack.c.b16 %v1469, %v1461
        %v2382 = vpack.c.b16 %v1478, %v1470
        %v2383 = vpack.c.b16 %v1479, %v1471
        %v2384 = vpack.c.b16 %v1480, %v1472
        %v2385 = vpack.c.b16 %v1481, %v1473
        %v2386 = vpack.c.b16 %v1482, %v1474
        %v2387 = vpack.c.b16 %v1483, %v1475
        %v2388 = vpack.c.b16 %v1484, %v1476
        %v2389 = vpack.c.b16 %v1485, %v1477
        %v2390 = vpack.c.b16 %v1494, %v1486
        %v2391 = vpack.c.b16 %v1495, %v1487
        %v2392 = vpack.c.b16 %v1496, %v1488
        %v2393 = vpack.c.b16 %v1497, %v1489
        %v2394 = vpack.c.b16 %v1498, %v1490
        %v2395 = vpack.c.b16 %v1499, %v1491
        %v2396 = vpack.c.b16 %v1500, %v1492
        %v2397 = vpack.c.b16 %v1501, %v1493
        %v2398 = vpack.c.b16 %v1510, %v1502
        %v2399 = vpack.c.b16 %v1511, %v1503
        %v2400 = vpack.c.b16 %v1512, %v1504
        %v2401 = vpack.c.b16 %v1513, %v1505
        %v2402 = vpack.c.b16 %v1514, %v1506
        %v2403 = vpack.c.b16 %v1515, %v1507
        %v2404 = vpack.c.b16 %v1516, %v1508
        %v2405 = vpack.c.b16 %v1517, %v1509
        %v2406 = vpack.c.b16 %v1526, %v1518
        %v2407 = vpack.c.b16 %v1527, %v1519
        %v2408 = vpack.c.b16 %v1528, %v1520
        %v2409 = vpack.c.b16 %v1529, %v1521
        %v2410 = vpack.c.b16 %v1530, %v1522
        %v2411 = vpack.c.b16 %v1531, %v1523
        %v2412 = vpack.c.b16 %v1532, %v1524
        %v2413 = vpack.c.b16 %v1533, %v1525
        %v2414 = vpack.c.b16 %v1542, %v1534
        %v2415 = vpack.c.b16 %v1543, %v1535
        %v2416 = vpack.c.b16 %v1544, %v1536
        %v2417 = vpack.c.b16 %v1545, %v1537
        %v2418 = vpack.c.b16 %v1546, %v1538
        %v2419 = vpack.c.b16 %v1547, %v1539
        %v2420 = vpack.c.b16 %v1548, %v1540
        %v2421 = vpack.c.b16 %v1549, %v1541
        %v2422 = vpack.c.b16 %v1558, %v1550
        %v2423 = vpack.c.b16 %v1559, %v1551
        %v2424 = vpack.c.b16 %v1560, %v1552
        %v2425 = vpack.c.b16 %v1561, %v1553
        %v2426 = vpack.c.b16 %v1562, %v1554
        %v2427 = vpack.c.b16 %v1563, %v1555
        %v2428 = vpack.c.b16 %v1564, %v1556
        %v2429 = vpack.c.b16 %v1565, %v1557
        %v2430 = vpack.c.b16 %v1574, %v1566
        %v2431 = vpack.c.b16 %v1575, %v1567
        %v2432 = vpack.c.b16 %v1576, %v1568
        %v2433 = vpack.c.b16 %v1577, %v1569
        %v2434 = vpack.c.b16 %v1578, %v1570
        %v2435 = vpack.c.b16 %v1579, %v1571
        %v2436 = vpack.c.b16 %v1580, %v1572
        %v2437 = vpack.c.b16 %v1581, %v1573
        %v2438 = vpack.c.b16 %v1590, %v1582
        %v2439 = vpack.c.b16 %v1591, %v1583
        %v2440 = vpack.c.b16 %v1592, %v1584
        %v2441 = vpack.c.b16 %v1593, %v1585
        %v2442 = vpack.c.b16 %v1594, %v1586
        %v2443 = vpack.c.b16 %v1595, %v1587
        %v2444 = vpack.c.b16 %v1596, %v1588
        %v2445 = vpack.c.b16 %v1597, %v1589
        %v2446 = vpack.c.b16 %v1606, %v1598
        %v2447 = vpack.c.b16 %v1607, %v1599
        %v2448 = vpack.c.b16 %v1608, %v1600
        %v2449 = vpack.c.b16 %v1609, %v1601
        %v2450 = vpack.c.b16 %v1610, %v1602
        %v2451 = vpack.c.b16 %v1611, %v1603
        %v2452 = vpack.c.b16 %v1612, %v1604
        %v2453 = vpack.c.b16 %v1613, %v1605
        %v2454 = vpack.c.b16 %v1622, %v1614
        %v2455 = vpack.c.b16 %v1623, %v1615
        %v2456 = vpack.c.b16 %v1624, %v1616
        %v2457 = vpack.c.b16 %v1625, %v1617
        %v2458 = vpack.c.b16 %v1626, %v1618
        %v2459 = vpack.c.b16 %v1627, %v1619
        %v2460 = vpack.c.b16 %v1628, %v1620
        %v2461 = vpack.c.b16 %v1629, %v1621
        %v2462 = vpack.c.b16 %v1638, %v1630
        %v2463 = vpack.c.b16 %v1639, %v1631
        %v2464 = vpack.c.b16 %v1640, %v1632
        %v2465 = vpack.c.b16 %v1641, %v1633
        %v2466 = vpack.c.b16 %v1642, %v1634
        %v2467 = vpack.c.b16 %v1643, %v1635
        %v2468 = vpack.c.b16 %v1644, %v1636
        %v2469 = vpack.c.b16 %v1645, %v1637
        %v2470 = vpack.c.b16 %v1654, %v1646
        %v2471 = vpack.c.b16 %v1655, %v1647
        %v2472 = vpack.c.b16 %v1656, %v1648
        %v2473 = vpack.c.b16 %v1657, %v1649
        %v2474 = vpack.c.b16 %v1658, %v1650
        %v2475 = vpack.c.b16 %v1659, %v1651
        %v2476 = vpack.c.b16 %v1660, %v1652
        %v2477 = vpack.c.b16 %v1661, %v1653
        %v2478 = vpack.c.b16 %v1670, %v1662
        %v2479 = vpack.c.b16 %v1671, %v1663
        %v2480 = vpack.c.b16 %v1672, %v1664
        %v2481 = vpack.c.b16 %v1673, %v1665
        %v2482 = vpack.c.b16 %v1674, %v1666
        %v2483 = vpack.c.b16 %v1675, %v1667
        %v2484 = vpack.c.b16 %v1676, %v1668
        %v2485 = vpack.c.b16 %v1677, %v1669
        %v2486 = vpack.c.b16 %v1686, %v1678
        %v2487 = vpack.c.b16 %v1687, %v1679
        %v2488 = vpack.c.b16 %v1688, %v1680
        %v2489 = vpack.c.b16 %v1689, %v1681
        %v2490 = vpack.c.b16 %v1690, %v1682
        %v2491 = vpack.c.b16 %v1691, %v1683
        %v2492 = vpack.c.b16 %v1692, %v1684
        %v2493 = vpack.c.b16 %v1693, %v1685
        %v2494 = vpack.c.b16 %v1702, %v1694
        %v2495 = vpack.c.b16 %v1703, %v1695
        %v2496 = vpack.c.b16 %v1704, %v1696
        %v2497 = vpack.c.b16 %v1705, %v1697
        %v2498 = vpack.c.b16 %v1706, %v1698
        %v2499 = vpack.c.b16 %v1707, %v1699
        %v2500 = vpack.c.b16 %v1708, %v1700
        %v2501 = vpack.c.b16 %v1709, %v1701
        %v2502 = vpack.c.b16 %v1718, %v1710
        %v2503 = vpack.c.b16 %v1719, %v1711
        %v2504 = vpack.c.b16 %v1720, %v1712
        %v2505 = vpack.c.b16 %v1721, %v1713
        %v2506 = vpack.c.b16 %v1722, %v1714
        %v2507 = vpack.c.b16 %v1723, %v1715
        %v2508 = vpack.c.b16 %v1724, %v1716
        %v2509 = vpack.c.b16 %v1725, %v1717
        %v2510 = vpack.c.b16 %v1734, %v1726
        %v2511 = vpack.c.b16 %v1735, %v1727
        %v2512 = vpack.c.b16 %v1736, %v1728
        %v2513 = vpack.c.b16 %v1737, %v1729
        %v2514 = vpack.c.b16 %v1738, %v1730
        %v2515 = vpack.c.b16 %v1739, %v1731
        %v2516 = vpack.c.b16 %v1740, %v1732
        %v2517 = vpack.c.b16 %v1741, %v1733
        %v2518 = vpack.c.b16 %v1750, %v1742
        %v2519 = vpack.c.b16 %v1751, %v1743
        %v2520 = vpack.c.b16 %v1752, %v1744
        %v2521 = vpack.c.b16 %v1753, %v1745
        %v2522 = vpack.c.b16 %v1754, %v1746
        %v2523 = vpack.c.b16 %v1755, %v1747
        %v2524 = vpack.c.b16 %v1756, %v1748
        %v2525 = vpack.c.b16 %v1757, %v1749
        %v2526 = vpack.c.b16 %v1766, %v1758
        %v2527 = vpack.c.b16 %v1767, %v1759
        %v2528 = vpack.c.b16 %v1768, %v1760
        %v2529 = vpack.c.b16 %v1769, %v1761
        %v2530 = vpack.c.b16 %v1770, %v1762
        %v2531 = vpack.c.b16 %v1771, %v1763
        %v2532 = vpack.c.b16 %v1772, %v1764
        %v2533 = vpack.c.b16 %v1773, %v1765
        %v2534 = vpack.c.b16 %v1782, %v1774
        %v2535 = vpack.c.b16 %v1783, %v1775
        %v2536 = vpack.c.b16 %v1784, %v1776
        %v2537 = vpack.c.b16 %v1785, %v1777
        %v2538 = vpack.c.b16 %v1786, %v1778
        %v2539 = vpack.c.b16 %v1787, %v1779
        %v2540 = vpack.c.b16 %v1788, %v1780
        %v2541 = vpack.c.b16 %v1789, %v1781
        %v2542 = vpack.c.b16 %v1798, %v1790
        %v2543 = vpack.c.b16 %v1799, %v1791
        %v2544 = vpack.c.b16 %v1800, %v1792
        %v2545 = vpack.c.b16 %v1801, %v1793
        %v2546 = vpack.c.b16 %v1802, %v1794
        %v2547 = vpack.c.b16 %v1803, %v1795
        %v2548 = vpack.c.b16 %v1804, %v1796
        %v2549 = vpack.c.b16 %v1805, %v1797
        %v2550 = vpack.c.b16 %v1814, %v1806
        %v2551 = vpack.c.b16 %v1815, %v1807
        %v2552 = vpack.c.b16 %v1816, %v1808
        %v2553 = vpack.c.b16 %v1817, %v1809
        %v2554 = vpack.c.b16 %v1818, %v1810
        %v2555 = vpack.c.b16 %v1819, %v1811
        %v2556 = vpack.c.b16 %v1820, %v1812
        %v2557 = vpack.c.b16 %v1821, %v1813
        %v2558 = vpack.c.b16 %v1830, %v1822
        %v2559 = vpack.c.b16 %v1831, %v1823
        %v2560 = vpack.c.b16 %v1832, %v1824
        %v2561 = vpack.c.b16 %v1833, %v1825
        %v2562 = vpack.c.b16 %v1834, %v1826
        %v2563 = vpack.c.b16 %v1835, %v1827
        %v2564 = vpack.c.b16 %v1836, %v1828
        %v2565 = vpack.c.b16 %v1837, %v1829
        %v2566 = vpack.c.b16 %v1846, %v1838
        %v2567 = vpack.c.b16 %v1847, %v1839
        %v2568 = vpack.c.b16 %v1848, %v1840
        %v2569 = vpack.c.b16 %v1849, %v1841
        %v2570 = vpack.c.b16 %v1850, %v1842
        %v2571 = vpack.c.b16 %v1851, %v1843
        %v2572 = vpack.c.b16 %v1852, %v1844
        %v2573 = vpack.c.b16 %v1853, %v1845
        %v2574 = vpack.c.b16 %v1862, %v1854
        %v2575 = vpack.c.b16 %v1863, %v1855
        %v2576 = vpack.c.b16 %v1864, %v1856
        %v2577 = vpack.c.b16 %v1865, %v1857
        %v2578 = vpack.c.b16 %v1866, %v1858
        %v2579 = vpack.c.b16 %v1867, %v1859
        %v2580 = vpack.c.b16 %v1868, %v1860
        %v2581 = vpack.c.b16 %v1869, %v1861
        %v2582 = vpack.c.b16 %v1878, %v1870
        %v2583 = vpack.c.b16 %v1879, %v1871
        %v2584 = vpack.c.b16 %v1880, %v1872
        %v2585 = vpack.c.b16 %v1881, %v1873
        %v2586 = vpack.c.b16 %v1882, %v1874
        %v2587 = vpack.c.b16 %v1883, %v1875
        %v2588 = vpack.c.b16 %v1884, %v1876
        %v2589 = vpack.c.b16 %v1885, %v1877
        %v2590 = vpack.c.b16 %v1894, %v1886
        %v2591 = vpack.c.b16 %v1895, %v1887
        %v2592 = vpack.c.b16 %v1896, %v1888
        %v2593 = vpack.c.b16 %v1897, %v1889
        %v2594 = vpack.c.b16 %v1898, %v1890
        %v2595 = vpack.c.b16 %v1899, %v1891
        %v2596 = vpack.c.b16 %v1900, %v1892
        %v2597 = vpack.c.b16 %v1901, %v1893
        %v2598 = vpack.c.b16 %v1910, %v1902
        %v2599 = vpack.c.b16 %v1911, %v1903
        %v2600 = vpack.c.b16 %v1912, %v1904
        %v2601 = vpack.c.b16 %v1913, %v1905
        %v2602 = vpack.c.b16 %v1914, %v1906
        %v2603 = vpack.c.b16 %v1915, %v1907
        %v2604 = vpack.c.b16 %v1916, %v1908
        %v2605 = vpack.c.b16 %v1917, %v1909
        %v2606 = vpack.c.b16 %v1926, %v1918
        %v2607 = vpack.c.b16 %v1927, %v1919
        %v2608 = vpack.c.b16 %v1928, %v1920
        %v2609 = vpack.c.b16 %v1929, %v1921
        %v2610 = vpack.c.b16 %v1930, %v1922
        %v2611 = vpack.c.b16 %v1931, %v1923
        %v2612 = vpack.c.b16 %v1932, %v1924
        %v2613 = vpack.c.b16 %v1933, %v1925
        %v2614 = vpack.c.b16 %v1942, %v1934
        %v2615 = vpack.c.b16 %v1943, %v1935
        %v2616 = vpack.c.b16 %v1944, %v1936
        %v2617 = vpack.c.b16 %v1945, %v1937
        %v2618 = vpack.c.b16 %v1946, %v1938
        %v2619 = vpack.c.b16 %v1947, %v1939
        %v2620 = vpack.c.b16 %v1948, %v1940
        %v2621 = vpack.c.b16 %v1949, %v1941
        %v2622 = vpack.c.b16 %v1958, %v1950
        %v2623 = vpack.c.b16 %v1959, %v1951
        %v2624 = vpack.c.b16 %v1960, %v1952
        %v2625 = vpack.c.b16 %v1961, %v1953
        %v2626 = vpack.c.b16 %v1962, %v1954
        %v2627 = vpack.c.b16 %v1963, %v1955
        %v2628 = vpack.c.b16 %v1964, %v1956
        %v2629 = vpack.c.b16 %v1965, %v1957
        %v2630 = vpack.c.b16 %v1974, %v1966
        %v2631 = vpack.c.b16 %v1975, %v1967
        %v2632 = vpack.c.b16 %v1976, %v1968
        %v2633 = vpack.c.b16 %v1977, %v1969
        %v2634 = vpack.c.b16 %v1978, %v1970
        %v2635 = vpack.c.b16 %v1979, %v1971
        %v2636 = vpack.c.b16 %v1980, %v1972
        %v2637 = vpack.c.b16 %v1981, %v1973
        %v2638 = vpack.c.b16 %v1990, %v1982
        %v2639 = vpack.c.b16 %v1991, %v1983
        %v2640 = vpack.c.b16 %v1992, %v1984
        %v2641 = vpack.c.b16 %v1993, %v1985
        %v2642 = vpack.c.b16 %v1994, %v1986
        %v2643 = vpack.c.b16 %v1995, %v1987
        %v2644 = vpack.c.b16 %v1996, %v1988
        %v2645 = vpack.c.b16 %v1997, %v1989
        %v2646 = vpack.c.b16 %v2006, %v1998
        %v2647 = vpack.c.b16 %v2007, %v1999
        %v2648 = vpack.c.b16 %v2008, %v2000
        %v2649 = vpack.c.b16 %v2009, %v2001
        %v2650 = vpack.c.b16 %v2010, %v2002
        %v2651 = vpack.c.b16 %v2011, %v2003
        %v2652 = vpack.c.b16 %v2012, %v2004
        %v2653 = vpack.c.b16 %v2013, %v2005
        %v2654 = vpack.c.b16 %v2022, %v2014
        %v2655 = vpack.c.b16 %v2023, %v2015
        %v2656 = vpack.c.b16 %v2024, %v2016
        %v2657 = vpack.c.b16 %v2025, %v2017
        %v2658 = vpack.c.b16 %v2026, %v2018
        %v2659 = vpack.c.b16 %v2027, %v2019
        %v2660 = vpack.c.b16 %v2028, %v2020
        %v2661 = vpack.c.b16 %v2029, %v2021
        %v2662 = vpack.c.b16 %v2038, %v2030
        %v2663 = vpack.c.b16 %v2039, %v2031
        %v2664 = vpack.c.b16 %v2040, %v2032
        %v2665 = vpack.c.b16 %v2041, %v2033
        %v2666 = vpack.c.b16 %v2042, %v2034
        %v2667 = vpack.c.b16 %v2043, %v2035
        %v2668 = vpack.c.b16 %v2044, %v2036
        %v2669 = vpack.c.b16 %v2045, %v2037
        %v2670 = vpack.c.b16 %v2054, %v2046
        %v2671 = vpack.c.b16 %v2055, %v2047
        %v2672 = vpack.c.b16 %v2056, %v2048
        %v2673 = vpack.c.b16 %v2057, %v2049
        %v2674 = vpack.c.b16 %v2058, %v2050
        %v2675 = vpack.c.b16 %v2059, %v2051
        %v2676 = vpack.c.b16 %v2060, %v2052
        %v2677 = vpack.c.b16 %v2061, %v2053
        %v2678 = vpack.c.b16 %v2070, %v2062
        %v2679 = vpack.c.b16 %v2071, %v2063
        %v2680 = vpack.c.b16 %v2072, %v2064
        %v2681 = vpack.c.b16 %v2073, %v2065
        %v2682 = vpack.c.b16 %v2074, %v2066
        %v2683 = vpack.c.b16 %v2075, %v2067
        %v2684 = vpack.c.b16 %v2076, %v2068
        %v2685 = vpack.c.b16 %v2077, %v2069
        %v2686 = vpack.c.b16 %v2086, %v2078
        %v2687 = vpack.c.b16 %v2087, %v2079
        %v2688 = vpack.c.b16 %v2088, %v2080
        %v2689 = vpack.c.b16 %v2089, %v2081
        %v2690 = vpack.c.b16 %v2090, %v2082
        %v2691 = vpack.c.b16 %v2091, %v2083
        %v2692 = vpack.c.b16 %v2092, %v2084
        %v2693 = vpack.c.b16 %v2093, %v2085
        %v2694 = vpack.c.b16 %v2102, %v2094
        %v2695 = vpack.c.b16 %v2103, %v2095
        %v2696 = vpack.c.b16 %v2104, %v2096
        %v2697 = vpack.c.b16 %v2105, %v2097
        %v2698 = vpack.c.b16 %v2106, %v2098
        %v2699 = vpack.c.b16 %v2107, %v2099
        %v2700 = vpack.c.b16 %v2108, %v2100
        %v2701 = vpack.c.b16 %v2109, %v2101
        %v2702 = vpack.c.b16 %v2118, %v2110
        %v2703 = vpack.c.b16 %v2119, %v2111
        %v2704 = vpack.c.b16 %v2120, %v2112
        %v2705 = vpack.c.b16 %v2121, %v2113
        %v2706 = vpack.c.b16 %v2122, %v2114
        %v2707 = vpack.c.b16 %v2123, %v2115
        %v2708 = vpack.c.b16 %v2124, %v2116
        %v2709 = vpack.c.b16 %v2125, %v2117
        %v2710 = vpack.c.b16 %v2134, %v2126
        %v2711 = vpack.c.b16 %v2135, %v2127
        %v2712 = vpack.c.b16 %v2136, %v2128
        %v2713 = vpack.c.b16 %v2137, %v2129
        %v2714 = vpack.c.b16 %v2138, %v2130
        %v2715 = vpack.c.b16 %v2139, %v2131
        %v2716 = vpack.c.b16 %v2140, %v2132
        %v2717 = vpack.c.b16 %v2141, %v2133
        %v2718 = vpack.c.b16 %v2150, %v2142
        %v2719 = vpack.c.b16 %v2151, %v2143
        %v2720 = vpack.c.b16 %v2152, %v2144
        %v2721 = vpack.c.b16 %v2153, %v2145
        %v2722 = vpack.c.b16 %v2154, %v2146
        %v2723 = vpack.c.b16 %v2155, %v2147
        %v2724 = vpack.c.b16 %v2156, %v2148
        %v2725 = vpack.c.b16 %v2157, %v2149
        %v2726 = vpack.c.b16 %v2166, %v2158
        %v2727 = vpack.c.b16 %v2167, %v2159
        %v2728 = vpack.c.b16 %v2168, %v2160
        %v2729 = vpack.c.b16 %v2169, %v2161
        %v2730 = vpack.c.b16 %v2170, %v2162
        %v2731 = vpack.c.b16 %v2171, %v2163
        %v2732 = vpack.c.b16 %v2172, %v2164
        %v2733 = vpack.c.b16 %v2173, %v2165
        %v2734 = vpack.c.b16 %v2182, %v2174
        %v2735 = vpack.c.b16 %v2183, %v2175
        %v2736 = vpack.c.b16 %v2184, %v2176
        %v2737 = vpack.c.b16 %v2185, %v2177
        %v2738 = vpack.c.b16 %v2186, %v2178
        %v2739 = vpack.c.b16 %v2187, %v2179
        %v2740 = vpack.c.b16 %v2188, %v2180
        %v2741 = vpack.c.b16 %v2189, %v2181
        %v2742 = vpack.c.b16 %v2198, %v2190
        %v2743 = vpack.c.b16 %v2199, %v2191
        %v2744 = vpack.c.b16 %v2200, %v2192
        %v2745 = vpack.c.b16 %v2201, %v2193
        %v2746 = vpack.c.b16 %v2202, %v2194
        %v2747 = vpack.c.b16 %v2203, %v2195
        %v2748 = vpack.c.b16 %v2204, %v2196
        %v2749 = vpack.c.b16 %v2205, %v2197
        %v2750 = vpack.c.b16 %v2214, %v2206
        %v2751 = vpack.c.b16 %v2215, %v2207
        %v2752 = vpack.c.b16 %v2216, %v2208
        %v2753 = vpack.c.b16 %v2217, %v2209
        %v2754 = vpack.c.b16 %v2218, %v2210
        %v2755 = vpack.c.b16 %v2219, %v2211
        %v2756 = vpack.c.b16 %v2220, %v2212
        %v2757 = vpack.c.b16 %v2221, %v2213
        %v2758 = vpack.c.b16 %v2230, %v2222
        %v2759 = vpack.c.b16 %v2231, %v2223
        %v2760 = vpack.c.b16 %v2232, %v2224
        %v2761 = vpack.c.b16 %v2233, %v2225
        %v2762 = vpack.c.b16 %v2234, %v2226
        %v2763 = vpack.c.b16 %v2235, %v2227
        %v2764 = vpack.c.b16 %v2236, %v2228
        %v2765 = vpack.c.b16 %v2237, %v2229
        %v2766 = vpack.c.b16 %v2246, %v2238
        %v2767 = vpack.c.b16 %v2247, %v2239
        %v2768 = vpack.c.b16 %v2248, %v2240
        %v2769 = vpack.c.b16 %v2249, %v2241
        %v2770 = vpack.c.b16 %v2250, %v2242
        %v2771 = vpack.c.b16 %v2251, %v2243
        %v2772 = vpack.c.b16 %v2252, %v2244
        %v2773 = vpack.c.b16 %v2253, %v2245
        %v2774 = vpack.c.b16 %v2262, %v2254
        %v2775 = vpack.c.b16 %v2263, %v2255
        %v2776 = vpack.c.b16 %v2264, %v2256
        %v2777 = vpack.c.b16 %v2265, %v2257
        %v2778 = vpack.c.b16 %v2266, %v2258
        %v2779 = vpack.c.b16 %v2267, %v2259
        %v2780 = vpack.c.b16 %v2268, %v2260
        %v2781 = vpack.c.b16 %v2269, %v2261
        %v2782 = vpack.c.b16 %v2278, %v2270
        %v2783 = vpack.c.b16 %v2279, %v2271
        %v2784 = vpack.c.b16 %v2280, %v2272
        %v2785 = vpack.c.b16 %v2281, %v2273
        %v2786 = vpack.c.b16 %v2282, %v2274
        %v2787 = vpack.c.b16 %v2283, %v2275
        %v2788 = vpack.c.b16 %v2284, %v2276
        %v2789 = vpack.c.b16 %v2285, %v2277
        %v2790 = vpack.c.b16 %v2286, %v2286
        %v2791 = vpack.c.b16 %v2287, %v2287
        %v2792 = vpack.c.b16 %v2288, %v2288
        %v2793 = vpack.c.b16 %v2289, %v2289
        %v2794 = vpack.c.b16 %v2290, %v2290
        %v2795 = vpack.c.b16 %v2291, %v2291
        %v2796 = vpack.c.b16 %v2292, %v2292
        %v2797 = vpack.c.b16 %v2293, %v2293
        %vm3294 = vcmask 850944
        %v3296 = vsel %vm3294, %v786, 0
        %vm3298 = vcmask 1043456
        %v3300 = vsel %vm3298, %v2790, 0
        %v3303 = vsel %vm3298, %v2791, 0
        %v3306 = vsel %vm3298, %v2792, 0
        %v3309 = vsel %vm3298, %v2793, 0
        %v3312 = vsel %vm3298, %v2794, 0
        %v3315 = vsel %vm3298, %v2795, 0
        %v3318 = vsel %vm3298, %v2796, 0
        %v3321 = vsel %vm3298, %v2797, 0
        %3323 = vmatprep.subr.bf16.mxu0 %v2351
        %3324 = vmatpush1.bf16.msra.mxu0 %v2350
        %3325 = vmatprep.subr.bf16.mxu0 %v2343
        %3326 = vmatpush1.bf16.msra.mxu0 %v2342
        %3327 = vmatprep.subr.bf16.mxu0 %v2335
        %3328 = vmatpush1.bf16.msra.mxu0 %v2334
        %3329 = vmatprep.subr.bf16.mxu0 %v2327
        %3330 = vmatpush1.bf16.msra.mxu0 %v2326
        %3331 = vmatprep.subr.bf16.mxu0 %v2319
        %3332 = vmatpush1.bf16.msra.mxu0 %v2318
        %3333 = vmatprep.subr.bf16.mxu0 %v2311
        %3334 = vmatpush1.bf16.msra.mxu0 %v2310
        %3335 = vmatprep.subr.bf16.mxu0 %v2303
        %3336 = vmatpush1.bf16.msra.mxu0 %v2302
        %3337 = vmatprep.subr.bf16.mxu0 %v2295
        %3338 = vmatpush1.bf16.msra.mxu0 %v2294
        %3339 = vmatprep.subr.bf16.mxu0 %v2415
        %3340 = vmatpush2.bf16.msra.mxu0 %v2414
        %3341 = vmatprep.subr.bf16.mxu0 %v2407
        %3342 = vmatpush2.bf16.msra.mxu0 %v2406
        %3343 = vmatprep.subr.bf16.mxu0 %v2399
        %3344 = vmatpush2.bf16.msra.mxu0 %v2398
        %3345 = vmatprep.subr.bf16.mxu0 %v2391
        %3346 = vmatpush2.bf16.msra.mxu0 %v2390
        %3347 = vmatprep.subr.bf16.mxu0 %v2383
        %3348 = vmatpush2.bf16.msra.mxu0 %v2382
        %3349 = vmatprep.subr.bf16.mxu0 %v2375
        %3350 = vmatpush2.bf16.msra.mxu0 %v2374
        %3351 = vmatprep.subr.bf16.mxu0 %v2367
        %3352 = vmatpush2.bf16.msra.mxu0 %v2366
        %3353 = vmatprep.subr.bf16.mxu0 %v2359
        %3354 = vmatpush2.bf16.msra.mxu0 %v2358
        %3355 = vmatprep.mubr.bf16.mxu0 %v780
        %3356 = vmatmul.mubr.bf16.gmra.mxu0 %v779
        %v3357 = vpop.f32.mrf.mxu0
        %v3358 = vadd.f32 0.0, %v3357
        %v3359 = vpop.f32.mrf.mxu0
        %v3360 = vadd.f32 0.0, %v3359
        %v3361 = vpop.f32.mrf.mxu0
        %v3362 = vpop.f32.mrf.mxu0
        %3363 = vdwg.mxu0
        %3364 = vmatprep.subr.bf16.mxu0 %v2479
        %3365 = vmatpush1.bf16.msra.mxu0 %v2478
        %3366 = vmatprep.subr.bf16.mxu0 %v2471
        %3367 = vmatpush1.bf16.msra.mxu0 %v2470
        %3368 = vmatprep.subr.bf16.mxu0 %v2463
        %3369 = vmatpush1.bf16.msra.mxu0 %v2462
        %3370 = vmatprep.subr.bf16.mxu0 %v2455
        %3371 = vmatpush1.bf16.msra.mxu0 %v2454
        %3372 = vmatprep.subr.bf16.mxu0 %v2447
        %3373 = vmatpush1.bf16.msra.mxu0 %v2446
        %3374 = vmatprep.subr.bf16.mxu0 %v2439
        %3375 = vmatpush1.bf16.msra.mxu0 %v2438
        %3376 = vmatprep.subr.bf16.mxu0 %v2431
        %3377 = vmatpush1.bf16.msra.mxu0 %v2430
        %3378 = vmatprep.subr.bf16.mxu0 %v2423
        %3379 = vmatpush1.bf16.msra.mxu0 %v2422
        %3380 = vmatprep.subr.bf16.mxu0 %v2543
        %3381 = vmatpush2.bf16.msra.mxu0 %v2542
        %3382 = vmatprep.subr.bf16.mxu0 %v2535
        %3383 = vmatpush2.bf16.msra.mxu0 %v2534
        %3384 = vmatprep.subr.bf16.mxu0 %v2527
        %3385 = vmatpush2.bf16.msra.mxu0 %v2526
        %3386 = vmatprep.subr.bf16.mxu0 %v2519
        %3387 = vmatpush2.bf16.msra.mxu0 %v2518
        %3388 = vmatprep.subr.bf16.mxu0 %v2511
        %3389 = vmatpush2.bf16.msra.mxu0 %v2510
        %3390 = vmatprep.subr.bf16.mxu0 %v2503
        %3391 = vmatpush2.bf16.msra.mxu0 %v2502
        %3392 = vmatprep.subr.bf16.mxu0 %v2495
        %3393 = vmatpush2.bf16.msra.mxu0 %v2494
        %3394 = vmatprep.subr.bf16.mxu0 %v2487
        %3395 = vmatpush2.bf16.msra.mxu0 %v2486
        %3396 = vmatprep.mubr.bf16.mxu0 %v782
        %3397 = vmatmul.mubr.bf16.gmra.mxu0 %v781
        %v3398 = vpop.f32.mrf.mxu0
        %v3399 = vadd.f32 %v3358, %v3398
        %v3400 = vpop.f32.mrf.mxu0
        %v3401 = vadd.f32 %v3360, %v3400
        %v3402 = vpop.f32.mrf.mxu0
        %v3403 = vpop.f32.mrf.mxu0
        %3404 = vdwg.mxu0
        %3405 = vmatprep.subr.bf16.mxu0 %v2607
        %3406 = vmatpush1.bf16.msra.mxu0 %v2606
        %3407 = vmatprep.subr.bf16.mxu0 %v2599
        %3408 = vmatpush1.bf16.msra.mxu0 %v2598
        %3409 = vmatprep.subr.bf16.mxu0 %v2591
        %3410 = vmatpush1.bf16.msra.mxu0 %v2590
        %3411 = vmatprep.subr.bf16.mxu0 %v2583
        %3412 = vmatpush1.bf16.msra.mxu0 %v2582
        %3413 = vmatprep.subr.bf16.mxu0 %v2575
        %3414 = vmatpush1.bf16.msra.mxu0 %v2574
        %3415 = vmatprep.subr.bf16.mxu0 %v2567
        %3416 = vmatpush1.bf16.msra.mxu0 %v2566
        %3417 = vmatprep.subr.bf16.mxu0 %v2559
        %3418 = vmatpush1.bf16.msra.mxu0 %v2558
        %3419 = vmatprep.subr.bf16.mxu0 %v2551
        %3420 = vmatpush1.bf16.msra.mxu0 %v2550
        %3421 = vmatprep.subr.bf16.mxu0 %v2671
        %3422 = vmatpush2.bf16.msra.mxu0 %v2670
        %3423 = vmatprep.subr.bf16.mxu0 %v2663
        %3424 = vmatpush2.bf16.msra.mxu0 %v2662
        %3425 = vmatprep.subr.bf16.mxu0 %v2655
        %3426 = vmatpush2.bf16.msra.mxu0 %v2654
        %3427 = vmatprep.subr.bf16.mxu0 %v2647
        %3428 = vmatpush2.bf16.msra.mxu0 %v2646
        %3429 = vmatprep.subr.bf16.mxu0 %v2639
        %3430 = vmatpush2.bf16.msra.mxu0 %v2638
        %3431 = vmatprep.subr.bf16.mxu0 %v2631
        %3432 = vmatpush2.bf16.msra.mxu0 %v2630
        %3433 = vmatprep.subr.bf16.mxu0 %v2623
        %3434 = vmatpush2.bf16.msra.mxu0 %v2622
        %3435 = vmatprep.subr.bf16.mxu0 %v2615
        %3436 = vmatpush2.bf16.msra.mxu0 %v2614
        %3437 = vmatprep.mubr.bf16.mxu0 %v784
        %3438 = vmatmul.mubr.bf16.gmra.mxu0 %v783
        %v3439 = vpop.f32.mrf.mxu0
        %v3440 = vadd.f32 %v3399, %v3439
        %v3441 = vpop.f32.mrf.mxu0
        %v3442 = vadd.f32 %v3401, %v3441
        %v3443 = vpop.f32.mrf.mxu0
        %v3444 = vpop.f32.mrf.mxu0
        %3445 = vdwg.mxu0
        %3446 = vmatprep.subr.bf16.mxu0 %v2735
        %3447 = vmatpush1.bf16.msra.mxu0 %v2734
        %3448 = vmatprep.subr.bf16.mxu0 %v2727
        %3449 = vmatpush1.bf16.msra.mxu0 %v2726
        %3450 = vmatprep.subr.bf16.mxu0 %v2719
        %3451 = vmatpush1.bf16.msra.mxu0 %v2718
        %3452 = vmatprep.subr.bf16.mxu0 %v2711
        %3453 = vmatpush1.bf16.msra.mxu0 %v2710
        %3454 = vmatprep.subr.bf16.mxu0 %v2703
        %3455 = vmatpush1.bf16.msra.mxu0 %v2702
        %3456 = vmatprep.subr.bf16.mxu0 %v2695
        %3457 = vmatpush1.bf16.msra.mxu0 %v2694
        %3458 = vmatprep.subr.bf16.mxu0 %v2687
        %3459 = vmatpush1.bf16.msra.mxu0 %v2686
        %3460 = vmatprep.subr.bf16.mxu0 %v2679
        %3461 = vmatpush1.bf16.msra.mxu0 %v2678
        %3462 = vmatprep.subr.bf16.mxu0 0
        %3463 = vmatpush2.bf16.msra.mxu0 0
        %3464 = vmatprep.subr.bf16.mxu0 %v3303
        %3465 = vmatpush2.bf16.msra.mxu0 %v3300
        %3466 = vmatprep.subr.bf16.mxu0 %v2783
        %3467 = vmatpush2.bf16.msra.mxu0 %v2782
        %3468 = vmatprep.subr.bf16.mxu0 %v2775
        %3469 = vmatpush2.bf16.msra.mxu0 %v2774
        %3470 = vmatprep.subr.bf16.mxu0 %v2767
        %3471 = vmatpush2.bf16.msra.mxu0 %v2766
        %3472 = vmatprep.subr.bf16.mxu0 %v2759
        %3473 = vmatpush2.bf16.msra.mxu0 %v2758
        %3474 = vmatprep.subr.bf16.mxu0 %v2751
        %3475 = vmatpush2.bf16.msra.mxu0 %v2750
        %3476 = vmatprep.subr.bf16.mxu0 %v2743
        %3477 = vmatpush2.bf16.msra.mxu0 %v2742
        %3478 = vmatprep.mubr.bf16.mxu0 %v3296
        %3479 = vmatmul.mubr.bf16.gmra.mxu0 %v785
        %v3480 = vpop.f32.mrf.mxu0
        %v3481 = vadd.f32 %v3440, %v3480
        %v3482 = vpop.f32.mrf.mxu0
        %v3483 = vadd.f32 %v3442, %v3482
        %v3484 = vpop.f32.mrf.mxu0
        %v3485 = vpop.f32.mrf.mxu0
        %3486 = vdwg.mxu0
        %3487 = vmatprep.subr.bf16.mxu0 %v2353
        %3488 = vmatpush1.bf16.msra.mxu0 %v2352
        %3489 = vmatprep.subr.bf16.mxu0 %v2345
        %3490 = vmatpush1.bf16.msra.mxu0 %v2344
        %3491 = vmatprep.subr.bf16.mxu0 %v2337
        %3492 = vmatpush1.bf16.msra.mxu0 %v2336
        %3493 = vmatprep.subr.bf16.mxu0 %v2329
        %3494 = vmatpush1.bf16.msra.mxu0 %v2328
        %3495 = vmatprep.subr.bf16.mxu0 %v2321
        %3496 = vmatpush1.bf16.msra.mxu0 %v2320
        %3497 = vmatprep.subr.bf16.mxu0 %v2313
        %3498 = vmatpush1.bf16.msra.mxu0 %v2312
        %3499 = vmatprep.subr.bf16.mxu0 %v2305
        %3500 = vmatpush1.bf16.msra.mxu0 %v2304
        %3501 = vmatprep.subr.bf16.mxu0 %v2297
        %3502 = vmatpush1.bf16.msra.mxu0 %v2296
        %3503 = vmatprep.subr.bf16.mxu0 %v2417
        %3504 = vmatpush2.bf16.msra.mxu0 %v2416
        %3505 = vmatprep.subr.bf16.mxu0 %v2409
        %3506 = vmatpush2.bf16.msra.mxu0 %v2408
        %3507 = vmatprep.subr.bf16.mxu0 %v2401
        %3508 = vmatpush2.bf16.msra.mxu0 %v2400
        %3509 = vmatprep.subr.bf16.mxu0 %v2393
        %3510 = vmatpush2.bf16.msra.mxu0 %v2392
        %3511 = vmatprep.subr.bf16.mxu0 %v2385
        %3512 = vmatpush2.bf16.msra.mxu0 %v2384
        %3513 = vmatprep.subr.bf16.mxu0 %v2377
        %3514 = vmatpush2.bf16.msra.mxu0 %v2376
        %3515 = vmatprep.subr.bf16.mxu0 %v2369
        %3516 = vmatpush2.bf16.msra.mxu0 %v2368
        %3517 = vmatprep.subr.bf16.mxu0 %v2361
        %3518 = vmatpush2.bf16.msra.mxu0 %v2360
        %3519 = vmatprep.mubr.bf16.mxu0 %v780
        %3520 = vmatmul.mubr.bf16.gmra.mxu0 %v779
        %v3521 = vpop.f32.mrf.mxu0
        %v3522 = vadd.f32 0.0, %v3521
        %v3523 = vpop.f32.mrf.mxu0
        %v3524 = vadd.f32 0.0, %v3523
        %v3525 = vpop.f32.mrf.mxu0
        %v3526 = vpop.f32.mrf.mxu0
        %3527 = vdwg.mxu0
        %3528 = vmatprep.subr.bf16.mxu0 %v2481
        %3529 = vmatpush1.bf16.msra.mxu0 %v2480
        %3530 = vmatprep.subr.bf16.mxu0 %v2473
        %3531 = vmatpush1.bf16.msra.mxu0 %v2472
        %3532 = vmatprep.subr.bf16.mxu0 %v2465
        %3533 = vmatpush1.bf16.msra.mxu0 %v2464
        %3534 = vmatprep.subr.bf16.mxu0 %v2457
        %3535 = vmatpush1.bf16.msra.mxu0 %v2456
        %3536 = vmatprep.subr.bf16.mxu0 %v2449
        %3537 = vmatpush1.bf16.msra.mxu0 %v2448
        %3538 = vmatprep.subr.bf16.mxu0 %v2441
        %3539 = vmatpush1.bf16.msra.mxu0 %v2440
        %3540 = vmatprep.subr.bf16.mxu0 %v2433
        %3541 = vmatpush1.bf16.msra.mxu0 %v2432
        %3542 = vmatprep.subr.bf16.mxu0 %v2425
        %3543 = vmatpush1.bf16.msra.mxu0 %v2424
        %3544 = vmatprep.subr.bf16.mxu0 %v2545
        %3545 = vmatpush2.bf16.msra.mxu0 %v2544
        %3546 = vmatprep.subr.bf16.mxu0 %v2537
        %3547 = vmatpush2.bf16.msra.mxu0 %v2536
        %3548 = vmatprep.subr.bf16.mxu0 %v2529
        %3549 = vmatpush2.bf16.msra.mxu0 %v2528
        %3550 = vmatprep.subr.bf16.mxu0 %v2521
        %3551 = vmatpush2.bf16.msra.mxu0 %v2520
        %3552 = vmatprep.subr.bf16.mxu0 %v2513
        %3553 = vmatpush2.bf16.msra.mxu0 %v2512
        %3554 = vmatprep.subr.bf16.mxu0 %v2505
        %3555 = vmatpush2.bf16.msra.mxu0 %v2504
        %3556 = vmatprep.subr.bf16.mxu0 %v2497
        %3557 = vmatpush2.bf16.msra.mxu0 %v2496
        %3558 = vmatprep.subr.bf16.mxu0 %v2489
        %3559 = vmatpush2.bf16.msra.mxu0 %v2488
        %3560 = vmatprep.mubr.bf16.mxu0 %v782
        %3561 = vmatmul.mubr.bf16.gmra.mxu0 %v781
        %v3562 = vpop.f32.mrf.mxu0
        %v3563 = vadd.f32 %v3522, %v3562
        %v3564 = vpop.f32.mrf.mxu0
        %v3565 = vadd.f32 %v3524, %v3564
        %v3566 = vpop.f32.mrf.mxu0
        %v3567 = vpop.f32.mrf.mxu0
        %3568 = vdwg.mxu0
        %3569 = vmatprep.subr.bf16.mxu0 %v2609
        %3570 = vmatpush1.bf16.msra.mxu0 %v2608
        %3571 = vmatprep.subr.bf16.mxu0 %v2601
        %3572 = vmatpush1.bf16.msra.mxu0 %v2600
        %3573 = vmatprep.subr.bf16.mxu0 %v2593
        %3574 = vmatpush1.bf16.msra.mxu0 %v2592
        %3575 = vmatprep.subr.bf16.mxu0 %v2585
        %3576 = vmatpush1.bf16.msra.mxu0 %v2584
        %3577 = vmatprep.subr.bf16.mxu0 %v2577
        %3578 = vmatpush1.bf16.msra.mxu0 %v2576
        %3579 = vmatprep.subr.bf16.mxu0 %v2569
        %3580 = vmatpush1.bf16.msra.mxu0 %v2568
        %3581 = vmatprep.subr.bf16.mxu0 %v2561
        %3582 = vmatpush1.bf16.msra.mxu0 %v2560
        %3583 = vmatprep.subr.bf16.mxu0 %v2553
        %3584 = vmatpush1.bf16.msra.mxu0 %v2552
        %3585 = vmatprep.subr.bf16.mxu0 %v2673
        %3586 = vmatpush2.bf16.msra.mxu0 %v2672
        %3587 = vmatprep.subr.bf16.mxu0 %v2665
        %3588 = vmatpush2.bf16.msra.mxu0 %v2664
        %3589 = vmatprep.subr.bf16.mxu0 %v2657
        %3590 = vmatpush2.bf16.msra.mxu0 %v2656
        %3591 = vmatprep.subr.bf16.mxu0 %v2649
        %3592 = vmatpush2.bf16.msra.mxu0 %v2648
        %3593 = vmatprep.subr.bf16.mxu0 %v2641
        %3594 = vmatpush2.bf16.msra.mxu0 %v2640
        %3595 = vmatprep.subr.bf16.mxu0 %v2633
        %3596 = vmatpush2.bf16.msra.mxu0 %v2632
        %3597 = vmatprep.subr.bf16.mxu0 %v2625
        %3598 = vmatpush2.bf16.msra.mxu0 %v2624
        %3599 = vmatprep.subr.bf16.mxu0 %v2617
        %3600 = vmatpush2.bf16.msra.mxu0 %v2616
        %3601 = vmatprep.mubr.bf16.mxu0 %v784
        %3602 = vmatmul.mubr.bf16.gmra.mxu0 %v783
        %v3603 = vpop.f32.mrf.mxu0
        %v3604 = vadd.f32 %v3563, %v3603
        %v3605 = vpop.f32.mrf.mxu0
        %v3606 = vadd.f32 %v3565, %v3605
        %v3607 = vpop.f32.mrf.mxu0
        %v3608 = vpop.f32.mrf.mxu0
        %3609 = vdwg.mxu0
        %3610 = vmatprep.subr.bf16.mxu0 %v2737
        %3611 = vmatpush1.bf16.msra.mxu0 %v2736
        %3612 = vmatprep.subr.bf16.mxu0 %v2729
        %3613 = vmatpush1.bf16.msra.mxu0 %v2728
        %3614 = vmatprep.subr.bf16.mxu0 %v2721
        %3615 = vmatpush1.bf16.msra.mxu0 %v2720
        %3616 = vmatprep.subr.bf16.mxu0 %v2713
        %3617 = vmatpush1.bf16.msra.mxu0 %v2712
        %3618 = vmatprep.subr.bf16.mxu0 %v2705
        %3619 = vmatpush1.bf16.msra.mxu0 %v2704
        %3620 = vmatprep.subr.bf16.mxu0 %v2697
        %3621 = vmatpush1.bf16.msra.mxu0 %v2696
        %3622 = vmatprep.subr.bf16.mxu0 %v2689
        %3623 = vmatpush1.bf16.msra.mxu0 %v2688
        %3624 = vmatprep.subr.bf16.mxu0 %v2681
        %3625 = vmatpush1.bf16.msra.mxu0 %v2680
        %3626 = vmatprep.subr.bf16.mxu0 0
        %3627 = vmatpush2.bf16.msra.mxu0 0
        %3628 = vmatprep.subr.bf16.mxu0 %v3309
        %3629 = vmatpush2.bf16.msra.mxu0 %v3306
        %3630 = vmatprep.subr.bf16.mxu0 %v2785
        %3631 = vmatpush2.bf16.msra.mxu0 %v2784
        %3632 = vmatprep.subr.bf16.mxu0 %v2777
        %3633 = vmatpush2.bf16.msra.mxu0 %v2776
        %3634 = vmatprep.subr.bf16.mxu0 %v2769
        %3635 = vmatpush2.bf16.msra.mxu0 %v2768
        %3636 = vmatprep.subr.bf16.mxu0 %v2761
        %3637 = vmatpush2.bf16.msra.mxu0 %v2760
        %3638 = vmatprep.subr.bf16.mxu0 %v2753
        %3639 = vmatpush2.bf16.msra.mxu0 %v2752
        %3640 = vmatprep.subr.bf16.mxu0 %v2745
        %3641 = vmatpush2.bf16.msra.mxu0 %v2744
        %3642 = vmatprep.mubr.bf16.mxu0 %v3296
        %3643 = vmatmul.mubr.bf16.gmra.mxu0 %v785
        %v3644 = vpop.f32.mrf.mxu0
        %v3645 = vadd.f32 %v3604, %v3644
        %v3646 = vpop.f32.mrf.mxu0
        %v3647 = vadd.f32 %v3606, %v3646
        %v3648 = vpop.f32.mrf.mxu0
        %v3649 = vpop.f32.mrf.mxu0
        %3650 = vdwg.mxu0
        %3651 = vmatprep.subr.bf16.mxu0 %v2355
        %3652 = vmatpush1.bf16.msra.mxu0 %v2354
        %3653 = vmatprep.subr.bf16.mxu0 %v2347
        %3654 = vmatpush1.bf16.msra.mxu0 %v2346
        %3655 = vmatprep.subr.bf16.mxu0 %v2339
        %3656 = vmatpush1.bf16.msra.mxu0 %v2338
        %3657 = vmatprep.subr.bf16.mxu0 %v2331
        %3658 = vmatpush1.bf16.msra.mxu0 %v2330
        %3659 = vmatprep.subr.bf16.mxu0 %v2323
        %3660 = vmatpush1.bf16.msra.mxu0 %v2322
        %3661 = vmatprep.subr.bf16.mxu0 %v2315
        %3662 = vmatpush1.bf16.msra.mxu0 %v2314
        %3663 = vmatprep.subr.bf16.mxu0 %v2307
        %3664 = vmatpush1.bf16.msra.mxu0 %v2306
        %3665 = vmatprep.subr.bf16.mxu0 %v2299
        %3666 = vmatpush1.bf16.msra.mxu0 %v2298
        %3667 = vmatprep.subr.bf16.mxu0 %v2419
        %3668 = vmatpush2.bf16.msra.mxu0 %v2418
        %3669 = vmatprep.subr.bf16.mxu0 %v2411
        %3670 = vmatpush2.bf16.msra.mxu0 %v2410
        %3671 = vmatprep.subr.bf16.mxu0 %v2403
        %3672 = vmatpush2.bf16.msra.mxu0 %v2402
        %3673 = vmatprep.subr.bf16.mxu0 %v2395
        %3674 = vmatpush2.bf16.msra.mxu0 %v2394
        %3675 = vmatprep.subr.bf16.mxu0 %v2387
        %3676 = vmatpush2.bf16.msra.mxu0 %v2386
        %3677 = vmatprep.subr.bf16.mxu0 %v2379
        %3678 = vmatpush2.bf16.msra.mxu0 %v2378
        %3679 = vmatprep.subr.bf16.mxu0 %v2371
        %3680 = vmatpush2.bf16.msra.mxu0 %v2370
        %3681 = vmatprep.subr.bf16.mxu0 %v2363
        %3682 = vmatpush2.bf16.msra.mxu0 %v2362
        %3683 = vmatprep.mubr.bf16.mxu0 %v780
        %3684 = vmatmul.mubr.bf16.gmra.mxu0 %v779
        %v3685 = vpop.f32.mrf.mxu0
        %v3686 = vadd.f32 0.0, %v3685
        %v3687 = vpop.f32.mrf.mxu0
        %v3688 = vadd.f32 0.0, %v3687
        %v3689 = vpop.f32.mrf.mxu0
        %v3690 = vpop.f32.mrf.mxu0
        %3691 = vdwg.mxu0
        %3692 = vmatprep.subr.bf16.mxu0 %v2483
        %3693 = vmatpush1.bf16.msra.mxu0 %v2482
        %3694 = vmatprep.subr.bf16.mxu0 %v2475
        %3695 = vmatpush1.bf16.msra.mxu0 %v2474
        %3696 = vmatprep.subr.bf16.mxu0 %v2467
        %3697 = vmatpush1.bf16.msra.mxu0 %v2466
        %3698 = vmatprep.subr.bf16.mxu0 %v2459
        %3699 = vmatpush1.bf16.msra.mxu0 %v2458
        %3700 = vmatprep.subr.bf16.mxu0 %v2451
        %3701 = vmatpush1.bf16.msra.mxu0 %v2450
        %3702 = vmatprep.subr.bf16.mxu0 %v2443
        %3703 = vmatpush1.bf16.msra.mxu0 %v2442
        %3704 = vmatprep.subr.bf16.mxu0 %v2435
        %3705 = vmatpush1.bf16.msra.mxu0 %v2434
        %3706 = vmatprep.subr.bf16.mxu0 %v2427
        %3707 = vmatpush1.bf16.msra.mxu0 %v2426
        %3708 = vmatprep.subr.bf16.mxu0 %v2547
        %3709 = vmatpush2.bf16.msra.mxu0 %v2546
        %3710 = vmatprep.subr.bf16.mxu0 %v2539
        %3711 = vmatpush2.bf16.msra.mxu0 %v2538
        %3712 = vmatprep.subr.bf16.mxu0 %v2531
        %3713 = vmatpush2.bf16.msra.mxu0 %v2530
        %3714 = vmatprep.subr.bf16.mxu0 %v2523
        %3715 = vmatpush2.bf16.msra.mxu0 %v2522
        %3716 = vmatprep.subr.bf16.mxu0 %v2515
        %3717 = vmatpush2.bf16.msra.mxu0 %v2514
        %3718 = vmatprep.subr.bf16.mxu0 %v2507
        %3719 = vmatpush2.bf16.msra.mxu0 %v2506
        %3720 = vmatprep.subr.bf16.mxu0 %v2499
        %3721 = vmatpush2.bf16.msra.mxu0 %v2498
        %3722 = vmatprep.subr.bf16.mxu0 %v2491
        %3723 = vmatpush2.bf16.msra.mxu0 %v2490
        %3724 = vmatprep.mubr.bf16.mxu0 %v782
        %3725 = vmatmul.mubr.bf16.gmra.mxu0 %v781
        %v3726 = vpop.f32.mrf.mxu0
        %v3727 = vadd.f32 %v3686, %v3726
        %v3728 = vpop.f32.mrf.mxu0
        %v3729 = vadd.f32 %v3688, %v3728
        %v3730 = vpop.f32.mrf.mxu0
        %v3731 = vpop.f32.mrf.mxu0
        %3732 = vdwg.mxu0
        %3733 = vmatprep.subr.bf16.mxu0 %v2611
        %3734 = vmatpush1.bf16.msra.mxu0 %v2610
        %3735 = vmatprep.subr.bf16.mxu0 %v2603
        %3736 = vmatpush1.bf16.msra.mxu0 %v2602
        %3737 = vmatprep.subr.bf16.mxu0 %v2595
        %3738 = vmatpush1.bf16.msra.mxu0 %v2594
        %3739 = vmatprep.subr.bf16.mxu0 %v2587
        %3740 = vmatpush1.bf16.msra.mxu0 %v2586
        %3741 = vmatprep.subr.bf16.mxu0 %v2579
        %3742 = vmatpush1.bf16.msra.mxu0 %v2578
        %3743 = vmatprep.subr.bf16.mxu0 %v2571
        %3744 = vmatpush1.bf16.msra.mxu0 %v2570
        %3745 = vmatprep.subr.bf16.mxu0 %v2563
        %3746 = vmatpush1.bf16.msra.mxu0 %v2562
        %3747 = vmatprep.subr.bf16.mxu0 %v2555
        %3748 = vmatpush1.bf16.msra.mxu0 %v2554
        %3749 = vmatprep.subr.bf16.mxu0 %v2675
        %3750 = vmatpush2.bf16.msra.mxu0 %v2674
        %3751 = vmatprep.subr.bf16.mxu0 %v2667
        %3752 = vmatpush2.bf16.msra.mxu0 %v2666
        %3753 = vmatprep.subr.bf16.mxu0 %v2659
        %3754 = vmatpush2.bf16.msra.mxu0 %v2658
        %3755 = vmatprep.subr.bf16.mxu0 %v2651
        %3756 = vmatpush2.bf16.msra.mxu0 %v2650
        %3757 = vmatprep.subr.bf16.mxu0 %v2643
        %3758 = vmatpush2.bf16.msra.mxu0 %v2642
        %3759 = vmatprep.subr.bf16.mxu0 %v2635
        %3760 = vmatpush2.bf16.msra.mxu0 %v2634
        %3761 = vmatprep.subr.bf16.mxu0 %v2627
        %3762 = vmatpush2.bf16.msra.mxu0 %v2626
        %3763 = vmatprep.subr.bf16.mxu0 %v2619
        %3764 = vmatpush2.bf16.msra.mxu0 %v2618
        %3765 = vmatprep.mubr.bf16.mxu0 %v784
        %3766 = vmatmul.mubr.bf16.gmra.mxu0 %v783
        %v3767 = vpop.f32.mrf.mxu0
        %v3768 = vadd.f32 %v3727, %v3767
        %v3769 = vpop.f32.mrf.mxu0
        %v3770 = vadd.f32 %v3729, %v3769
        %v3771 = vpop.f32.mrf.mxu0
        %v3772 = vpop.f32.mrf.mxu0
        %3773 = vdwg.mxu0
        %3774 = vmatprep.subr.bf16.mxu0 %v2739
        %3775 = vmatpush1.bf16.msra.mxu0 %v2738
        %3776 = vmatprep.subr.bf16.mxu0 %v2731
        %3777 = vmatpush1.bf16.msra.mxu0 %v2730
        %3778 = vmatprep.subr.bf16.mxu0 %v2723
        %3779 = vmatpush1.bf16.msra.mxu0 %v2722
        %3780 = vmatprep.subr.bf16.mxu0 %v2715
        %3781 = vmatpush1.bf16.msra.mxu0 %v2714
        %3782 = vmatprep.subr.bf16.mxu0 %v2707
        %3783 = vmatpush1.bf16.msra.mxu0 %v2706
        %3784 = vmatprep.subr.bf16.mxu0 %v2699
        %3785 = vmatpush1.bf16.msra.mxu0 %v2698
        %3786 = vmatprep.subr.bf16.mxu0 %v2691
        %3787 = vmatpush1.bf16.msra.mxu0 %v2690
        %3788 = vmatprep.subr.bf16.mxu0 %v2683
        %3789 = vmatpush1.bf16.msra.mxu0 %v2682
        %3790 = vmatprep.subr.bf16.mxu0 0
        %3791 = vmatpush2.bf16.msra.mxu0 0
        %3792 = vmatprep.subr.bf16.mxu0 %v3315
        %3793 = vmatpush2.bf16.msra.mxu0 %v3312
        %3794 = vmatprep.subr.bf16.mxu0 %v2787
        %3795 = vmatpush2.bf16.msra.mxu0 %v2786
        %3796 = vmatprep.subr.bf16.mxu0 %v2779
        %3797 = vmatpush2.bf16.msra.mxu0 %v2778
        %3798 = vmatprep.subr.bf16.mxu0 %v2771
        %3799 = vmatpush2.bf16.msra.mxu0 %v2770
        %3800 = vmatprep.subr.bf16.mxu0 %v2763
        %3801 = vmatpush2.bf16.msra.mxu0 %v2762
        %3802 = vmatprep.subr.bf16.mxu0 %v2755
        %3803 = vmatpush2.bf16.msra.mxu0 %v2754
        %3804 = vmatprep.subr.bf16.mxu0 %v2747
        %3805 = vmatpush2.bf16.msra.mxu0 %v2746
        %3806 = vmatprep.mubr.bf16.mxu0 %v3296
        %3807 = vmatmul.mubr.bf16.gmra.mxu0 %v785
        %v3808 = vpop.f32.mrf.mxu0
        %v3809 = vadd.f32 %v3768, %v3808
        %v3810 = vpop.f32.mrf.mxu0
        %v3811 = vadd.f32 %v3770, %v3810
        %v3812 = vpop.f32.mrf.mxu0
        %v3813 = vpop.f32.mrf.mxu0
        %3814 = vdwg.mxu0
        %3815 = vmatprep.subr.bf16.mxu0 %v2357
        %3816 = vmatpush1.bf16.msra.mxu0 %v2356
        %3817 = vmatprep.subr.bf16.mxu0 %v2349
        %3818 = vmatpush1.bf16.msra.mxu0 %v2348
        %3819 = vmatprep.subr.bf16.mxu0 %v2341
        %3820 = vmatpush1.bf16.msra.mxu0 %v2340
        %3821 = vmatprep.subr.bf16.mxu0 %v2333
        %3822 = vmatpush1.bf16.msra.mxu0 %v2332
        %3823 = vmatprep.subr.bf16.mxu0 %v2325
        %3824 = vmatpush1.bf16.msra.mxu0 %v2324
        %3825 = vmatprep.subr.bf16.mxu0 %v2317
        %3826 = vmatpush1.bf16.msra.mxu0 %v2316
        %3827 = vmatprep.subr.bf16.mxu0 %v2309
        %3828 = vmatpush1.bf16.msra.mxu0 %v2308
        %3829 = vmatprep.subr.bf16.mxu0 %v2301
        %3830 = vmatpush1.bf16.msra.mxu0 %v2300
        %3831 = vmatprep.subr.bf16.mxu0 %v2421
        %3832 = vmatpush2.bf16.msra.mxu0 %v2420
        %3833 = vmatprep.subr.bf16.mxu0 %v2413
        %3834 = vmatpush2.bf16.msra.mxu0 %v2412
        %3835 = vmatprep.subr.bf16.mxu0 %v2405
        %3836 = vmatpush2.bf16.msra.mxu0 %v2404
        %3837 = vmatprep.subr.bf16.mxu0 %v2397
        %3838 = vmatpush2.bf16.msra.mxu0 %v2396
        %3839 = vmatprep.subr.bf16.mxu0 %v2389
        %3840 = vmatpush2.bf16.msra.mxu0 %v2388
        %3841 = vmatprep.subr.bf16.mxu0 %v2381
        %3842 = vmatpush2.bf16.msra.mxu0 %v2380
        %3843 = vmatprep.subr.bf16.mxu0 %v2373
        %3844 = vmatpush2.bf16.msra.mxu0 %v2372
        %3845 = vmatprep.subr.bf16.mxu0 %v2365
        %3846 = vmatpush2.bf16.msra.mxu0 %v2364
        %3847 = vmatprep.mubr.bf16.mxu0 %v780
        %3848 = vmatmul.mubr.bf16.gmra.mxu0 %v779
        %v3849 = vpop.f32.mrf.mxu0
        %v3850 = vadd.f32 0.0, %v3849
        %v3851 = vpop.f32.mrf.mxu0
        %v3852 = vadd.f32 0.0, %v3851
        %v3853 = vpop.f32.mrf.mxu0
        %v3854 = vpop.f32.mrf.mxu0
        %3855 = vdwg.mxu0
        %3856 = vmatprep.subr.bf16.mxu0 %v2485
        %3857 = vmatpush1.bf16.msra.mxu0 %v2484
        %3858 = vmatprep.subr.bf16.mxu0 %v2477
        %3859 = vmatpush1.bf16.msra.mxu0 %v2476
        %3860 = vmatprep.subr.bf16.mxu0 %v2469
        %3861 = vmatpush1.bf16.msra.mxu0 %v2468
        %3862 = vmatprep.subr.bf16.mxu0 %v2461
        %3863 = vmatpush1.bf16.msra.mxu0 %v2460
        %3864 = vmatprep.subr.bf16.mxu0 %v2453
        %3865 = vmatpush1.bf16.msra.mxu0 %v2452
        %3866 = vmatprep.subr.bf16.mxu0 %v2445
        %3867 = vmatpush1.bf16.msra.mxu0 %v2444
        %3868 = vmatprep.subr.bf16.mxu0 %v2437
        %3869 = vmatpush1.bf16.msra.mxu0 %v2436
        %3870 = vmatprep.subr.bf16.mxu0 %v2429
        %3871 = vmatpush1.bf16.msra.mxu0 %v2428
        %3872 = vmatprep.subr.bf16.mxu0 %v2549
        %3873 = vmatpush2.bf16.msra.mxu0 %v2548
        %3874 = vmatprep.subr.bf16.mxu0 %v2541
        %3875 = vmatpush2.bf16.msra.mxu0 %v2540
        %3876 = vmatprep.subr.bf16.mxu0 %v2533
        %3877 = vmatpush2.bf16.msra.mxu0 %v2532
        %3878 = vmatprep.subr.bf16.mxu0 %v2525
        %3879 = vmatpush2.bf16.msra.mxu0 %v2524
        %3880 = vmatprep.subr.bf16.mxu0 %v2517
        %3881 = vmatpush2.bf16.msra.mxu0 %v2516
        %3882 = vmatprep.subr.bf16.mxu0 %v2509
        %3883 = vmatpush2.bf16.msra.mxu0 %v2508
        %3884 = vmatprep.subr.bf16.mxu0 %v2501
        %3885 = vmatpush2.bf16.msra.mxu0 %v2500
        %3886 = vmatprep.subr.bf16.mxu0 %v2493
        %3887 = vmatpush2.bf16.msra.mxu0 %v2492
        %3888 = vmatprep.mubr.bf16.mxu0 %v782
        %3889 = vmatmul.mubr.bf16.gmra.mxu0 %v781
        %v3890 = vpop.f32.mrf.mxu0
        %v3891 = vadd.f32 %v3850, %v3890
        %v3892 = vpop.f32.mrf.mxu0
        %v3893 = vadd.f32 %v3852, %v3892
        %v3894 = vpop.f32.mrf.mxu0
        %v3895 = vpop.f32.mrf.mxu0
        %3896 = vdwg.mxu0
        %3897 = vmatprep.subr.bf16.mxu0 %v2613
        %3898 = vmatpush1.bf16.msra.mxu0 %v2612
        %3899 = vmatprep.subr.bf16.mxu0 %v2605
        %3900 = vmatpush1.bf16.msra.mxu0 %v2604
        %3901 = vmatprep.subr.bf16.mxu0 %v2597
        %3902 = vmatpush1.bf16.msra.mxu0 %v2596
        %3903 = vmatprep.subr.bf16.mxu0 %v2589
        %3904 = vmatpush1.bf16.msra.mxu0 %v2588
        %3905 = vmatprep.subr.bf16.mxu0 %v2581
        %3906 = vmatpush1.bf16.msra.mxu0 %v2580
        %3907 = vmatprep.subr.bf16.mxu0 %v2573
        %3908 = vmatpush1.bf16.msra.mxu0 %v2572
        %3909 = vmatprep.subr.bf16.mxu0 %v2565
        %3910 = vmatpush1.bf16.msra.mxu0 %v2564
        %3911 = vmatprep.subr.bf16.mxu0 %v2557
        %3912 = vmatpush1.bf16.msra.mxu0 %v2556
        %3913 = vmatprep.subr.bf16.mxu0 %v2677
        %3914 = vmatpush2.bf16.msra.mxu0 %v2676
        %3915 = vmatprep.subr.bf16.mxu0 %v2669
        %3916 = vmatpush2.bf16.msra.mxu0 %v2668
        %3917 = vmatprep.subr.bf16.mxu0 %v2661
        %3918 = vmatpush2.bf16.msra.mxu0 %v2660
        %3919 = vmatprep.subr.bf16.mxu0 %v2653
        %3920 = vmatpush2.bf16.msra.mxu0 %v2652
        %3921 = vmatprep.subr.bf16.mxu0 %v2645
        %3922 = vmatpush2.bf16.msra.mxu0 %v2644
        %3923 = vmatprep.subr.bf16.mxu0 %v2637
        %3924 = vmatpush2.bf16.msra.mxu0 %v2636
        %3925 = vmatprep.subr.bf16.mxu0 %v2629
        %3926 = vmatpush2.bf16.msra.mxu0 %v2628
        %3927 = vmatprep.subr.bf16.mxu0 %v2621
        %3928 = vmatpush2.bf16.msra.mxu0 %v2620
        %3929 = vmatprep.mubr.bf16.mxu0 %v784
        %3930 = vmatmul.mubr.bf16.gmra.mxu0 %v783
        %v3931 = vpop.f32.mrf.mxu0
        %v3932 = vadd.f32 %v3891, %v3931
        %v3933 = vpop.f32.mrf.mxu0
        %v3934 = vadd.f32 %v3893, %v3933
        %v3935 = vpop.f32.mrf.mxu0
        %v3936 = vpop.f32.mrf.mxu0
        %3937 = vdwg.mxu0
        %3938 = vmatprep.subr.bf16.mxu0 %v2741
        %3939 = vmatpush1.bf16.msra.mxu0 %v2740
        %3940 = vmatprep.subr.bf16.mxu0 %v2733
        %3941 = vmatpush1.bf16.msra.mxu0 %v2732
        %3942 = vmatprep.subr.bf16.mxu0 %v2725
        %3943 = vmatpush1.bf16.msra.mxu0 %v2724
        %3944 = vmatprep.subr.bf16.mxu0 %v2717
        %3945 = vmatpush1.bf16.msra.mxu0 %v2716
        %3946 = vmatprep.subr.bf16.mxu0 %v2709
        %3947 = vmatpush1.bf16.msra.mxu0 %v2708
        %3948 = vmatprep.subr.bf16.mxu0 %v2701
        %3949 = vmatpush1.bf16.msra.mxu0 %v2700
        %3950 = vmatprep.subr.bf16.mxu0 %v2693
        %3951 = vmatpush1.bf16.msra.mxu0 %v2692
        %3952 = vmatprep.subr.bf16.mxu0 %v2685
        %3953 = vmatpush1.bf16.msra.mxu0 %v2684
        %3954 = vmatprep.subr.bf16.mxu0 0
        %3955 = vmatpush2.bf16.msra.mxu0 0
        %3956 = vmatprep.subr.bf16.mxu0 %v3321
        %3957 = vmatpush2.bf16.msra.mxu0 %v3318
        %3958 = vmatprep.subr.bf16.mxu0 %v2789
        %3959 = vmatpush2.bf16.msra.mxu0 %v2788
        %3960 = vmatprep.subr.bf16.mxu0 %v2781
        %3961 = vmatpush2.bf16.msra.mxu0 %v2780
        %3962 = vmatprep.subr.bf16.mxu0 %v2773
        %3963 = vmatpush2.bf16.msra.mxu0 %v2772
        %3964 = vmatprep.subr.bf16.mxu0 %v2765
        %3965 = vmatpush2.bf16.msra.mxu0 %v2764
        %3966 = vmatprep.subr.bf16.mxu0 %v2757
        %3967 = vmatpush2.bf16.msra.mxu0 %v2756
        %3968 = vmatprep.subr.bf16.mxu0 %v2749
        %3969 = vmatpush2.bf16.msra.mxu0 %v2748
        %3970 = vmatprep.mubr.bf16.mxu0 %v3296
        %3971 = vmatmul.mubr.bf16.gmra.mxu0 %v785
        %v3972 = vpop.f32.mrf.mxu0
        %v3973 = vadd.f32 %v3932, %v3972
        %v3974 = vpop.f32.mrf.mxu0
        %v3975 = vadd.f32 %v3934, %v3974
        %v3976 = vpop.f32.mrf.mxu0
        %v3977 = vpop.f32.mrf.mxu0
        %3978 = vdwg.mxu0
        %v3979 = vrot.slane %v3481, 4
        %v3980 = vadd.f32 %v3481, %v3979
        %v3981 = vrot.slane %v3980, 2
        %v3982 = vadd.f32 %v3980, %v3981
        %v3983 = vrot.slane %v3982, 1
        %v3984 = vadd.f32 %v3982, %v3983
        %v3985 = vrot.slane %v3483, 4
        %v3986 = vadd.f32 %v3483, %v3985
        %v3987 = vrot.slane %v3986, 2
        %v3988 = vadd.f32 %v3986, %v3987
        %v3989 = vrot.slane %v3988, 1
        %v3990 = vadd.f32 %v3988, %v3989
        %v3991 = vrot.slane %v3645, 4
        %v3992 = vadd.f32 %v3645, %v3991
        %v3993 = vrot.slane %v3992, 2
        %v3994 = vadd.f32 %v3992, %v3993
        %v3995 = vrot.slane %v3994, 1
        %v3996 = vadd.f32 %v3994, %v3995
        %v3997 = vrot.slane %v3647, 4
        %v3998 = vadd.f32 %v3647, %v3997
        %v3999 = vrot.slane %v3998, 2
        %v4000 = vadd.f32 %v3998, %v3999
        %v4001 = vrot.slane %v4000, 1
        %v4002 = vadd.f32 %v4000, %v4001
        %v4003 = vrot.slane %v3809, 4
        %v4004 = vadd.f32 %v3809, %v4003
        %v4005 = vrot.slane %v4004, 2
        %v4006 = vadd.f32 %v4004, %v4005
        %v4007 = vrot.slane %v4006, 1
        %v4008 = vadd.f32 %v4006, %v4007
        %v4009 = vrot.slane %v3811, 4
        %v4010 = vadd.f32 %v3811, %v4009
        %v4011 = vrot.slane %v4010, 2
        %v4012 = vadd.f32 %v4010, %v4011
        %v4013 = vrot.slane %v4012, 1
        %v4014 = vadd.f32 %v4012, %v4013
        %v4015 = vrot.slane %v3973, 4
        %v4016 = vadd.f32 %v3973, %v4015
        %v4017 = vrot.slane %v4016, 2
        %v4018 = vadd.f32 %v4016, %v4017
        %v4019 = vrot.slane %v4018, 1
        %v4020 = vadd.f32 %v4018, %v4019
        %v4021 = vsel %vm3294, %v3975, 0.0
        %v4022 = vrot.slane %v4021, 4
        %v4023 = vadd.f32 %v4021, %v4022
        %v4024 = vrot.slane %v4023, 2
        %v4025 = vadd.f32 %v4023, %v4024
        %v4026 = vrot.slane %v4025, 1
        %v4027 = vadd.f32 %v4025, %v4026
        %v4028 = vrcp.pop 8.0
        %v4029 = vmul.f32 %v3984, %v4028
        %v4030 = vmul.f32 %v3990, %v4028
        %v4031 = vmul.f32 %v3996, %v4028
        %v4032 = vmul.f32 %v4002, %v4028
        %v4033 = vmul.f32 %v4008, %v4028
        %v4034 = vmul.f32 %v4014, %v4028
        %v4035 = vmul.f32 %v4020, %v4028
        %v4036 = vmul.f32 %v4027, %v4028
        %v4037 = vsub.f32 %v3481, %v4029
        %v4038 = vsub.f32 %v3483, %v4030
        %v4039 = vsub.f32 %v3645, %v4031
        %v4040 = vsub.f32 %v3647, %v4032
        %v4041 = vsub.f32 %v3809, %v4033
        %v4042 = vsub.f32 %v3811, %v4034
        %v4043 = vsub.f32 %v3973, %v4035
        %v4044 = vsub.f32 %v3975, %v4036
        %v4045 = vmul.f32 %v4037, %v4037
        %v4046 = vmul.f32 %v4038, %v4038
        %v4047 = vmul.f32 %v4039, %v4039
        %v4048 = vmul.f32 %v4040, %v4040
        %v4049 = vmul.f32 %v4041, %v4041
        %v4050 = vmul.f32 %v4042, %v4042
        %v4051 = vmul.f32 %v4043, %v4043
        %v4052 = vmul.f32 %v4044, %v4044
        %v4053 = vrot.slane %v4045, 4
        %v4054 = vadd.f32 %v4045, %v4053
        %v4055 = vrot.slane %v4054, 2
        %v4056 = vadd.f32 %v4054, %v4055
        %v4057 = vrot.slane %v4056, 1
        %v4058 = vadd.f32 %v4056, %v4057
        %v4059 = vrot.slane %v4046, 4
        %v4060 = vadd.f32 %v4046, %v4059
        %v4061 = vrot.slane %v4060, 2
        %v4062 = vadd.f32 %v4060, %v4061
        %v4063 = vrot.slane %v4062, 1
        %v4064 = vadd.f32 %v4062, %v4063
        %v4065 = vrot.slane %v4047, 4
        %v4066 = vadd.f32 %v4047, %v4065
        %v4067 = vrot.slane %v4066, 2
        %v4068 = vadd.f32 %v4066, %v4067
        %v4069 = vrot.slane %v4068, 1
        %v4070 = vadd.f32 %v4068, %v4069
        %v4071 = vrot.slane %v4048, 4
        %v4072 = vadd.f32 %v4048, %v4071
        %v4073 = vrot.slane %v4072, 2
        %v4074 = vadd.f32 %v4072, %v4073
        %v4075 = vrot.slane %v4074, 1
        %v4076 = vadd.f32 %v4074, %v4075
        %v4077 = vrot.slane %v4049, 4
        %v4078 = vadd.f32 %v4049, %v4077
        %v4079 = vrot.slane %v4078, 2
        %v4080 = vadd.f32 %v4078, %v4079
        %v4081 = vrot.slane %v4080, 1
        %v4082 = vadd.f32 %v4080, %v4081
        %v4083 = vrot.slane %v4050, 4
        %v4084 = vadd.f32 %v4050, %v4083
        %v4085 = vrot.slane %v4084, 2
        %v4086 = vadd.f32 %v4084, %v4085
        %v4087 = vrot.slane %v4086, 1
        %v4088 = vadd.f32 %v4086, %v4087
        %v4089 = vrot.slane %v4051, 4
        %v4090 = vadd.f32 %v4051, %v4089
        %v4091 = vrot.slane %v4090, 2
        %v4092 = vadd.f32 %v4090, %v4091
        %v4093 = vrot.slane %v4092, 1
        %v4094 = vadd.f32 %v4092, %v4093
        %v4095 = vsel %vm3294, %v4052, 0.0
        %v4096 = vrot.slane %v4095, 4
        %v4097 = vadd.f32 %v4095, %v4096
        %v4098 = vrot.slane %v4097, 2
        %v4099 = vadd.f32 %v4097, %v4098
        %v4100 = vrot.slane %v4099, 1
        %v4101 = vadd.f32 %v4099, %v4100
        %v4102 = vmul.f32 %v4058, %v4028
        %v4103 = vmul.f32 %v4064, %v4028
        %v4104 = vmul.f32 %v4070, %v4028
        %v4105 = vmul.f32 %v4076, %v4028
        %v4106 = vmul.f32 %v4082, %v4028
        %v4107 = vmul.f32 %v4088, %v4028
        %v4108 = vmul.f32 %v4094, %v4028
        %v4109 = vmul.f32 %v4101, %v4028
        %v4110 = vadd.f32 %v4102, 1e-05
        %v4111 = vadd.f32 %v4103, 1e-05
        %v4112 = vadd.f32 %v4104, 1e-05
        %v4113 = vadd.f32 %v4105, 1e-05
        %v4114 = vadd.f32 %v4106, 1e-05
        %v4115 = vadd.f32 %v4107, 1e-05
        %v4116 = vadd.f32 %v4108, 1e-05
        %v4117 = vadd.f32 %v4109, 1e-05
        %v4118 = vrsqrt.pop %v4110
        %v4119 = vrsqrt.pop %v4111
        %v4120 = vrsqrt.pop %v4112
        %v4121 = vrsqrt.pop %v4113
        %v4122 = vrsqrt.pop %v4114
        %v4123 = vrsqrt.pop %v4115
        %v4124 = vrsqrt.pop %v4116
        %v4125 = vrsqrt.pop %v4117
        %v4126 = vld [vmem:[%s218] sm:$0xff]
        %v4127 = vld [vmem:[%s218 + $0x8] sm:$0xff]
        %v4130 = vlaneseq
        %v4131 = vshrl.u32 %v4130, 7
        %v4132 = vsub.s32 0, %v4131
        %v4133 = vrot.slane %v4126, %v4132
        %v4134 = vlaneseq
        %v4135 = vshrl.u32 %v4134, 7
        %v4136 = vsub.s32 2, %v4135
        %v4137 = vrot.slane %v4126, %v4136
        %v4138 = vlaneseq
        %v4139 = vshrl.u32 %v4138, 7
        %v4140 = vsub.s32 4, %v4139
        %v4141 = vrot.slane %v4126, %v4140
        %v4142 = vlaneseq
        %v4143 = vshrl.u32 %v4142, 7
        %v4144 = vsub.s32 6, %v4143
        %v4145 = vrot.slane %v4126, %v4144
        %v4146 = vlaneseq
        %v4147 = vshrl.u32 %v4146, 7
        %v4148 = vsub.s32 0, %v4147
        %v4149 = vrot.slane %v4127, %v4148
        %v4150 = vlaneseq
        %v4151 = vshrl.u32 %v4150, 7
        %v4152 = vsub.s32 2, %v4151
        %v4153 = vrot.slane %v4127, %v4152
        %v4154 = vlaneseq
        %v4155 = vshrl.u32 %v4154, 7
        %v4156 = vsub.s32 4, %v4155
        %v4157 = vrot.slane %v4127, %v4156
        %v4158 = vlaneseq
        %v4159 = vshrl.u32 %v4158, 7
        %v4160 = vsub.s32 6, %v4159
        %v4161 = vrot.slane %v4127, %v4160
        %v4170 = vmul.f32 %v4118, %v4133
        %v4171 = vmul.f32 %v4119, %v4137
        %v4172 = vmul.f32 %v4120, %v4141
        %v4173 = vmul.f32 %v4121, %v4145
        %v4174 = vmul.f32 %v4122, %v4149
        %v4175 = vmul.f32 %v4123, %v4153
        %v4176 = vmul.f32 %v4124, %v4157
        %v4177 = vmul.f32 %v4125, %v4161
        %v4178 = vlaneseq
        %v4179 = vshrl.u32 %v4178, 7
        %v4180 = vsub.s32 0, %v4179
        %v4181 = vrot.slane %v4170, %v4180
        %v4182 = vlaneseq
        %v4183 = vshrl.u32 %v4182, 7
        %v4184 = vsub.s32 0, %v4183
        %v4185 = vrot.slane %v4171, %v4184
        %v4186 = vlaneseq
        %v4187 = vshrl.u32 %v4186, 7
        %v4188 = vsub.s32 0, %v4187
        %v4189 = vrot.slane %v4172, %v4188
        %v4190 = vlaneseq
        %v4191 = vshrl.u32 %v4190, 7
        %v4192 = vsub.s32 0, %v4191
        %v4193 = vrot.slane %v4173, %v4192
        %v4194 = vlaneseq
        %v4195 = vshrl.u32 %v4194, 7
        %v4196 = vsub.s32 0, %v4195
        %v4197 = vrot.slane %v4174, %v4196
        %v4198 = vlaneseq
        %v4199 = vshrl.u32 %v4198, 7
        %v4200 = vsub.s32 0, %v4199
        %v4201 = vrot.slane %v4175, %v4200
        %v4202 = vlaneseq
        %v4203 = vshrl.u32 %v4202, 7
        %v4204 = vsub.s32 0, %v4203
        %v4205 = vrot.slane %v4176, %v4204
        %v4206 = vlaneseq
        %v4207 = vshrl.u32 %v4206, 7
        %v4208 = vsub.s32 0, %v4207
        %v4209 = vrot.slane %v4177, %v4208
        %v4210 = vmul.f32 %v4037, %v4181
        %v4211 = vmul.f32 %v4038, %v4185
        %v4212 = vmul.f32 %v4039, %v4189
        %v4213 = vmul.f32 %v4040, %v4193
        %v4214 = vmul.f32 %v4041, %v4197
        %v4215 = vmul.f32 %v4042, %v4201
        %v4216 = vmul.f32 %v4043, %v4205
        %v4217 = vmul.f32 %v4044, %v4209
        %v4218 = vlaneseq
        %v4219 = vshrl.u32 %v4218, 7
        %v4220 = vsub.s32 1, %v4219
        %v4221 = vrot.slane %v4126, %v4220
        %v4222 = vlaneseq
        %v4223 = vshrl.u32 %v4222, 7
        %v4224 = vsub.s32 3, %v4223
        %v4225 = vrot.slane %v4126, %v4224
        %v4226 = vlaneseq
        %v4227 = vshrl.u32 %v4226, 7
        %v4228 = vsub.s32 5, %v4227
        %v4229 = vrot.slane %v4126, %v4228
        %v4230 = vlaneseq
        %v4231 = vshrl.u32 %v4230, 7
        %v4232 = vsub.s32 7, %v4231
        %v4233 = vrot.slane %v4126, %v4232
        %v4234 = vlaneseq
        %v4235 = vshrl.u32 %v4234, 7
        %v4236 = vsub.s32 1, %v4235
        %v4237 = vrot.slane %v4127, %v4236
        %v4238 = vlaneseq
        %v4239 = vshrl.u32 %v4238, 7
        %v4240 = vsub.s32 3, %v4239
        %v4241 = vrot.slane %v4127, %v4240
        %v4242 = vlaneseq
        %v4243 = vshrl.u32 %v4242, 7
        %v4244 = vsub.s32 5, %v4243
        %v4245 = vrot.slane %v4127, %v4244
        %v4246 = vlaneseq
        %v4247 = vshrl.u32 %v4246, 7
        %v4248 = vsub.s32 7, %v4247
        %v4249 = vrot.slane %v4127, %v4248
        %v4258 = vlaneseq
        %v4259 = vshrl.u32 %v4258, 7
        %v4260 = vsub.s32 1, %v4259
        %v4261 = vrot.slane %v4221, %v4260
        %v4262 = vlaneseq
        %v4263 = vshrl.u32 %v4262, 7
        %v4264 = vsub.s32 1, %v4263
        %v4265 = vrot.slane %v4225, %v4264
        %v4266 = vlaneseq
        %v4267 = vshrl.u32 %v4266, 7
        %v4268 = vsub.s32 1, %v4267
        %v4269 = vrot.slane %v4229, %v4268
        %v4270 = vlaneseq
        %v4271 = vshrl.u32 %v4270, 7
        %v4272 = vsub.s32 1, %v4271
        %v4273 = vrot.slane %v4233, %v4272
        %v4274 = vlaneseq
        %v4275 = vshrl.u32 %v4274, 7
        %v4276 = vsub.s32 1, %v4275
        %v4277 = vrot.slane %v4237, %v4276
        %v4278 = vlaneseq
        %v4279 = vshrl.u32 %v4278, 7
        %v4280 = vsub.s32 1, %v4279
        %v4281 = vrot.slane %v4241, %v4280
        %v4282 = vlaneseq
        %v4283 = vshrl.u32 %v4282, 7
        %v4284 = vsub.s32 1, %v4283
        %v4285 = vrot.slane %v4245, %v4284
        %v4286 = vlaneseq
        %v4287 = vshrl.u32 %v4286, 7
        %v4288 = vsub.s32 1, %v4287
        %v4289 = vrot.slane %v4249, %v4288
        %v4290 = vadd.f32 %v4210, %v4261
        %v4291 = vadd.f32 %v4211, %v4265
        %v4292 = vadd.f32 %v4212, %v4269
        %v4293 = vadd.f32 %v4213, %v4273
        %v4294 = vadd.f32 %v4214, %v4277
        %v4295 = vadd.f32 %v4215, %v4281
        %v4296 = vadd.f32 %v4216, %v4285
        %v4297 = vadd.f32 %v4217, %v4289
        %v4298 = vmax.f32 %v4290, 0.0
        %v4299 = vmax.f32 %v4291, 0.0
        %v4300 = vmax.f32 %v4292, 0.0
        %v4301 = vmax.f32 %v4293, 0.0
        %v4302 = vmax.f32 %v4294, 0.0
        %v4303 = vmax.f32 %v4295, 0.0
        %v4304 = vmax.f32 %v4296, 0.0
        %v4305 = vmax.f32 %v4297, 0.0
        %4306 = vst [vmem:[%s260] sm:$0xff] %v4298
        %4307 = vst [vmem:[%s260 + $0x8] sm:$0xff] %v4299
        %4308 = vst [vmem:[%s260 + $0x10] sm:$0xff] %v4300
        %4309 = vst [vmem:[%s260 + $0x18] sm:$0xff] %v4301
        %4310 = vst [vmem:[%s260 + $0x20] sm:$0xff] %v4302
        %4311 = vst [vmem:[%s260 + $0x28] sm:$0xff] %v4303
        %4312 = vst [vmem:[%s260 + $0x30] sm:$0xff] %v4304
        %4313 = vst.msk [vmem:[%s260 + $0x38] sm:$0xff] %vm3294, %v4305
        %s4314 = smul.u32 8, %s25
        %p4315 = scmp.lt.s32.totalorder %s24, 2
        %s4316 = scalar_select %p4315, %s24, 2
        %p4317 = scmp.lt.s32.totalorder %s4314, 7
        %s4318 = scalar_select %p4317, %s4314, 7
        %s4319 = smul.addr %s4316, 8
        %s4320 = sadd.s32 %s4318, %s4319
        %s4321 = smul.addr %s4320, 8
        %s4322 = scalar_lea.vmem %s3, %s4321
        // Predicated region
        $region41: #{testblock14_forward.1} parent=31 // pred_check
          %p4323 = pneg %p129
        $region42: #{testblock14_forward.1} parent=31 // pred_check_branch
          %4325 = sbr.rel (%p4323) target = $region44
        $region43: #{testblock14_forward.1} parent=31 // pred_region
          %s4326 = smul.u32 8, %s25
        $region44: #{testblock14_forward.1} parent=31 // pred_fallthru
          _
      $region32: #{testblock14_forward.1} parent=5 // pred_fallthru
        _
      %p4327 = scmp.le.s32.totalorder 2, %s15
      // Predicated region
      $region45: #{testblock14_forward.1} parent=5 // pred_check
        %p4328 = pneg %p4327
      $region46: #{testblock14_forward.1} parent=5 // pred_check_branch
        %4330 = sbr.rel (%p4328) target = $region48
      $region47: #{testblock14_forward.1} parent=5 // pred_region
        %s4331 = ssub.s32 %s15, 2
        // Predicated region
        $region49: #{testblock14_forward.1} parent=47 // pred_check
          %p4332 = pneg %p135
        $region50: #{testblock14_forward.1} parent=47 // pred_check_branch
          %4334 = sbr.rel (%p4332) target = $region52
        $region51: #{testblock14_forward.1} parent=47 // pred_region
          %s4335 = smul.u32 8, %s27
          %p4336 = scmp.lt.s32.totalorder %s26, 2
          %s4337 = scalar_select %p4336, %s26, 2
          %p4338 = scmp.lt.s32.totalorder %s4335, 7
          %s4339 = scalar_select %p4338, %s4335, 7
          %s4340 = smul.addr %s4337, 8
          %s4341 = sadd.s32 %s4339, %s4340
          %s4342 = smul.addr %s4341, 8
          %s4343 = scalar_lea.vmem %s3, %s4342
        $region52: #{testblock14_forward.1} parent=47 // pred_fallthru
          _
      $region48: #{testblock14_forward.1} parent=5 // pred_fallthru
        _
    $region6: #{testblock14_forward.1} parent=1 // loop_footer
      %s19 = sadd.s32 1, %s15
    $region7: #{testblock14_forward.1} parent=1 // loop_footer_branch
      %14 = sbr.rel target = $region3
    $region8: #{testblock14_forward.1} parent=1 // loop_exit
      _
    %4344 = vsyncpa [#allocation3], 1
    %s4345 = scalar_lea.sflag [#allocation3], 1
    %4346 = vsyncpa %s4345, 1
    %4347 = vsyncpa [#allocation5], 1
    %s4348 = scalar_lea.sflag [#allocation5], 1
    %4349 = vsyncpa %s4348, 1

</llo_original>
